<compile_context>
chip_gen: v5e
topology: v5e:2x2
jax: 0.10.0
libtpu: 0.0.40
codegen_flags: <defaults>
</compile_context>

<pallas_src>
import math
import functools
import numpy as np

import jax
import jax.numpy as jnp
from jax.experimental import pallas as pl
from jax.experimental.pallas import tpu as pltpu

_LIN_TM = 256   # row tile for the fused linear kernels (more parallel grid steps)
_FF_TM = 256    # row tile for the fused feed-forward kernel (fits v7x 64 MiB VMEM)
_VOCAB_TN = 512  # lane tile for the N-tiled vocab projection


# ----------------------------------------------------------------------------
# Capability probes / per-generation knobs
# ----------------------------------------------------------------------------
def _pick_vmem_limit():
    cap = 128 << 20
    try:
        cap = int(pltpu.get_tpu_info().vmem_capacity_bytes)
    except Exception:
        pass
    # leave headroom for compiler-internal scratch: ~100 MiB on v5e/v6e, ~56 MiB on v7x
    return int(min(cap - (8 << 20), 100 << 20))


_VMEM_LIMIT = _pick_vmem_limit()


def _probe_buffered1():
    # Check whether pipeline_mode=pl.Buffered(1) (single-buffered constant operands)
    # is supported by this jax/Mosaic build; fall back to default double buffering.
    def _copy(x_ref, o_ref):
        o_ref[...] = x_ref[...]
    try:
        spec = pl.BlockSpec((8, 128), lambda i: (0, 0), pipeline_mode=pl.Buffered(1))
        fn = pl.pallas_call(
            _copy, grid=(1,),
            in_specs=[spec],
            out_specs=pl.BlockSpec((8, 128), lambda i: (0, 0)),
            out_shape=jax.ShapeDtypeStruct((8, 128), jnp.float32))
        jax.block_until_ready(fn(jnp.zeros((8, 128), jnp.float32)))
        return True
    except Exception:
        return False


_HAS_BUFFERED1 = _probe_buffered1()


def _const_spec(block_shape, index_map):
    """BlockSpec for a constant-index operand (weights / biases / LN params):
    single-buffered when supported to halve its VMEM footprint."""
    if _HAS_BUFFERED1:
        return pl.BlockSpec(block_shape, index_map, pipeline_mode=pl.Buffered(1))
    return pl.BlockSpec(block_shape, index_map)


def _layernorm_f32(y, g, b, eps=1e-5):
    mu = jnp.mean(y, axis=-1, keepdims=True)
    var = jnp.mean(jnp.square(y - mu), axis=-1, keepdims=True)
    return (y - mu) * jax.lax.rsqrt(var + eps) * g + b


# ----------------------------------------------------------------------------
# Pallas kernels
# ----------------------------------------------------------------------------
def _linear_kernel(*refs, pre_ln, add_res, post_ln):
    # o = [LN_post]( [res +] ( [LN_pre](x) @ W + b ) )  -- epilogues fused
    it = iter(refs)
    x_ref = next(it)
    if pre_ln:
        g0_ref, b0_ref = next(it), next(it)
    w_ref, b_ref = next(it), next(it)
    if add_res:
        res_ref = next(it)
    if post_ln:
        g1_ref, b1_ref = next(it), next(it)
    o_ref = next(it)

    x = x_ref[...].astype(jnp.float32)
    if pre_ln:
        x = _layernorm_f32(x, g0_ref[...], b0_ref[...])
    y = jnp.dot(x.astype(jnp.bfloat16), w_ref[...],
                preferred_element_type=jnp.float32) + b_ref[...]
    if add_res:
        y = y + res_ref[...].astype(jnp.float32)
    if post_ln:
        y = _layernorm_f32(y, g1_ref[...], b1_ref[...])
    o_ref[...] = y.astype(o_ref.dtype)


def _ff_kernel(*refs, pre_ln, post_ln):
    # o = [LN_post]( x + relu([LN_pre](x) @ W1 + b1) @ W2 + b2 )   (residual is x itself)
    it = iter(refs)
    x_ref = next(it)
    if pre_ln:
        g0_ref, b0_ref = next(it), next(it)
    w1_ref, b1_ref, w2_ref, b2_ref = next(it), next(it), next(it), next(it)
    if post_ln:
        g1_ref, b1p_ref = next(it), next(it)
    o_ref = next(it)

    x = x_ref[...].astype(jnp.float32)
    h_in = _layernorm_f32(x, g0_ref[...], b0_ref[...]) if pre_ln else x
    h = jnp.dot(h_in.astype(jnp.bfloat16), w1_ref[...],
                preferred_element_type=jnp.float32) + b1_ref[...]
    h = jnp.maximum(h, 0.0)                       # ReLU in f32 (v5e has no bf16 VPU)
    y = jnp.dot(h.astype(jnp.bfloat16), w2_ref[...],
                preferred_element_type=jnp.float32) + b2_ref[...]
    y = y + x                                     # residual
    if post_ln:
        y = _layernorm_f32(y, g1_ref[...], b1p_ref[...])
    o_ref[...] = y.astype(o_ref.dtype)


def _attn_kernel(*refs, num_heads, d_head, scale, fused_qkv):
    # One batch per grid step; heads looped inside on static lane slices taken
    # straight from the refs (no (T, 3D) materialization).  Per head:
    #   scores = softmax(q k^T / sqrt(dh));  ctx = scores @ v.
    # All head results are concatenated along lanes and written with a single
    # lane-dense store each (context: (T, D); probs: (T, H*S)).
    d_model = num_heads * d_head
    if fused_qkv:
        qkv_ref, o_ref, s_ref = refs

        def get_qkv(h):
            lo = h * d_head
            qh = qkv_ref[0, :, lo:lo + d_head]
            kh = qkv_ref[0, :, d_model + lo:d_model + lo + d_head]
            vh = qkv_ref[0, :, 2 * d_model + lo:2 * d_model + lo + d_head]
            return qh, kh, vh
    else:
        q_ref, kv_ref, o_ref, s_ref = refs

        def get_qkv(h):
            lo = h * d_head
            qh = q_ref[0, :, lo:lo + d_head]
            kh = kv_ref[0, :, lo:lo + d_head]
            vh = kv_ref[0, :, d_model + lo:d_model + lo + d_head]
            return qh, kh, vh

    outs, probs = [], []
    for h in range(num_heads):                    # static python loop: H is compile-time
        qh, kh, vh = get_qkv(h)                   # bf16 lane slices of the refs
        # contract on the shared Dh axis directly -> no materialized k.T
        scores = jax.lax.dot_general(
            qh, kh, (((1,), (1,)), ((), ())),
            preferred_element_type=jnp.float32) * scale
        scores = scores - jnp.max(scores, axis=-1, keepdims=True)   # f32 softmax
        e = jnp.exp(scores)
        p = e / jnp.sum(e, axis=-1, keepdims=True)                  # exact (matches ref)
        probs.append(p)
        outs.append(jnp.dot(p.astype(jnp.bfloat16), vh,
                            preferred_element_type=jnp.float32))
    # TODO(synk): pack multiple heads per MXU pass (d_head<256 underuses v6e/v7x MXU)
    #             and tile the KV axis for long sequences (v7x VMEM).
    o_ref[0] = jnp.concatenate(outs, axis=-1).astype(o_ref.dtype)    # (T, D) wide store
    s_ref[0] = jnp.concatenate(probs, axis=-1).astype(s_ref.dtype)   # (T, H*S) wide store


# ----------------------------------------------------------------------------
# Pallas wrappers
# ----------------------------------------------------------------------------
def pallas_linear(x2d, w, b, *, pre_ln=None, res=None, post_ln=None,
                  out_dtype=jnp.bfloat16, tm_cap=_LIN_TM, tn_cap=None):
    M, K = x2d.shape
    N = w.shape[1]
    tm = M if M <= tm_cap else tm_cap
    # optional N tiling (used for the padded vocab projection; post-LN needs full rows)
    if tn_cap is not None and post_ln is None and N > tn_cap and N % 128 == 0:
        tn = tn_cap
    else:
        tn = N
    n_tiled = tn != N
    grid = (pl.cdiv(M, tm), pl.cdiv(N, tn))

    inputs = [x2d]
    in_specs = [pl.BlockSpec((tm, K), lambda i, j: (i, 0))]
    if pre_ln is not None:
        g, bt = pre_ln
        inputs += [g.reshape(1, K), bt.reshape(1, K)]
        in_specs += [_const_spec((1, K), lambda i, j: (0, 0)),
                     _const_spec((1, K), lambda i, j: (0, 0))]
    inputs += [w, b.reshape(1, N)]
    if n_tiled:
        in_specs += [pl.BlockSpec((K, tn), lambda i, j: (0, j)),
                     pl.BlockSpec((1, tn), lambda i, j: (0, j))]
    else:
        in_specs += [_const_spec((K, N), lambda i, j: (0, 0)),
                     _const_spec((1, N), lambda i, j: (0, 0))]
    if res is not None:
        inputs.append(res)
        in_specs.append(pl.BlockSpec((tm, tn), lambda i, j: (i, j)))
    if post_ln is not None:
        g, bt = post_ln
        inputs += [g.reshape(1, N), bt.reshape(1, N)]
        in_specs += [_const_spec((1, N), lambda i, j: (0, 0)),
                     _const_spec((1, N), lambda i, j: (0, 0))]

    kernel = functools.partial(_linear_kernel, pre_ln=pre_ln is not None,
                               add_res=res is not None, post_ln=post_ln is not None)
    cost = pl.CostEstimate(
        flops=int(2 * M * K * N), transcendentals=0,
        bytes_accessed=int(M * K * np.dtype(x2d.dtype).itemsize
                           + K * N * np.dtype(w.dtype).itemsize
                           + M * N * np.dtype(out_dtype).itemsize))
    return pl.pallas_call(
        kernel,
        grid=grid,
        in_specs=in_specs,
        out_specs=pl.BlockSpec((tm, tn), lambda i, j: (i, j)),
        out_shape=jax.ShapeDtypeStruct((M, N), out_dtype),
        compiler_params=pltpu.CompilerParams(
            dimension_semantics=("parallel", "parallel"),
            vmem_limit_bytes=_VMEM_LIMIT),
        cost_estimate=cost,
    )(*inputs)


def pallas_ff(x2d, p, *, pre_ln=None, post_ln=None, tm_cap=_FF_TM):
    M, D = x2d.shape
    H = p["w1"].shape[1]
    tm = M if M <= tm_cap else tm_cap
    grid = (pl.cdiv(M, tm),)

    inputs = [x2d]
    in_specs = [pl.BlockSpec((tm, D), lambda i: (i, 0))]
    if pre_ln is not None:
        g, bt = pre_ln
        inputs += [g.reshape(1, D), bt.reshape(1, D)]
        in_specs += [_const_spec((1, D), lambda i: (0, 0)),
                     _const_spec((1, D), lambda i: (0, 0))]
    inputs += [p["w1"], p["b1"].reshape(1, H), p["w2"], p["b2"].reshape(1, D)]
    in_specs += [_const_spec((D, H), lambda i: (0, 0)),
                 _const_spec((1, H), lambda i: (0, 0)),
                 _const_spec((H, D), lambda i: (0, 0)),
                 _const_spec((1, D), lambda i: (0, 0))]
    if post_ln is not None:
        g, bt = post_ln
        inputs += [g.reshape(1, D), bt.reshape(1, D)]
        in_specs += [_const_spec((1, D), lambda i: (0, 0)),
                     _const_spec((1, D), lambda i: (0, 0))]

    kernel = functools.partial(_ff_kernel, pre_ln=pre_ln is not None,
                               post_ln=post_ln is not None)
    cost = pl.CostEstimate(
        flops=int(4 * M * D * H), transcendentals=0,
        bytes_accessed=int(M * D * np.dtype(x2d.dtype).itemsize
                           + 2 * D * H * 2 + M * D * 2))
    return pl.pallas_call(
        kernel,
        grid=grid,
        in_specs=in_specs,
        out_specs=pl.BlockSpec((tm, D), lambda i: (i, 0)),
        out_shape=jax.ShapeDtypeStruct((M, D), jnp.bfloat16),
        compiler_params=pltpu.CompilerParams(
            dimension_semantics=("parallel",),
            vmem_limit_bytes=_VMEM_LIMIT),
        cost_estimate=cost,
    )(*inputs)


def pallas_attention(q_or_qkv, kv, num_heads, d_head, *, fused_qkv):
    d_model = num_heads * d_head
    if fused_qkv:
        B, T, threeD = q_or_qkv.shape
        S = T
        inputs = [q_or_qkv]
        in_specs = [pl.BlockSpec((1, T, threeD), lambda b: (b, 0, 0))]
        bytes_in = q_or_qkv.size * np.dtype(q_or_qkv.dtype).itemsize
    else:
        B, T, D = q_or_qkv.shape
        S = kv.shape[1]
        inputs = [q_or_qkv, kv]
        in_specs = [pl.BlockSpec((1, T, D), lambda b: (b, 0, 0)),
                    pl.BlockSpec((1, S, 2 * D), lambda b: (b, 0, 0))]
        bytes_in = (q_or_qkv.size * np.dtype(q_or_qkv.dtype).itemsize
                    + kv.size * np.dtype(kv.dtype).itemsize)

    kernel = functools.partial(_attn_kernel, num_heads=num_heads, d_head=d_head,
                               scale=1.0 / math.sqrt(d_head), fused_qkv=fused_qkv)
    cost = pl.CostEstimate(
        flops=int(4 * B * num_heads * T * S * d_head),
        transcendentals=int(B * num_heads * T * S),
        bytes_accessed=int(bytes_in + B * T * d_model * 2 + B * T * num_heads * S * 4))
    ctx, s_wide = pl.pallas_call(
        kernel,
        grid=(B,),
        in_specs=in_specs,
        out_specs=[pl.BlockSpec((1, T, d_model), lambda b: (b, 0, 0)),
                   pl.BlockSpec((1, T, num_heads * S), lambda b: (b, 0, 0))],
        out_shape=(jax.ShapeDtypeStruct((B, T, d_model), jnp.bfloat16),
                   jax.ShapeDtypeStruct((B, T, num_heads * S), jnp.float32)),
        compiler_params=pltpu.CompilerParams(
            dimension_semantics=("parallel",),
            vmem_limit_bytes=_VMEM_LIMIT),
        cost_estimate=cost,
    )(*inputs)
    # (B, T, H*S) lane-dense kernel output -> reference (B, H, T, S) score layout
    scores = jnp.transpose(s_wide.reshape(B, T, num_heads, S), (0, 2, 1, 3))
    return ctx, scores


# ----------------------------------------------------------------------------
# Model building blocks (glue around the kernels)
# ----------------------------------------------------------------------------
def _merge_heads_reference(ctx, num_heads, d_head):
    # ctx is (B, T, D) in standard head-concat order (head h at columns h*Dh:..).
    # The reference does matmul(score, v).contiguous().view(b, -1, d_model) WITHOUT
    # transposing heads back -> head-major merge; reproduce that exactly.
    B, T, D = ctx.shape
    return jnp.transpose(ctx.reshape(B, T, num_heads, d_head),
                         (0, 2, 1, 3)).reshape(B, T, D)


def self_mha_forward(p, x, num_heads, d_model, pre_ln=None):
    B, T, D = x.shape
    d_head = d_model // num_heads
    qkv = pallas_linear(x.reshape(B * T, D), p["w_qkv"], p["b_qkv"],
                        pre_ln=pre_ln, out_dtype=jnp.bfloat16).reshape(B, T, 3 * D)
    ctx, score = pallas_attention(qkv, None, num_heads, d_head, fused_qkv=True)
    merged = _merge_heads_reference(ctx, num_heads, d_head)
    return merged, score


def cross_mha_forward(p, x, x_e, num_heads, d_model, pre_ln=None):
    B, T, D = x.shape
    S = x_e.shape[1]
    d_head = d_model // num_heads
    q = pallas_linear(x.reshape(B * T, D), p["w_q"], p["b_q"],
                      pre_ln=pre_ln, out_dtype=jnp.bfloat16).reshape(B, T, D)
    kv = pallas_linear(x_e.reshape(B * S, D), p["w_kv"], p["b_kv"],
                       out_dtype=jnp.bfloat16).reshape(B, S, 2 * D)
    ctx, score = pallas_attention(q, kv, num_heads, d_head, fused_qkv=False)
    merged = _merge_heads_reference(ctx, num_heads, d_head)
    return merged, score


def layer_forward(lp, x, x_e, mha_head, mhca_head, d_model, is_post_norm):
    B, T, D = x.shape
    flat = lambda a: a.reshape(-1, D)

    # ---- self attention ---- (dropout is identity in eval mode)
    res = x
    merged, score = self_mha_forward(
        lp["mha"], x, mha_head, D,
        pre_ln=None if is_post_norm else (lp["mha_norm_g"], lp["mha_norm_b"]))
    # out-projection fused with residual add (+ post-LN for post-norm)
    x = pallas_linear(
        flat(merged), lp["mha"]["w_o"], lp["mha"]["b_o"], res=flat(res),
        post_ln=(lp["mha_norm_g"], lp["mha_norm_b"]) if is_post_norm else None,
    ).reshape(B, T, D)

    # ---- feed forward (pre-LN / residual / post-LN fused into one kernel) ----
    x = pallas_ff(
        flat(x), lp["ff"],
        pre_ln=None if is_post_norm else (lp["ff_norm_g"], lp["ff_norm_b"]),
        post_ln=(lp["ff_norm_g"], lp["ff_norm_b"]) if is_post_norm else None,
    ).reshape(B, T, D)

    cscore = None
    if x_e is not None and "mhca" in lp:
        # ---- cross attention ----
        res = x
        merged, cscore = cross_mha_forward(
            lp["mhca"], x, x_e, mhca_head, D,
            pre_ln=None if is_post_norm else (lp["mhca_norm_g"], lp["mhca_norm_b"]))
        x = pallas_linear(
            flat(merged), lp["mhca"]["w_o"], lp["mhca"]["b_o"], res=flat(res),
            post_ln=(lp["mhca_norm_g"], lp["mhca_norm_b"]) if is_post_norm else None,
        ).reshape(B, T, D)
        # ---- cross feed forward ----
        x = pallas_ff(
            flat(x), lp["cff"],
            pre_ln=None if is_post_norm else (lp["cff_norm_g"], lp["cff_norm_b"]),
            post_ln=(lp["cff_norm_g"], lp["cff_norm_b"]) if is_post_norm else None,
        ).reshape(B, T, D)
    return x, score, cscore


def transformer_forward(params, cfg, inp_seq, out_seq):
    d = cfg["d_model"]
    sqrt_d = math.sqrt(d)
    # embeddings + APE (dropout is identity in eval mode)
    x = jnp.take(params["enc_emb"], inp_seq, axis=0) * sqrt_d
    if cfg["is_enc_abs"]:
        x = x + params["pe"][: x.shape[1]][None] * sqrt_d
    y = jnp.take(params["dec_emb"], out_seq, axis=0) * sqrt_d
    if cfg["is_dec_abs"]:
        y = y + params["pe"][: y.shape[1]][None] * sqrt_d

    inp_scores = []
    for lp in params["encoder"]:
        x, score, _ = layer_forward(lp, x, None, cfg["enc_head"], -1, d,
                                    cfg["is_post_norm"])
        inp_scores.append(score)

    out_scores, out_cscores = [], []
    for lp in params["decoder"]:
        y, score, cscore = layer_forward(lp, y, x, cfg["dec_head"], cfg["dec_chead"],
                                         d, cfg["is_post_norm"])
        out_scores.append(score)
        out_cscores.append(cscore)

    B, T, _ = y.shape
    # final linear (vocab padded to a multiple of 128 at init for lane-dense stores,
    # N-tiled; sliced back to the true vocab here).  For pre-norm the linear_norm is
    # fused into the kernel as a pre-LN.
    logits_pad = pallas_linear(
        y.reshape(B * T, d), params["linear_w"], params["linear_b"],
        pre_ln=None if cfg["is_post_norm"]
        else (params["linear_norm_g"], params["linear_norm_b"]),
        out_dtype=jnp.float32, tn_cap=_VOCAB_TN)
    logits = logits_pad.reshape(B, T, -1)[:, :, :cfg["dec_vocab_len"]]
    return logits, inp_scores, out_scores, out_cscores


# ----------------------------------------------------------------------------
# Deterministic parameter initialization (matmul weights stored in bf16)
# ----------------------------------------------------------------------------
def _init_linear(key, fan_in, fan_out):
    k1, k2 = jax.random.split(key)
    lim = 1.0 / math.sqrt(fan_in)
    w = jax.random.uniform(k1, (fan_in, fan_out), jnp.float32, -lim, lim)
    b = jax.random.uniform(k2, (fan_out,), jnp.float32, -lim, lim)
    return w, b


def _init_mha(key, d, is_cross):
    ks = jax.random.split(key, 4)
    wq, bq = _init_linear(ks[0], d, d)
    wk, bk = _init_linear(ks[1], d, d)
    wv, bv = _init_linear(ks[2], d, d)
    wo, bo = _init_linear(ks[3], d, d)
    p = dict(w_o=wo.astype(jnp.bfloat16), b_o=bo)
    if is_cross:
        p.update(w_q=wq.astype(jnp.bfloat16), b_q=bq,
                 w_kv=jnp.concatenate([wk, wv], axis=1).astype(jnp.bfloat16),
                 b_kv=jnp.concatenate([bk, bv], axis=0))
    else:
        p.update(w_qkv=jnp.concatenate([wq, wk, wv], axis=1).astype(jnp.bfloat16),
                 b_qkv=jnp.concatenate([bq, bk, bv], axis=0))
    return p


def _init_ff(key, d):
    k1, k2 = jax.random.split(key)
    w1, b1 = _init_linear(k1, d, 4 * d)
    w2, b2 = _init_linear(k2, 4 * d, d)
    return dict(w1=w1.astype(jnp.bfloat16), b1=b1,
                w2=w2.astype(jnp.bfloat16), b2=b2)


def _init_layer(key, d, is_cross):
    ks = jax.random.split(key, 4)
    lp = dict(
        mha=_init_mha(ks[0], d, False),
        mha_norm_g=jnp.ones((d,), jnp.float32), mha_norm_b=jnp.zeros((d,), jnp.float32),
        ff=_init_ff(ks[1], d),
        ff_norm_g=jnp.ones((d,), jnp.float32), ff_norm_b=jnp.zeros((d,), jnp.float32),
    )
    if is_cross:
        lp.update(
            mhca=_init_mha(ks[2], d, True),
            mhca_norm_g=jnp.ones((d,), jnp.float32), mhca_norm_b=jnp.zeros((d,), jnp.float32),
            cff=_init_ff(ks[3], d),
            cff_norm_g=jnp.ones((d,), jnp.float32), cff_norm_b=jnp.zeros((d,), jnp.float32),
        )
    return lp


def _make_pe(d_model, max_seq_len=80):
    pe = np.zeros((max_seq_len, d_model), dtype=np.float64)
    for pos in range(max_seq_len):
        for i in range(0, d_model, 2):
            pe[pos, i] = math.sin(pos / 10000 ** (2 * i / d_model))
            pe[pos, i + 1] = math.cos(pos / 10000 ** (2 * (i + 1) / d_model))
    return jnp.asarray(pe, jnp.float32)


def init_transformer(key, cfg):
    d = cfg["d_model"]
    keys = jax.random.split(key, 4 + cfg["enc_layers"] + cfg["dec_layers"])
    enc_emb = jax.random.normal(keys[0], (cfg["enc_vocab_len"], d), jnp.float32)
    enc_emb = enc_emb.at[cfg["enc_pad_idx"]].set(0.0)
    if cfg["is_share_emb"]:
        dec_emb = enc_emb
    else:
        dec_emb = jax.random.normal(keys[1], (cfg["dec_vocab_len"], d), jnp.float32)
        dec_emb = dec_emb.at[cfg["dec_pad_idx"]].set(0.0)
    V = cfg["dec_vocab_len"]
    V_pad = ((V + 127) // 128) * 128          # lane-dense / N-tileable vocab projection
    lin_w, lin_b = _init_linear(keys[2], d, V)
    lin_w = jnp.pad(lin_w, ((0, 0), (0, V_pad - V)))
    lin_b = jnp.pad(lin_b, (0, V_pad - V))
    params = dict(
        enc_emb=enc_emb,
        dec_emb=dec_emb,
        pe=_make_pe(d),
        encoder=[_init_layer(keys[4 + i], d, False) for i in range(cfg["enc_layers"])],
        decoder=[_init_layer(keys[4 + cfg["enc_layers"] + i], d, True)
                 for i in range(cfg["dec_layers"])],
        linear_w=lin_w.astype(jnp.bfloat16),
        linear_b=lin_b,
        linear_norm_g=jnp.ones((d,), jnp.float32),
        linear_norm_b=jnp.zeros((d,), jnp.float32),
    )
    return params


# ----------------------------------------------------------------------------
if __name__ == "__main__":
    cfg = dict(
        enc_vocab_len=50, enc_pad_idx=0,
        dec_vocab_len=60, dec_pad_idx=0,
        is_share_emb=False,
        d_model=32, enc_head=4, enc_layers=2,
        dec_head=4, dec_chead=4, dec_layers=2,
        is_post_norm=True, is_enc_abs=True, is_dec_abs=True,
    )
    root = jax.random.PRNGKey(0)
    kp, ki, ko = jax.random.split(root, 3)
    params = init_transformer(kp, cfg)

    B, T_enc, T_dec = 2, 8, 8
    inp_seq = jax.random.randint(ki, (B, T_enc), 0, cfg["enc_vocab_len"], dtype=jnp.int32)
    out_seq = jax.random.randint(ko, (B, T_dec), 0, cfg["dec_vocab_len"], dtype=jnp.int32)

    fwd = jax.jit(lambda p, a, b: transformer_forward(p, cfg, a, b))
    logits, inp_scores, out_scores, out_cscores = fwd(params, inp_seq, out_seq)
    jax.block_until_ready(logits)

    assert logits.shape == (B, T_dec, cfg["dec_vocab_len"])
    assert len(inp_scores) == cfg["enc_layers"]
    assert inp_scores[0].shape == (B, cfg["enc_head"], T_enc, T_enc)
    assert len(out_scores) == cfg["dec_layers"] and len(out_cscores) == cfg["dec_layers"]
    assert out_cscores[0].shape == (B, cfg["dec_chead"], T_dec, T_enc)
    print("KERNEL_OK")
</pallas_src>

<mosaic_0001>
module attributes {stable_mosaic.version = 11 : i64} {
  func.func @_copy(%arg0: i32, %arg1: memref<8x128xf32, #tpu.memory_space<vmem>>, %arg2: memref<8x128xf32, #tpu.memory_space<vmem>>) attributes {dimension_semantics = [#tpu.dimension_semantics<arbitrary>], iteration_bounds = array<i64: 1>, scalar_prefetch = 0 : i64, scratch_operands = 0 : i64, tpu.core_type = #tpu.core_type<tc>, window_params = [{pipeline_mode = #tpu.pipeline_mode<synchronous>, transform_indices = @transform_0, window_bounds = array<i64: 8, 128>}, {pipeline_mode = #tpu.pipeline_mode<synchronous>, transform_indices = @transform_1, window_bounds = array<i64: 8, 128>}]} {
    %c0 = arith.constant 0 : index
    %c0_0 = arith.constant 0 : index
    %0 = vector.load %arg1[%c0, %c0_0] : memref<8x128xf32, #tpu.memory_space<vmem>>, vector<8x128xf32>
    %c0_1 = arith.constant 0 : index
    %c0_2 = arith.constant 0 : index
    %1 = vector.load %arg2[%c0_1, %c0_2] : memref<8x128xf32, #tpu.memory_space<vmem>>, vector<8x128xf32>
    tpu.vector_store %arg2[%c0_1, %c0_2], %0 {strides = array<i32>} : memref<8x128xf32, #tpu.memory_space<vmem>>, vector<8x128xf32>,
    return
  }
  func.func @transform_0(%arg0: i32) -> (i32, i32) {
    %c0_i32 = arith.constant 0 : i32
    %c0_i32_0 = arith.constant 0 : i32
    %c0_i32_1 = arith.constant 0 : i32
    return %c0_i32, %c0_i32_0 : i32, i32
  }
  func.func @transform_1(%arg0: i32) -> (i32, i32) {
    %c0_i32 = arith.constant 0 : i32
    %c0_i32_0 = arith.constant 0 : i32
    %c0_i32_1 = arith.constant 0 : i32
    return %c0_i32, %c0_i32_0 : i32, i32
  }
}

module attributes {stable_mosaic.version = 11 : i64} {
  func.func @_linear_kernel(%arg0: i32, %arg1: i32, %arg2: memref<16x32xf32, #tpu.memory_space<vmem>>, %arg3: memref<32x96xbf16, #tpu.memory_space<vmem>>, %arg4: memref<1x96xf32, #tpu.memory_space<vmem>>, %arg5: memref<16x96xbf16, #tpu.memory_space<vmem>>) attributes {dimension_semantics = [#tpu.dimension_semantics<parallel>, #tpu.dimension_semantics<parallel>], iteration_bounds = array<i64: 1, 1>, scalar_prefetch = 0 : i64, scratch_operands = 0 : i64, tpu.core_type = #tpu.core_type<tc>, window_params = [{transform_indices = @transform_0, window_bounds = array<i64: 16, 32>}, {pipeline_mode = #tpu.pipeline_mode<synchronous>, transform_indices = @transform_1, window_bounds = array<i64: 32, 96>}, {pipeline_mode = #tpu.pipeline_mode<synchronous>, transform_indices = @transform_2, window_bounds = array<i64: 1, 96>}, {transform_indices = @transform_3, window_bounds = array<i64: 16, 96>}]} {
    %c0 = arith.constant 0 : index
    %c0_0 = arith.constant 0 : index
    %0 = vector.load %arg2[%c0, %c0_0] : memref<16x32xf32, #tpu.memory_space<vmem>>, vector<16x32xf32>
    %1 = arith.truncf %0 : vector<16x32xf32> to vector<16x32xbf16>
    %c0_1 = arith.constant 0 : index
    %c0_2 = arith.constant 0 : index
    %2 = vector.load %arg3[%c0_1, %c0_2] : memref<32x96xbf16, #tpu.memory_space<vmem>>, vector<32x96xbf16>
    %cst = arith.constant dense<0.000000e+00> : vector<16x96xf32>
    %3 = tpu.matmul %1, %2, %cst {dimension_numbers = #tpu.dot_dimension_numbers<[1], [0], [0], [1], [0, 0, 1, 1], [], []>} : vector<16x32xbf16>, vector<32x96xbf16>, vector<16x96xf32> -> vector<16x96xf32>
    %c0_3 = arith.constant 0 : index
    %c0_4 = arith.constant 0 : index
    %4 = vector.load %arg4[%c0_3, %c0_4] : memref<1x96xf32, #tpu.memory_space<vmem>>, vector<1x96xf32>
    %5 = vector.broadcast %4 : vector<1x96xf32> to vector<16x96xf32>
    %6 = arith.addf %3, %5 : vector<16x96xf32>
    %7 = arith.truncf %6 : vector<16x96xf32> to vector<16x96xbf16>
    %c0_5 = arith.constant 0 : index
    %c0_6 = arith.constant 0 : index
    %8 = vector.load %arg5[%c0_5, %c0_6] : memref<16x96xbf16, #tpu.memory_space<vmem>>, vector<16x96xbf16>
    tpu.vector_store %arg5[%c0_5, %c0_6], %7 {strides = array<i32>} : memref<16x96xbf16, #tpu.memory_space<vmem>>, vector<16x96xbf16>,
    return
  }
  func.func @transform_0(%arg0: i32, %arg1: i32) -> (i32, i32) {
    %c0_i32 = arith.constant 0 : i32
    %c0_i32_0 = arith.constant 0 : i32
    return %arg0, %c0_i32 : i32, i32
  }
  func.func @transform_1(%arg0: i32, %arg1: i32) -> (i32, i32) {
    %c0_i32 = arith.constant 0 : i32
    %c0_i32_0 = arith.constant 0 : i32
    %c0_i32_1 = arith.constant 0 : i32
    return %c0_i32, %c0_i32_0 : i32, i32
  }
  func.func @transform_2(%arg0: i32, %arg1: i32) -> (i32, i32) {
    %c0_i32 = arith.constant 0 : i32
    %c0_i32_0 = arith.constant 0 : i32
    %c0_i32_1 = arith.constant 0 : i32
    return %c0_i32, %c0_i32_0 : i32, i32
  }
  func.func @transform_3(%arg0: i32, %arg1: i32) -> (i32, i32) {
    %c0_i32 = arith.constant 0 : i32
    return %arg0, %arg1 : i32, i32
  }
}

module attributes {stable_mosaic.version = 11 : i64} {
  func.func @_attn_kernel(%arg0: i32, %arg1: memref<1x8x96xbf16, #tpu.memory_space<vmem>>, %arg2: memref<1x8x32xbf16, #tpu.memory_space<vmem>>, %arg3: memref<1x8x32xf32, #tpu.memory_space<vmem>>) attributes {dimension_semantics = [#tpu.dimension_semantics<parallel>], iteration_bounds = array<i64: 2>, scalar_prefetch = 0 : i64, scratch_operands = 0 : i64, tpu.core_type = #tpu.core_type<tc>, window_params = [{transform_indices = @transform_0, window_bounds = array<i64: 1, 8, 96>}, {transform_indices = @transform_1, window_bounds = array<i64: 1, 8, 32>}, {transform_indices = @transform_2, window_bounds = array<i64: 1, 8, 32>}]} {
    %c0 = arith.constant 0 : index
    %c0_0 = arith.constant 0 : index
    %c0_1 = arith.constant 0 : index
    %0 = vector.load %arg1[%c0, %c0_0, %c0_1] : memref<1x8x96xbf16, #tpu.memory_space<vmem>>, vector<1x8x8xbf16>
    %1 = vector.shape_cast %0 : vector<1x8x8xbf16> to vector<8x8xbf16>
    %c0_2 = arith.constant 0 : index
    %c0_3 = arith.constant 0 : index
    %c32 = arith.constant 32 : index
    %2 = vector.load %arg1[%c0_2, %c0_3, %c32] : memref<1x8x96xbf16, #tpu.memory_space<vmem>>, vector<1x8x8xbf16>
    %3 = vector.shape_cast %2 : vector<1x8x8xbf16> to vector<8x8xbf16>
    %c0_4 = arith.constant 0 : index
    %c0_5 = arith.constant 0 : index
    %c64 = arith.constant 64 : index
    %4 = vector.load %arg1[%c0_4, %c0_5, %c64] : memref<1x8x96xbf16, #tpu.memory_space<vmem>>, vector<1x8x8xbf16>
    %5 = vector.shape_cast %4 : vector<1x8x8xbf16> to vector<8x8xbf16>
    %cst = arith.constant dense<0.000000e+00> : vector<8x8xf32>
    %6 = tpu.matmul %1, %3, %cst {dimension_numbers = #tpu.dot_dimension_numbers<[1], [1], [0], [0], [0, 0, 1, 0], [], []>} : vector<8x8xbf16>, vector<8x8xbf16>, vector<8x8xf32> -> vector<8x8xf32>
    %cst_6 = arith.constant 0.353553385 : f32
    %7 = vector.broadcast %cst_6 : f32 to vector<8x8xf32>
    %8 = arith.mulf %6, %7 : vector<8x8xf32>
    %cst_7 = arith.constant dense<0xFF800000> : vector<8xf32>
    %9 = vector.multi_reduction <maximumf>, %8, %cst_7 [1] : vector<8x8xf32> to vector<8xf32>
    %10 = vector.shape_cast %9 : vector<8xf32> to vector<8x1xf32>
    %11 = vector.broadcast %10 : vector<8x1xf32> to vector<8x8xf32>
    %12 = arith.subf %8, %11 : vector<8x8xf32>
    %13 = math.exp %12 : vector<8x8xf32>
    %cst_8 = arith.constant dense<0.000000e+00> : vector<8xf32>
    %14 = vector.multi_reduction <add>, %13, %cst_8 [1] : vector<8x8xf32> to vector<8xf32>
    %15 = vector.shape_cast %14 : vector<8xf32> to vector<8x1xf32>
    %16 = vector.broadcast %15 : vector<8x1xf32> to vector<8x8xf32>
    %17 = arith.divf %13, %16 : vector<8x8xf32>
    %18 = arith.truncf %17 : vector<8x8xf32> to vector<8x8xbf16>
    %cst_9 = arith.constant dense<0.000000e+00> : vector<8x8xf32>
    %19 = tpu.matmul %18, %5, %cst_9 {dimension_numbers = #tpu.dot_dimension_numbers<[1], [0], [0], [1], [0, 0, 1, 1], [], []>} : vector<8x8xbf16>, vector<8x8xbf16>, vector<8x8xf32> -> vector<8x8xf32>
    %c0_10 = arith.constant 0 : index
    %c0_11 = arith.constant 0 : index
    %c8 = arith.constant 8 : index
    %20 = vector.load %arg1[%c0_10, %c0_11, %c8] : memref<1x8x96xbf16, #tpu.memory_space<vmem>>, vector<1x8x8xbf16>
    %21 = vector.shape_cast %20 : vector<1x8x8xbf16> to vector<8x8xbf16>
    %c0_12 = arith.constant 0 : index
    %c0_13 = arith.constant 0 : index
    %c40 = arith.constant 40 : index
    %22 = vector.load %arg1[%c0_12, %c0_13, %c40] : memref<1x8x96xbf16, #tpu.memory_space<vmem>>, vector<1x8x8xbf16>
    %23 = vector.shape_cast %22 : vector<1x8x8xbf16> to vector<8x8xbf16>
    %c0_14 = arith.constant 0 : index
    %c0_15 = arith.constant 0 : index
    %c72 = arith.constant 72 : index
    %24 = vector.load %arg1[%c0_14, %c0_15, %c72] : memref<1x8x96xbf16, #tpu.memory_space<vmem>>, vector<1x8x8xbf16>
    %25 = vector.shape_cast %24 : vector<1x8x8xbf16> to vector<8x8xbf16>
    %cst_16 = arith.constant dense<0.000000e+00> : vector<8x8xf32>
    %26 = tpu.matmul %21, %23, %cst_16 {dimension_numbers = #tpu.dot_dimension_numbers<[1], [1], [0], [0], [0, 0, 1, 0], [], []>} : vector<8x8xbf16>, vector<8x8xbf16>, vector<8x8xf32> -> vector<8x8xf32>
    %cst_17 = arith.constant 0.353553385 : f32
    %27 = vector.broadcast %cst_17 : f32 to vector<8x8xf32>
    %28 = arith.mulf %26, %27 : vector<8x8xf32>
    %cst_18 = arith.constant dense<0xFF800000> : vector<8xf32>
    %29 = vector.multi_reduction <maximumf>, %28, %cst_18 [1] : vector<8x8xf32> to vector<8xf32>
    %30 = vector.shape_cast %29 : vector<8xf32> to vector<8x1xf32>
    %31 = vector.broadcast %30 : vector<8x1xf32> to vector<8x8xf32>
    %32 = arith.subf %28, %31 : vector<8x8xf32>
    %33 = math.exp %32 : vector<8x8xf32>
    %cst_19 = arith.constant dense<0.000000e+00> : vector<8xf32>
    %34 = vector.multi_reduction <add>, %33, %cst_19 [1] : vector<8x8xf32> to vector<8xf32>
    %35 = vector.shape_cast %34 : vector<8xf32> to vector<8x1xf32>
    %36 = vector.broadcast %35 : vector<8x1xf32> to vector<8x8xf32>
    %37 = arith.divf %33, %36 : vector<8x8xf32>
    %38 = arith.truncf %37 : vector<8x8xf32> to vector<8x8xbf16>
    %cst_20 = arith.constant dense<0.000000e+00> : vector<8x8xf32>
    %39 = tpu.matmul %38, %25, %cst_20 {dimension_numbers = #tpu.dot_dimension_numbers<[1], [0], [0], [1], [0, 0, 1, 1], [], []>} : vector<8x8xbf16>, vector<8x8xbf16>, vector<8x8xf32> -> vector<8x8xf32>
    %c0_21 = arith.constant 0 : index
    %c0_22 = arith.constant 0 : index
    %c16 = arith.constant 16 : index
    %40 = vector.load %arg1[%c0_21, %c0_22, %c16] : memref<1x8x96xbf16, #tpu.memory_space<vmem>>, vector<1x8x8xbf16>
    %41 = vector.shape_cast %40 : vector<1x8x8xbf16> to vector<8x8xbf16>
    %c0_23 = arith.constant 0 : index
    %c0_24 = arith.constant 0 : index
    %c48 = arith.constant 48 : index
    %42 = vector.load %arg1[%c0_23, %c0_24, %c48] : memref<1x8x96xbf16, #tpu.memory_space<vmem>>, vector<1x8x8xbf16>
    %43 = vector.shape_cast %42 : vector<1x8x8xbf16> to vector<8x8xbf16>
    %c0_25 = arith.constant 0 : index
    %c0_26 = arith.constant 0 : index
    %c80 = arith.constant 80 : index
    %44 = vector.load %arg1[%c0_25, %c0_26, %c80] : memref<1x8x96xbf16, #tpu.memory_space<vmem>>, vector<1x8x8xbf16>
    %45 = vector.shape_cast %44 : vector<1x8x8xbf16> to vector<8x8xbf16>
    %cst_27 = arith.constant dense<0.000000e+00> : vector<8x8xf32>
    %46 = tpu.matmul %41, %43, %cst_27 {dimension_numbers = #tpu.dot_dimension_numbers<[1], [1], [0], [0], [0, 0, 1, 0], [], []>} : vector<8x8xbf16>, vector<8x8xbf16>, vector<8x8xf32> -> vector<8x8xf32>
    %cst_28 = arith.constant 0.353553385 : f32
    %47 = vector.broadcast %cst_28 : f32 to vector<8x8xf32>
    %48 = arith.mulf %46, %47 : vector<8x8xf32>
    %cst_29 = arith.constant dense<0xFF800000> : vector<8xf32>
    %49 = vector.multi_reduction <maximumf>, %48, %cst_29 [1] : vector<8x8xf32> to vector<8xf32>
    %50 = vector.shape_cast %49 : vector<8xf32> to vector<8x1xf32>
    %51 = vector.broadcast %50 : vector<8x1xf32> to vector<8x8xf32>
    %52 = arith.subf %48, %51 : vector<8x8xf32>
    %53 = math.exp %52 : vector<8x8xf32>
    %cst_30 = arith.constant dense<0.000000e+00> : vector<8xf32>
    %54 = vector.multi_reduction <add>, %53, %cst_30 [1] : vector<8x8xf32> to vector<8xf32>
    %55 = vector.shape_cast %54 : vector<8xf32> to vector<8x1xf32>
    %56 = vector.broadcast %55 : vector<8x1xf32> to vector<8x8xf32>
    %57 = arith.divf %53, %56 : vector<8x8xf32>
    %58 = arith.truncf %57 : vector<8x8xf32> to vector<8x8xbf16>
    %cst_31 = arith.constant dense<0.000000e+00> : vector<8x8xf32>
    %59 = tpu.matmul %58, %45, %cst_31 {dimension_numbers = #tpu.dot_dimension_numbers<[1], [0], [0], [1], [0, 0, 1, 1], [], []>} : vector<8x8xbf16>, vector<8x8xbf16>, vector<8x8xf32> -> vector<8x8xf32>
    %c0_32 = arith.constant 0 : index
    %c0_33 = arith.constant 0 : index
    %c24 = arith.constant 24 : index
    %60 = vector.load %arg1[%c0_32, %c0_33, %c24] : memref<1x8x96xbf16, #tpu.memory_space<vmem>>, vector<1x8x8xbf16>
    %61 = vector.shape_cast %60 : vector<1x8x8xbf16> to vector<8x8xbf16>
    %c0_34 = arith.constant 0 : index
    %c0_35 = arith.constant 0 : index
    %c56 = arith.constant 56 : index
    %62 = vector.load %arg1[%c0_34, %c0_35, %c56] : memref<1x8x96xbf16, #tpu.memory_space<vmem>>, vector<1x8x8xbf16>
    %63 = vector.shape_cast %62 : vector<1x8x8xbf16> to vector<8x8xbf16>
    %c0_36 = arith.constant 0 : index
    %c0_37 = arith.constant 0 : index
    %c88 = arith.constant 88 : index
    %64 = vector.load %arg1[%c0_36, %c0_37, %c88] : memref<1x8x96xbf16, #tpu.memory_space<vmem>>, vector<1x8x8xbf16>
    %65 = vector.shape_cast %64 : vector<1x8x8xbf16> to vector<8x8xbf16>
    %cst_38 = arith.constant dense<0.000000e+00> : vector<8x8xf32>
    %66 = tpu.matmul %61, %63, %cst_38 {dimension_numbers = #tpu.dot_dimension_numbers<[1], [1], [0], [0], [0, 0, 1, 0], [], []>} : vector<8x8xbf16>, vector<8x8xbf16>, vector<8x8xf32> -> vector<8x8xf32>
    %cst_39 = arith.constant 0.353553385 : f32
    %67 = vector.broadcast %cst_39 : f32 to vector<8x8xf32>
    %68 = arith.mulf %66, %67 : vector<8x8xf32>
    %cst_40 = arith.constant dense<0xFF800000> : vector<8xf32>
    %69 = vector.multi_reduction <maximumf>, %68, %cst_40 [1] : vector<8x8xf32> to vector<8xf32>
    %70 = vector.shape_cast %69 : vector<8xf32> to vector<8x1xf32>
    %71 = vector.broadcast %70 : vector<8x1xf32> to vector<8x8xf32>
    %72 = arith.subf %68, %71 : vector<8x8xf32>
    %73 = math.exp %72 : vector<8x8xf32>
    %cst_41 = arith.constant dense<0.000000e+00> : vector<8xf32>
    %74 = vector.multi_reduction <add>, %73, %cst_41 [1] : vector<8x8xf32> to vector<8xf32>
    %75 = vector.shape_cast %74 : vector<8xf32> to vector<8x1xf32>
    %76 = vector.broadcast %75 : vector<8x1xf32> to vector<8x8xf32>
    %77 = arith.divf %73, %76 : vector<8x8xf32>
    %78 = arith.truncf %77 : vector<8x8xf32> to vector<8x8xbf16>
    %cst_42 = arith.constant dense<0.000000e+00> : vector<8x8xf32>
    %79 = tpu.matmul %78, %65, %cst_42 {dimension_numbers = #tpu.dot_dimension_numbers<[1], [0], [0], [1], [0, 0, 1, 1], [], []>} : vector<8x8xbf16>, vector<8x8xbf16>, vector<8x8xf32> -> vector<8x8xf32>
    %80 = tpu.concatenate %19, %39, %59, %79 in 1 : vector<8x8xf32>, vector<8x8xf32>, vector<8x8xf32>, vector<8x8xf32> -> vector<8x32xf32>
    %81 = arith.truncf %80 : vector<8x32xf32> to vector<8x32xbf16>
    %c0_43 = arith.constant 0 : index
    %c0_44 = arith.constant 0 : index
    %c0_45 = arith.constant 0 : index
    %82 = vector.load %arg2[%c0_43, %c0_44, %c0_45] : memref<1x8x32xbf16, #tpu.memory_space<vmem>>, vector<1x8x32xbf16>
    %83 = vector.shape_cast %82 : vector<1x8x32xbf16> to vector<8x32xbf16>
    %84 = vector.shape_cast %81 : vector<8x32xbf16> to vector<1x8x32xbf16>
    tpu.vector_store %arg2[%c0_43, %c0_44, %c0_45], %84 {strides = array<i32>} : memref<1x8x32xbf16, #tpu.memory_space<vmem>>, vector<1x8x32xbf16>,
    %85 = tpu.concatenate %17, %37, %57, %77 in 1 : vector<8x8xf32>, vector<8x8xf32>, vector<8x8xf32>, vector<8x8xf32> -> vector<8x32xf32>
    %c0_46 = arith.constant 0 : index
    %c0_47 = arith.constant 0 : index
    %c0_48 = arith.constant 0 : index
    %86 = vector.load %arg3[%c0_46, %c0_47, %c0_48] : memref<1x8x32xf32, #tpu.memory_space<vmem>>, vector<1x8x32xf32>
    %87 = vector.shape_cast %86 : vector<1x8x32xf32> to vector<8x32xf32>
    %88 = vector.shape_cast %85 : vector<8x32xf32> to vector<1x8x32xf32>
    tpu.vector_store %arg3[%c0_46, %c0_47, %c0_48], %88 {strides = array<i32>} : memref<1x8x32xf32, #tpu.memory_space<vmem>>, vector<1x8x32xf32>,
    return
  }
  func.func @transform_0(%arg0: i32) -> (i32, i32, i32) {
    %c0_i32 = arith.constant 0 : i32
    %c0_i32_0 = arith.constant 0 : i32
    %c0_i32_1 = arith.constant 0 : i32
    return %arg0, %c0_i32, %c0_i32_0 : i32, i32, i32
  }
  func.func @transform_1(%arg0: i32) -> (i32, i32, i32) {
    %c0_i32 = arith.constant 0 : i32
    %c0_i32_0 = arith.constant 0 : i32
    %c0_i32_1 = arith.constant 0 : i32
    return %arg0, %c0_i32, %c0_i32_0 : i32, i32, i32
  }
  func.func @transform_2(%arg0: i32) -> (i32, i32, i32) {
    %c0_i32 = arith.constant 0 : i32
    %c0_i32_0 = arith.constant 0 : i32
    %c0_i32_1 = arith.constant 0 : i32
    return %arg0, %c0_i32, %c0_i32_0 : i32, i32, i32
  }
}

module attributes {stable_mosaic.version = 11 : i64} {
  func.func @_linear_kernel(%arg0: i32, %arg1: i32, %arg2: memref<16x32xbf16, #tpu.memory_space<vmem>>, %arg3: memref<32x32xbf16, #tpu.memory_space<vmem>>, %arg4: memref<1x32xf32, #tpu.memory_space<vmem>>, %arg5: memref<16x32xf32, #tpu.memory_space<vmem>>, %arg6: memref<1x32xf32, #tpu.memory_space<vmem>>, %arg7: memref<1x32xf32, #tpu.memory_space<vmem>>, %arg8: memref<16x32xbf16, #tpu.memory_space<vmem>>) attributes {dimension_semantics = [#tpu.dimension_semantics<parallel>, #tpu.dimension_semantics<parallel>], iteration_bounds = array<i64: 1, 1>, scalar_prefetch = 0 : i64, scratch_operands = 0 : i64, tpu.core_type = #tpu.core_type<tc>, window_params = [{transform_indices = @transform_0, window_bounds = array<i64: 16, 32>}, {pipeline_mode = #tpu.pipeline_mode<synchronous>, transform_indices = @transform_1, window_bounds = array<i64: 32, 32>}, {pipeline_mode = #tpu.pipeline_mode<synchronous>, transform_indices = @transform_2, window_bounds = array<i64: 1, 32>}, {transform_indices = @transform_3, window_bounds = array<i64: 16, 32>}, {pipeline_mode = #tpu.pipeline_mode<synchronous>, transform_indices = @transform_4, window_bounds = array<i64: 1, 32>}, {pipeline_mode = #tpu.pipeline_mode<synchronous>, transform_indices = @transform_5, window_bounds = array<i64: 1, 32>}, {transform_indices = @transform_6, window_bounds = array<i64: 16, 32>}]} {
    %c0 = arith.constant 0 : index
    %c0_0 = arith.constant 0 : index
    %0 = vector.load %arg2[%c0, %c0_0] : memref<16x32xbf16, #tpu.memory_space<vmem>>, vector<16x32xbf16>
    %1 = arith.extf %0 : vector<16x32xbf16> to vector<16x32xf32>
    %2 = arith.truncf %1 : vector<16x32xf32> to vector<16x32xbf16>
    %c0_1 = arith.constant 0 : index
    %c0_2 = arith.constant 0 : index
    %3 = vector.load %arg3[%c0_1, %c0_2] : memref<32x32xbf16, #tpu.memory_space<vmem>>, vector<32x32xbf16>
    %cst = arith.constant dense<0.000000e+00> : vector<16x32xf32>
    %4 = tpu.matmul %2, %3, %cst {dimension_numbers = #tpu.dot_dimension_numbers<[1], [0], [0], [1], [0, 0, 1, 1], [], []>} : vector<16x32xbf16>, vector<32x32xbf16>, vector<16x32xf32> -> vector<16x32xf32>
    %c0_3 = arith.constant 0 : index
    %c0_4 = arith.constant 0 : index
    %5 = vector.load %arg4[%c0_3, %c0_4] : memref<1x32xf32, #tpu.memory_space<vmem>>, vector<1x32xf32>
    %6 = vector.broadcast %5 : vector<1x32xf32> to vector<16x32xf32>
    %7 = arith.addf %4, %6 : vector<16x32xf32>
    %c0_5 = arith.constant 0 : index
    %c0_6 = arith.constant 0 : index
    %8 = vector.load %arg5[%c0_5, %c0_6] : memref<16x32xf32, #tpu.memory_space<vmem>>, vector<16x32xf32>
    %9 = arith.addf %7, %8 : vector<16x32xf32>
    %c0_7 = arith.constant 0 : index
    %c0_8 = arith.constant 0 : index
    %10 = vector.load %arg6[%c0_7, %c0_8] : memref<1x32xf32, #tpu.memory_space<vmem>>, vector<1x32xf32>
    %c0_9 = arith.constant 0 : index
    %c0_10 = arith.constant 0 : index
    %11 = vector.load %arg7[%c0_9, %c0_10] : memref<1x32xf32, #tpu.memory_space<vmem>>, vector<1x32xf32>
    %cst_11 = arith.constant dense<0.000000e+00> : vector<16xf32>
    %12 = vector.multi_reduction <add>, %9, %cst_11 [1] : vector<16x32xf32> to vector<16xf32>
    %13 = vector.shape_cast %12 : vector<16xf32> to vector<16x1xf32>
    %cst_12 = arith.constant 3.200000e+01 : f32
    %14 = vector.broadcast %cst_12 : f32 to vector<16x1xf32>
    %15 = arith.divf %13, %14 : vector<16x1xf32>
    %16 = vector.broadcast %15 : vector<16x1xf32> to vector<16x32xf32>
    %17 = arith.subf %9, %16 : vector<16x32xf32>
    %18 = arith.mulf %17, %17 : vector<16x32xf32>
    %cst_13 = arith.constant dense<0.000000e+00> : vector<16xf32>
    %19 = vector.multi_reduction <add>, %18, %cst_13 [1] : vector<16x32xf32> to vector<16xf32>
    %20 = vector.shape_cast %19 : vector<16xf32> to vector<16x1xf32>
    %cst_14 = arith.constant 3.200000e+01 : f32
    %21 = vector.broadcast %cst_14 : f32 to vector<16x1xf32>
    %22 = arith.divf %20, %21 : vector<16x1xf32>
    %23 = vector.broadcast %15 : vector<16x1xf32> to vector<16x32xf32>
    %24 = arith.subf %9, %23 : vector<16x32xf32>
    %cst_15 = arith.constant 9.99999974E-6 : f32
    %25 = vector.broadcast %cst_15 : f32 to vector<16x1xf32>
    %26 = arith.addf %22, %25 : vector<16x1xf32>
    %27 = math.rsqrt %26 : vector<16x1xf32>
    %28 = vector.broadcast %27 : vector<16x1xf32> to vector<16x32xf32>
    %29 = arith.mulf %24, %28 : vector<16x32xf32>
    %30 = vector.broadcast %10 : vector<1x32xf32> to vector<16x32xf32>
    %31 = arith.mulf %29, %30 : vector<16x32xf32>
    %32 = vector.broadcast %11 : vector<1x32xf32> to vector<16x32xf32>
    %33 = arith.addf %31, %32 : vector<16x32xf32>
    %34 = arith.truncf %33 : vector<16x32xf32> to vector<16x32xbf16>
    %c0_16 = arith.constant 0 : index
    %c0_17 = arith.constant 0 : index
    %35 = vector.load %arg8[%c0_16, %c0_17] : memref<16x32xbf16, #tpu.memory_space<vmem>>, vector<16x32xbf16>
    tpu.vector_store %arg8[%c0_16, %c0_17], %34 {strides = array<i32>} : memref<16x32xbf16, #tpu.memory_space<vmem>>, vector<16x32xbf16>,
    return
  }
  func.func @transform_0(%arg0: i32, %arg1: i32) -> (i32, i32) {
    %c0_i32 = arith.constant 0 : i32
    %c0_i32_0 = arith.constant 0 : i32
    return %arg0, %c0_i32 : i32, i32
  }
  func.func @transform_1(%arg0: i32, %arg1: i32) -> (i32, i32) {
    %c0_i32 = arith.constant 0 : i32
    %c0_i32_0 = arith.constant 0 : i32
    %c0_i32_1 = arith.constant 0 : i32
    return %c0_i32, %c0_i32_0 : i32, i32
  }
  func.func @transform_2(%arg0: i32, %arg1: i32) -> (i32, i32) {
    %c0_i32 = arith.constant 0 : i32
    %c0_i32_0 = arith.constant 0 : i32
    %c0_i32_1 = arith.constant 0 : i32
    return %c0_i32, %c0_i32_0 : i32, i32
  }
  func.func @transform_3(%arg0: i32, %arg1: i32) -> (i32, i32) {
    %c0_i32 = arith.constant 0 : i32
    return %arg0, %arg1 : i32, i32
  }
  func.func @transform_4(%arg0: i32, %arg1: i32) -> (i32, i32) {
    %c0_i32 = arith.constant 0 : i32
    %c0_i32_0 = arith.constant 0 : i32
    %c0_i32_1 = arith.constant 0 : i32
    return %c0_i32, %c0_i32_0 : i32, i32
  }
  func.func @transform_5(%arg0: i32, %arg1: i32) -> (i32, i32) {
    %c0_i32 = arith.constant 0 : i32
    %c0_i32_0 = arith.constant 0 : i32
    %c0_i32_1 = arith.constant 0 : i32
    return %c0_i32, %c0_i32_0 : i32, i32
  }
  func.func @transform_6(%arg0: i32, %arg1: i32) -> (i32, i32) {
    %c0_i32 = arith.constant 0 : i32
    return %arg0, %arg1 : i32, i32
  }
}

module attributes {stable_mosaic.version = 11 : i64} {
  func.func @_ff_kernel(%arg0: i32, %arg1: memref<16x32xbf16, #tpu.memory_space<vmem>>, %arg2: memref<32x128xbf16, #tpu.memory_space<vmem>>, %arg3: memref<1x128xf32, #tpu.memory_space<vmem>>, %arg4: memref<128x32xbf16, #tpu.memory_space<vmem>>, %arg5: memref<1x32xf32, #tpu.memory_space<vmem>>, %arg6: memref<1x32xf32, #tpu.memory_space<vmem>>, %arg7: memref<1x32xf32, #tpu.memory_space<vmem>>, %arg8: memref<16x32xbf16, #tpu.memory_space<vmem>>) attributes {dimension_semantics = [#tpu.dimension_semantics<parallel>], iteration_bounds = array<i64: 1>, scalar_prefetch = 0 : i64, scratch_operands = 0 : i64, tpu.core_type = #tpu.core_type<tc>, window_params = [{transform_indices = @transform_0, window_bounds = array<i64: 16, 32>}, {pipeline_mode = #tpu.pipeline_mode<synchronous>, transform_indices = @transform_1, window_bounds = array<i64: 32, 128>}, {pipeline_mode = #tpu.pipeline_mode<synchronous>, transform_indices = @transform_2, window_bounds = array<i64: 1, 128>}, {pipeline_mode = #tpu.pipeline_mode<synchronous>, transform_indices = @transform_3, window_bounds = array<i64: 128, 32>}, {pipeline_mode = #tpu.pipeline_mode<synchronous>, transform_indices = @transform_4, window_bounds = array<i64: 1, 32>}, {pipeline_mode = #tpu.pipeline_mode<synchronous>, transform_indices = @transform_5, window_bounds = array<i64: 1, 32>}, {pipeline_mode = #tpu.pipeline_mode<synchronous>, transform_indices = @transform_6, window_bounds = array<i64: 1, 32>}, {transform_indices = @transform_7, window_bounds = array<i64: 16, 32>}]} {
    %c0 = arith.constant 0 : index
    %c0_0 = arith.constant 0 : index
    %0 = vector.load %arg1[%c0, %c0_0] : memref<16x32xbf16, #tpu.memory_space<vmem>>, vector<16x32xbf16>
    %1 = arith.extf %0 : vector<16x32xbf16> to vector<16x32xf32>
    %2 = arith.truncf %1 : vector<16x32xf32> to vector<16x32xbf16>
    %c0_1 = arith.constant 0 : index
    %c0_2 = arith.constant 0 : index
    %3 = vector.load %arg2[%c0_1, %c0_2] : memref<32x128xbf16, #tpu.memory_space<vmem>>, vector<32x128xbf16>
    %cst = arith.constant dense<0.000000e+00> : vector<16x128xf32>
    %4 = tpu.matmul %2, %3, %cst {dimension_numbers = #tpu.dot_dimension_numbers<[1], [0], [0], [1], [0, 0, 1, 1], [], []>} : vector<16x32xbf16>, vector<32x128xbf16>, vector<16x128xf32> -> vector<16x128xf32>
    %c0_3 = arith.constant 0 : index
    %c0_4 = arith.constant 0 : index
    %5 = vector.load %arg3[%c0_3, %c0_4] : memref<1x128xf32, #tpu.memory_space<vmem>>, vector<1x128xf32>
    %6 = vector.broadcast %5 : vector<1x128xf32> to vector<16x128xf32>
    %7 = arith.addf %4, %6 : vector<16x128xf32>
    %cst_5 = arith.constant 0.000000e+00 : f32
    %8 = vector.broadcast %cst_5 : f32 to vector<16x128xf32>
    %9 = arith.maximumf %7, %8 : vector<16x128xf32>
    %10 = arith.truncf %9 : vector<16x128xf32> to vector<16x128xbf16>
    %c0_6 = arith.constant 0 : index
    %c0_7 = arith.constant 0 : index
    %11 = vector.load %arg4[%c0_6, %c0_7] : memref<128x32xbf16, #tpu.memory_space<vmem>>, vector<128x32xbf16>
    %cst_8 = arith.constant dense<0.000000e+00> : vector<16x32xf32>
    %12 = tpu.matmul %10, %11, %cst_8 {dimension_numbers = #tpu.dot_dimension_numbers<[1], [0], [0], [1], [0, 0, 1, 1], [], []>} : vector<16x128xbf16>, vector<128x32xbf16>, vector<16x32xf32> -> vector<16x32xf32>
    %c0_9 = arith.constant 0 : index
    %c0_10 = arith.constant 0 : index
    %13 = vector.load %arg5[%c0_9, %c0_10] : memref<1x32xf32, #tpu.memory_space<vmem>>, vector<1x32xf32>
    %14 = vector.broadcast %13 : vector<1x32xf32> to vector<16x32xf32>
    %15 = arith.addf %12, %14 : vector<16x32xf32>
    %16 = arith.addf %15, %1 : vector<16x32xf32>
    %c0_11 = arith.constant 0 : index
    %c0_12 = arith.constant 0 : index
    %17 = vector.load %arg6[%c0_11, %c0_12] : memref<1x32xf32, #tpu.memory_space<vmem>>, vector<1x32xf32>
    %c0_13 = arith.constant 0 : index
    %c0_14 = arith.constant 0 : index
    %18 = vector.load %arg7[%c0_13, %c0_14] : memref<1x32xf32, #tpu.memory_space<vmem>>, vector<1x32xf32>
    %cst_15 = arith.constant dense<0.000000e+00> : vector<16xf32>
    %19 = vector.multi_reduction <add>, %16, %cst_15 [1] : vector<16x32xf32> to vector<16xf32>
    %20 = vector.shape_cast %19 : vector<16xf32> to vector<16x1xf32>
    %cst_16 = arith.constant 3.200000e+01 : f32
    %21 = vector.broadcast %cst_16 : f32 to vector<16x1xf32>
    %22 = arith.divf %20, %21 : vector<16x1xf32>
    %23 = vector.broadcast %22 : vector<16x1xf32> to vector<16x32xf32>
    %24 = arith.subf %16, %23 : vector<16x32xf32>
    %25 = arith.mulf %24, %24 : vector<16x32xf32>
    %cst_17 = arith.constant dense<0.000000e+00> : vector<16xf32>
    %26 = vector.multi_reduction <add>, %25, %cst_17 [1] : vector<16x32xf32> to vector<16xf32>
    %27 = vector.shape_cast %26 : vector<16xf32> to vector<16x1xf32>
    %cst_18 = arith.constant 3.200000e+01 : f32
    %28 = vector.broadcast %cst_18 : f32 to vector<16x1xf32>
    %29 = arith.divf %27, %28 : vector<16x1xf32>
    %30 = vector.broadcast %22 : vector<16x1xf32> to vector<16x32xf32>
    %31 = arith.subf %16, %30 : vector<16x32xf32>
    %cst_19 = arith.constant 9.99999974E-6 : f32
    %32 = vector.broadcast %cst_19 : f32 to vector<16x1xf32>
    %33 = arith.addf %29, %32 : vector<16x1xf32>
    %34 = math.rsqrt %33 : vector<16x1xf32>
    %35 = vector.broadcast %34 : vector<16x1xf32> to vector<16x32xf32>
    %36 = arith.mulf %31, %35 : vector<16x32xf32>
    %37 = vector.broadcast %17 : vector<1x32xf32> to vector<16x32xf32>
    %38 = arith.mulf %36, %37 : vector<16x32xf32>
    %39 = vector.broadcast %18 : vector<1x32xf32> to vector<16x32xf32>
    %40 = arith.addf %38, %39 : vector<16x32xf32>
    %41 = arith.truncf %40 : vector<16x32xf32> to vector<16x32xbf16>
    %c0_20 = arith.constant 0 : index
    %c0_21 = arith.constant 0 : index
    %42 = vector.load %arg8[%c0_20, %c0_21] : memref<16x32xbf16, #tpu.memory_space<vmem>>, vector<16x32xbf16>
    tpu.vector_store %arg8[%c0_20, %c0_21], %41 {strides = array<i32>} : memref<16x32xbf16, #tpu.memory_space<vmem>>, vector<16x32xbf16>,
    return
  }
  func.func @transform_0(%arg0: i32) -> (i32, i32) {
    %c0_i32 = arith.constant 0 : i32
    %c0_i32_0 = arith.constant 0 : i32
    return %arg0, %c0_i32 : i32, i32
  }
  func.func @transform_1(%arg0: i32) -> (i32, i32) {
    %c0_i32 = arith.constant 0 : i32
    %c0_i32_0 = arith.constant 0 : i32
    %c0_i32_1 = arith.constant 0 : i32
    return %c0_i32, %c0_i32_0 : i32, i32
  }
  func.func @transform_2(%arg0: i32) -> (i32, i32) {
    %c0_i32 = arith.constant 0 : i32
    %c0_i32_0 = arith.constant 0 : i32
    %c0_i32_1 = arith.constant 0 : i32
    return %c0_i32, %c0_i32_0 : i32, i32
  }
  func.func @transform_3(%arg0: i32) -> (i32, i32) {
    %c0_i32 = arith.constant 0 : i32
    %c0_i32_0 = arith.constant 0 : i32
    %c0_i32_1 = arith.constant 0 : i32
    return %c0_i32, %c0_i32_0 : i32, i32
  }
  func.func @transform_4(%arg0: i32) -> (i32, i32) {
    %c0_i32 = arith.constant 0 : i32
    %c0_i32_0 = arith.constant 0 : i32
    %c0_i32_1 = arith.constant 0 : i32
    return %c0_i32, %c0_i32_0 : i32, i32
  }
  func.func @transform_5(%arg0: i32) -> (i32, i32) {
    %c0_i32 = arith.constant 0 : i32
    %c0_i32_0 = arith.constant 0 : i32
    %c0_i32_1 = arith.constant 0 : i32
    return %c0_i32, %c0_i32_0 : i32, i32
  }
  func.func @transform_6(%arg0: i32) -> (i32, i32) {
    %c0_i32 = arith.constant 0 : i32
    %c0_i32_0 = arith.constant 0 : i32
    %c0_i32_1 = arith.constant 0 : i32
    return %c0_i32, %c0_i32_0 : i32, i32
  }
  func.func @transform_7(%arg0: i32) -> (i32, i32) {
    %c0_i32 = arith.constant 0 : i32
    %c0_i32_0 = arith.constant 0 : i32
    return %arg0, %c0_i32 : i32, i32
  }
}

module attributes {stable_mosaic.version = 11 : i64} {
  func.func @_linear_kernel(%arg0: i32, %arg1: i32, %arg2: memref<16x32xbf16, #tpu.memory_space<vmem>>, %arg3: memref<32x96xbf16, #tpu.memory_space<vmem>>, %arg4: memref<1x96xf32, #tpu.memory_space<vmem>>, %arg5: memref<16x96xbf16, #tpu.memory_space<vmem>>) attributes {dimension_semantics = [#tpu.dimension_semantics<parallel>, #tpu.dimension_semantics<parallel>], iteration_bounds = array<i64: 1, 1>, scalar_prefetch = 0 : i64, scratch_operands = 0 : i64, tpu.core_type = #tpu.core_type<tc>, window_params = [{transform_indices = @transform_0, window_bounds = array<i64: 16, 32>}, {pipeline_mode = #tpu.pipeline_mode<synchronous>, transform_indices = @transform_1, window_bounds = array<i64: 32, 96>}, {pipeline_mode = #tpu.pipeline_mode<synchronous>, transform_indices = @transform_2, window_bounds = array<i64: 1, 96>}, {transform_indices = @transform_3, window_bounds = array<i64: 16, 96>}]} {
    %c0 = arith.constant 0 : index
    %c0_0 = arith.constant 0 : index
    %0 = vector.load %arg2[%c0, %c0_0] : memref<16x32xbf16, #tpu.memory_space<vmem>>, vector<16x32xbf16>
    %1 = arith.extf %0 : vector<16x32xbf16> to vector<16x32xf32>
    %2 = arith.truncf %1 : vector<16x32xf32> to vector<16x32xbf16>
    %c0_1 = arith.constant 0 : index
    %c0_2 = arith.constant 0 : index
    %3 = vector.load %arg3[%c0_1, %c0_2] : memref<32x96xbf16, #tpu.memory_space<vmem>>, vector<32x96xbf16>
    %cst = arith.constant dense<0.000000e+00> : vector<16x96xf32>
    %4 = tpu.matmul %2, %3, %cst {dimension_numbers = #tpu.dot_dimension_numbers<[1], [0], [0], [1], [0, 0, 1, 1], [], []>} : vector<16x32xbf16>, vector<32x96xbf16>, vector<16x96xf32> -> vector<16x96xf32>
    %c0_3 = arith.constant 0 : index
    %c0_4 = arith.constant 0 : index
    %5 = vector.load %arg4[%c0_3, %c0_4] : memref<1x96xf32, #tpu.memory_space<vmem>>, vector<1x96xf32>
    %6 = vector.broadcast %5 : vector<1x96xf32> to vector<16x96xf32>
    %7 = arith.addf %4, %6 : vector<16x96xf32>
    %8 = arith.truncf %7 : vector<16x96xf32> to vector<16x96xbf16>
    %c0_5 = arith.constant 0 : index
    %c0_6 = arith.constant 0 : index
    %9 = vector.load %arg5[%c0_5, %c0_6] : memref<16x96xbf16, #tpu.memory_space<vmem>>, vector<16x96xbf16>
    tpu.vector_store %arg5[%c0_5, %c0_6], %8 {strides = array<i32>} : memref<16x96xbf16, #tpu.memory_space<vmem>>, vector<16x96xbf16>,
    return
  }
  func.func @transform_0(%arg0: i32, %arg1: i32) -> (i32, i32) {
    %c0_i32 = arith.constant 0 : i32
    %c0_i32_0 = arith.constant 0 : i32
    return %arg0, %c0_i32 : i32, i32
  }
  func.func @transform_1(%arg0: i32, %arg1: i32) -> (i32, i32) {
    %c0_i32 = arith.constant 0 : i32
    %c0_i32_0 = arith.constant 0 : i32
    %c0_i32_1 = arith.constant 0 : i32
    return %c0_i32, %c0_i32_0 : i32, i32
  }
  func.func @transform_2(%arg0: i32, %arg1: i32) -> (i32, i32) {
    %c0_i32 = arith.constant 0 : i32
    %c0_i32_0 = arith.constant 0 : i32
    %c0_i32_1 = arith.constant 0 : i32
    return %c0_i32, %c0_i32_0 : i32, i32
  }
  func.func @transform_3(%arg0: i32, %arg1: i32) -> (i32, i32) {
    %c0_i32 = arith.constant 0 : i32
    return %arg0, %arg1 : i32, i32
  }
}

module attributes {stable_mosaic.version = 11 : i64} {
  func.func @_linear_kernel(%arg0: i32, %arg1: i32, %arg2: memref<16x32xbf16, #tpu.memory_space<vmem>>, %arg3: memref<32x32xbf16, #tpu.memory_space<vmem>>, %arg4: memref<1x32xf32, #tpu.memory_space<vmem>>, %arg5: memref<16x32xbf16, #tpu.memory_space<vmem>>, %arg6: memref<1x32xf32, #tpu.memory_space<vmem>>, %arg7: memref<1x32xf32, #tpu.memory_space<vmem>>, %arg8: memref<16x32xbf16, #tpu.memory_space<vmem>>) attributes {dimension_semantics = [#tpu.dimension_semantics<parallel>, #tpu.dimension_semantics<parallel>], iteration_bounds = array<i64: 1, 1>, scalar_prefetch = 0 : i64, scratch_operands = 0 : i64, tpu.core_type = #tpu.core_type<tc>, window_params = [{transform_indices = @transform_0, window_bounds = array<i64: 16, 32>}, {pipeline_mode = #tpu.pipeline_mode<synchronous>, transform_indices = @transform_1, window_bounds = array<i64: 32, 32>}, {pipeline_mode = #tpu.pipeline_mode<synchronous>, transform_indices = @transform_2, window_bounds = array<i64: 1, 32>}, {transform_indices = @transform_3, window_bounds = array<i64: 16, 32>}, {pipeline_mode = #tpu.pipeline_mode<synchronous>, transform_indices = @transform_4, window_bounds = array<i64: 1, 32>}, {pipeline_mode = #tpu.pipeline_mode<synchronous>, transform_indices = @transform_5, window_bounds = array<i64: 1, 32>}, {transform_indices = @transform_6, window_bounds = array<i64: 16, 32>}]} {
    %c0 = arith.constant 0 : index
    %c0_0 = arith.constant 0 : index
    %0 = vector.load %arg2[%c0, %c0_0] : memref<16x32xbf16, #tpu.memory_space<vmem>>, vector<16x32xbf16>
    %1 = arith.extf %0 : vector<16x32xbf16> to vector<16x32xf32>
    %2 = arith.truncf %1 : vector<16x32xf32> to vector<16x32xbf16>
    %c0_1 = arith.constant 0 : index
    %c0_2 = arith.constant 0 : index
    %3 = vector.load %arg3[%c0_1, %c0_2] : memref<32x32xbf16, #tpu.memory_space<vmem>>, vector<32x32xbf16>
    %cst = arith.constant dense<0.000000e+00> : vector<16x32xf32>
    %4 = tpu.matmul %2, %3, %cst {dimension_numbers = #tpu.dot_dimension_numbers<[1], [0], [0], [1], [0, 0, 1, 1], [], []>} : vector<16x32xbf16>, vector<32x32xbf16>, vector<16x32xf32> -> vector<16x32xf32>
    %c0_3 = arith.constant 0 : index
    %c0_4 = arith.constant 0 : index
    %5 = vector.load %arg4[%c0_3, %c0_4] : memref<1x32xf32, #tpu.memory_space<vmem>>, vector<1x32xf32>
    %6 = vector.broadcast %5 : vector<1x32xf32> to vector<16x32xf32>
    %7 = arith.addf %4, %6 : vector<16x32xf32>
    %c0_5 = arith.constant 0 : index
    %c0_6 = arith.constant 0 : index
    %8 = vector.load %arg5[%c0_5, %c0_6] : memref<16x32xbf16, #tpu.memory_space<vmem>>, vector<16x32xbf16>
    %9 = arith.extf %8 : vector<16x32xbf16> to vector<16x32xf32>
    %10 = arith.addf %7, %9 : vector<16x32xf32>
    %c0_7 = arith.constant 0 : index
    %c0_8 = arith.constant 0 : index
    %11 = vector.load %arg6[%c0_7, %c0_8] : memref<1x32xf32, #tpu.memory_space<vmem>>, vector<1x32xf32>
    %c0_9 = arith.constant 0 : index
    %c0_10 = arith.constant 0 : index
    %12 = vector.load %arg7[%c0_9, %c0_10] : memref<1x32xf32, #tpu.memory_space<vmem>>, vector<1x32xf32>
    %cst_11 = arith.constant dense<0.000000e+00> : vector<16xf32>
    %13 = vector.multi_reduction <add>, %10, %cst_11 [1] : vector<16x32xf32> to vector<16xf32>
    %14 = vector.shape_cast %13 : vector<16xf32> to vector<16x1xf32>
    %cst_12 = arith.constant 3.200000e+01 : f32
    %15 = vector.broadcast %cst_12 : f32 to vector<16x1xf32>
    %16 = arith.divf %14, %15 : vector<16x1xf32>
    %17 = vector.broadcast %16 : vector<16x1xf32> to vector<16x32xf32>
    %18 = arith.subf %10, %17 : vector<16x32xf32>
    %19 = arith.mulf %18, %18 : vector<16x32xf32>
    %cst_13 = arith.constant dense<0.000000e+00> : vector<16xf32>
    %20 = vector.multi_reduction <add>, %19, %cst_13 [1] : vector<16x32xf32> to vector<16xf32>
    %21 = vector.shape_cast %20 : vector<16xf32> to vector<16x1xf32>
    %cst_14 = arith.constant 3.200000e+01 : f32
    %22 = vector.broadcast %cst_14 : f32 to vector<16x1xf32>
    %23 = arith.divf %21, %22 : vector<16x1xf32>
    %24 = vector.broadcast %16 : vector<16x1xf32> to vector<16x32xf32>
    %25 = arith.subf %10, %24 : vector<16x32xf32>
    %cst_15 = arith.constant 9.99999974E-6 : f32
    %26 = vector.broadcast %cst_15 : f32 to vector<16x1xf32>
    %27 = arith.addf %23, %26 : vector<16x1xf32>
    %28 = math.rsqrt %27 : vector<16x1xf32>
    %29 = vector.broadcast %28 : vector<16x1xf32> to vector<16x32xf32>
    %30 = arith.mulf %25, %29 : vector<16x32xf32>
    %31 = vector.broadcast %11 : vector<1x32xf32> to vector<16x32xf32>
    %32 = arith.mulf %30, %31 : vector<16x32xf32>
    %33 = vector.broadcast %12 : vector<1x32xf32> to vector<16x32xf32>
    %34 = arith.addf %32, %33 : vector<16x32xf32>
    %35 = arith.truncf %34 : vector<16x32xf32> to vector<16x32xbf16>
    %c0_16 = arith.constant 0 : index
    %c0_17 = arith.constant 0 : index
    %36 = vector.load %arg8[%c0_16, %c0_17] : memref<16x32xbf16, #tpu.memory_space<vmem>>, vector<16x32xbf16>
    tpu.vector_store %arg8[%c0_16, %c0_17], %35 {strides = array<i32>} : memref<16x32xbf16, #tpu.memory_space<vmem>>, vector<16x32xbf16>,
    return
  }
  func.func @transform_0(%arg0: i32, %arg1: i32) -> (i32, i32) {
    %c0_i32 = arith.constant 0 : i32
    %c0_i32_0 = arith.constant 0 : i32
    return %arg0, %c0_i32 : i32, i32
  }
  func.func @transform_1(%arg0: i32, %arg1: i32) -> (i32, i32) {
    %c0_i32 = arith.constant 0 : i32
    %c0_i32_0 = arith.constant 0 : i32
    %c0_i32_1 = arith.constant 0 : i32
    return %c0_i32, %c0_i32_0 : i32, i32
  }
  func.func @transform_2(%arg0: i32, %arg1: i32) -> (i32, i32) {
    %c0_i32 = arith.constant 0 : i32
    %c0_i32_0 = arith.constant 0 : i32
    %c0_i32_1 = arith.constant 0 : i32
    return %c0_i32, %c0_i32_0 : i32, i32
  }
  func.func @transform_3(%arg0: i32, %arg1: i32) -> (i32, i32) {
    %c0_i32 = arith.constant 0 : i32
    return %arg0, %arg1 : i32, i32
  }
  func.func @transform_4(%arg0: i32, %arg1: i32) -> (i32, i32) {
    %c0_i32 = arith.constant 0 : i32
    %c0_i32_0 = arith.constant 0 : i32
    %c0_i32_1 = arith.constant 0 : i32
    return %c0_i32, %c0_i32_0 : i32, i32
  }
  func.func @transform_5(%arg0: i32, %arg1: i32) -> (i32, i32) {
    %c0_i32 = arith.constant 0 : i32
    %c0_i32_0 = arith.constant 0 : i32
    %c0_i32_1 = arith.constant 0 : i32
    return %c0_i32, %c0_i32_0 : i32, i32
  }
  func.func @transform_6(%arg0: i32, %arg1: i32) -> (i32, i32) {
    %c0_i32 = arith.constant 0 : i32
    return %arg0, %arg1 : i32, i32
  }
}

module attributes {stable_mosaic.version = 11 : i64} {
  func.func @_linear_kernel(%arg0: i32, %arg1: i32, %arg2: memref<16x32xbf16, #tpu.memory_space<vmem>>, %arg3: memref<32x64xbf16, #tpu.memory_space<vmem>>, %arg4: memref<1x64xf32, #tpu.memory_space<vmem>>, %arg5: memref<16x64xbf16, #tpu.memory_space<vmem>>) attributes {dimension_semantics = [#tpu.dimension_semantics<parallel>, #tpu.dimension_semantics<parallel>], iteration_bounds = array<i64: 1, 1>, scalar_prefetch = 0 : i64, scratch_operands = 0 : i64, tpu.core_type = #tpu.core_type<tc>, window_params = [{transform_indices = @transform_0, window_bounds = array<i64: 16, 32>}, {pipeline_mode = #tpu.pipeline_mode<synchronous>, transform_indices = @transform_1, window_bounds = array<i64: 32, 64>}, {pipeline_mode = #tpu.pipeline_mode<synchronous>, transform_indices = @transform_2, window_bounds = array<i64: 1, 64>}, {transform_indices = @transform_3, window_bounds = array<i64: 16, 64>}]} {
    %c0 = arith.constant 0 : index
    %c0_0 = arith.constant 0 : index
    %0 = vector.load %arg2[%c0, %c0_0] : memref<16x32xbf16, #tpu.memory_space<vmem>>, vector<16x32xbf16>
    %1 = arith.extf %0 : vector<16x32xbf16> to vector<16x32xf32>
    %2 = arith.truncf %1 : vector<16x32xf32> to vector<16x32xbf16>
    %c0_1 = arith.constant 0 : index
    %c0_2 = arith.constant 0 : index
    %3 = vector.load %arg3[%c0_1, %c0_2] : memref<32x64xbf16, #tpu.memory_space<vmem>>, vector<32x64xbf16>
    %cst = arith.constant dense<0.000000e+00> : vector<16x64xf32>
    %4 = tpu.matmul %2, %3, %cst {dimension_numbers = #tpu.dot_dimension_numbers<[1], [0], [0], [1], [0, 0, 1, 1], [], []>} : vector<16x32xbf16>, vector<32x64xbf16>, vector<16x64xf32> -> vector<16x64xf32>
    %c0_3 = arith.constant 0 : index
    %c0_4 = arith.constant 0 : index
    %5 = vector.load %arg4[%c0_3, %c0_4] : memref<1x64xf32, #tpu.memory_space<vmem>>, vector<1x64xf32>
    %6 = vector.broadcast %5 : vector<1x64xf32> to vector<16x64xf32>
    %7 = arith.addf %4, %6 : vector<16x64xf32>
    %8 = arith.truncf %7 : vector<16x64xf32> to vector<16x64xbf16>
    %c0_5 = arith.constant 0 : index
    %c0_6 = arith.constant 0 : index
    %9 = vector.load %arg5[%c0_5, %c0_6] : memref<16x64xbf16, #tpu.memory_space<vmem>>, vector<16x64xbf16>
    tpu.vector_store %arg5[%c0_5, %c0_6], %8 {strides = array<i32>} : memref<16x64xbf16, #tpu.memory_space<vmem>>, vector<16x64xbf16>,
    return
  }
  func.func @transform_0(%arg0: i32, %arg1: i32) -> (i32, i32) {
    %c0_i32 = arith.constant 0 : i32
    %c0_i32_0 = arith.constant 0 : i32
    return %arg0, %c0_i32 : i32, i32
  }
  func.func @transform_1(%arg0: i32, %arg1: i32) -> (i32, i32) {
    %c0_i32 = arith.constant 0 : i32
    %c0_i32_0 = arith.constant 0 : i32
    %c0_i32_1 = arith.constant 0 : i32
    return %c0_i32, %c0_i32_0 : i32, i32
  }
  func.func @transform_2(%arg0: i32, %arg1: i32) -> (i32, i32) {
    %c0_i32 = arith.constant 0 : i32
    %c0_i32_0 = arith.constant 0 : i32
    %c0_i32_1 = arith.constant 0 : i32
    return %c0_i32, %c0_i32_0 : i32, i32
  }
  func.func @transform_3(%arg0: i32, %arg1: i32) -> (i32, i32) {
    %c0_i32 = arith.constant 0 : i32
    return %arg0, %arg1 : i32, i32
  }
}

module attributes {stable_mosaic.version = 11 : i64} {
  func.func @_linear_kernel(%arg0: i32, %arg1: i32, %arg2: memref<16x32xbf16, #tpu.memory_space<vmem>>, %arg3: memref<32x32xbf16, #tpu.memory_space<vmem>>, %arg4: memref<1x32xf32, #tpu.memory_space<vmem>>, %arg5: memref<16x32xbf16, #tpu.memory_space<vmem>>) attributes {dimension_semantics = [#tpu.dimension_semantics<parallel>, #tpu.dimension_semantics<parallel>], iteration_bounds = array<i64: 1, 1>, scalar_prefetch = 0 : i64, scratch_operands = 0 : i64, tpu.core_type = #tpu.core_type<tc>, window_params = [{transform_indices = @transform_0, window_bounds = array<i64: 16, 32>}, {pipeline_mode = #tpu.pipeline_mode<synchronous>, transform_indices = @transform_1, window_bounds = array<i64: 32, 32>}, {pipeline_mode = #tpu.pipeline_mode<synchronous>, transform_indices = @transform_2, window_bounds = array<i64: 1, 32>}, {transform_indices = @transform_3, window_bounds = array<i64: 16, 32>}]} {
    %c0 = arith.constant 0 : index
    %c0_0 = arith.constant 0 : index
    %0 = vector.load %arg2[%c0, %c0_0] : memref<16x32xbf16, #tpu.memory_space<vmem>>, vector<16x32xbf16>
    %1 = arith.extf %0 : vector<16x32xbf16> to vector<16x32xf32>
    %2 = arith.truncf %1 : vector<16x32xf32> to vector<16x32xbf16>
    %c0_1 = arith.constant 0 : index
    %c0_2 = arith.constant 0 : index
    %3 = vector.load %arg3[%c0_1, %c0_2] : memref<32x32xbf16, #tpu.memory_space<vmem>>, vector<32x32xbf16>
    %cst = arith.constant dense<0.000000e+00> : vector<16x32xf32>
    %4 = tpu.matmul %2, %3, %cst {dimension_numbers = #tpu.dot_dimension_numbers<[1], [0], [0], [1], [0, 0, 1, 1], [], []>} : vector<16x32xbf16>, vector<32x32xbf16>, vector<16x32xf32> -> vector<16x32xf32>
    %c0_3 = arith.constant 0 : index
    %c0_4 = arith.constant 0 : index
    %5 = vector.load %arg4[%c0_3, %c0_4] : memref<1x32xf32, #tpu.memory_space<vmem>>, vector<1x32xf32>
    %6 = vector.broadcast %5 : vector<1x32xf32> to vector<16x32xf32>
    %7 = arith.addf %4, %6 : vector<16x32xf32>
    %8 = arith.truncf %7 : vector<16x32xf32> to vector<16x32xbf16>
    %c0_5 = arith.constant 0 : index
    %c0_6 = arith.constant 0 : index
    %9 = vector.load %arg5[%c0_5, %c0_6] : memref<16x32xbf16, #tpu.memory_space<vmem>>, vector<16x32xbf16>
    tpu.vector_store %arg5[%c0_5, %c0_6], %8 {strides = array<i32>} : memref<16x32xbf16, #tpu.memory_space<vmem>>, vector<16x32xbf16>,
    return
  }
  func.func @transform_0(%arg0: i32, %arg1: i32) -> (i32, i32) {
    %c0_i32 = arith.constant 0 : i32
    %c0_i32_0 = arith.constant 0 : i32
    return %arg0, %c0_i32 : i32, i32
  }
  func.func @transform_1(%arg0: i32, %arg1: i32) -> (i32, i32) {
    %c0_i32 = arith.constant 0 : i32
    %c0_i32_0 = arith.constant 0 : i32
    %c0_i32_1 = arith.constant 0 : i32
    return %c0_i32, %c0_i32_0 : i32, i32
  }
  func.func @transform_2(%arg0: i32, %arg1: i32) -> (i32, i32) {
    %c0_i32 = arith.constant 0 : i32
    %c0_i32_0 = arith.constant 0 : i32
    %c0_i32_1 = arith.constant 0 : i32
    return %c0_i32, %c0_i32_0 : i32, i32
  }
  func.func @transform_3(%arg0: i32, %arg1: i32) -> (i32, i32) {
    %c0_i32 = arith.constant 0 : i32
    return %arg0, %arg1 : i32, i32
  }
}

module attributes {stable_mosaic.version = 11 : i64} {
  func.func @_attn_kernel(%arg0: i32, %arg1: memref<1x8x32xbf16, #tpu.memory_space<vmem>>, %arg2: memref<1x8x64xbf16, #tpu.memory_space<vmem>>, %arg3: memref<1x8x32xbf16, #tpu.memory_space<vmem>>, %arg4: memref<1x8x32xf32, #tpu.memory_space<vmem>>) attributes {dimension_semantics = [#tpu.dimension_semantics<parallel>], iteration_bounds = array<i64: 2>, scalar_prefetch = 0 : i64, scratch_operands = 0 : i64, tpu.core_type = #tpu.core_type<tc>, window_params = [{transform_indices = @transform_0, window_bounds = array<i64: 1, 8, 32>}, {transform_indices = @transform_1, window_bounds = array<i64: 1, 8, 64>}, {transform_indices = @transform_2, window_bounds = array<i64: 1, 8, 32>}, {transform_indices = @transform_3, window_bounds = array<i64: 1, 8, 32>}]} {
    %c0 = arith.constant 0 : index
    %c0_0 = arith.constant 0 : index
    %c0_1 = arith.constant 0 : index
    %0 = vector.load %arg1[%c0, %c0_0, %c0_1] : memref<1x8x32xbf16, #tpu.memory_space<vmem>>, vector<1x8x8xbf16>
    %1 = vector.shape_cast %0 : vector<1x8x8xbf16> to vector<8x8xbf16>
    %c0_2 = arith.constant 0 : index
    %c0_3 = arith.constant 0 : index
    %c0_4 = arith.constant 0 : index
    %2 = vector.load %arg2[%c0_2, %c0_3, %c0_4] : memref<1x8x64xbf16, #tpu.memory_space<vmem>>, vector<1x8x8xbf16>
    %3 = vector.shape_cast %2 : vector<1x8x8xbf16> to vector<8x8xbf16>
    %c0_5 = arith.constant 0 : index
    %c0_6 = arith.constant 0 : index
    %c32 = arith.constant 32 : index
    %4 = vector.load %arg2[%c0_5, %c0_6, %c32] : memref<1x8x64xbf16, #tpu.memory_space<vmem>>, vector<1x8x8xbf16>
    %5 = vector.shape_cast %4 : vector<1x8x8xbf16> to vector<8x8xbf16>
    %cst = arith.constant dense<0.000000e+00> : vector<8x8xf32>
    %6 = tpu.matmul %1, %3, %cst {dimension_numbers = #tpu.dot_dimension_numbers<[1], [1], [0], [0], [0, 0, 1, 0], [], []>} : vector<8x8xbf16>, vector<8x8xbf16>, vector<8x8xf32> -> vector<8x8xf32>
    %cst_7 = arith.constant 0.353553385 : f32
    %7 = vector.broadcast %cst_7 : f32 to vector<8x8xf32>
    %8 = arith.mulf %6, %7 : vector<8x8xf32>
    %cst_8 = arith.constant dense<0xFF800000> : vector<8xf32>
    %9 = vector.multi_reduction <maximumf>, %8, %cst_8 [1] : vector<8x8xf32> to vector<8xf32>
    %10 = vector.shape_cast %9 : vector<8xf32> to vector<8x1xf32>
    %11 = vector.broadcast %10 : vector<8x1xf32> to vector<8x8xf32>
    %12 = arith.subf %8, %11 : vector<8x8xf32>
    %13 = math.exp %12 : vector<8x8xf32>
    %cst_9 = arith.constant dense<0.000000e+00> : vector<8xf32>
    %14 = vector.multi_reduction <add>, %13, %cst_9 [1] : vector<8x8xf32> to vector<8xf32>
    %15 = vector.shape_cast %14 : vector<8xf32> to vector<8x1xf32>
    %16 = vector.broadcast %15 : vector<8x1xf32> to vector<8x8xf32>
    %17 = arith.divf %13, %16 : vector<8x8xf32>
    %18 = arith.truncf %17 : vector<8x8xf32> to vector<8x8xbf16>
    %cst_10 = arith.constant dense<0.000000e+00> : vector<8x8xf32>
    %19 = tpu.matmul %18, %5, %cst_10 {dimension_numbers = #tpu.dot_dimension_numbers<[1], [0], [0], [1], [0, 0, 1, 1], [], []>} : vector<8x8xbf16>, vector<8x8xbf16>, vector<8x8xf32> -> vector<8x8xf32>
    %c0_11 = arith.constant 0 : index
    %c0_12 = arith.constant 0 : index
    %c8 = arith.constant 8 : index
    %20 = vector.load %arg1[%c0_11, %c0_12, %c8] : memref<1x8x32xbf16, #tpu.memory_space<vmem>>, vector<1x8x8xbf16>
    %21 = vector.shape_cast %20 : vector<1x8x8xbf16> to vector<8x8xbf16>
    %c0_13 = arith.constant 0 : index
    %c0_14 = arith.constant 0 : index
    %c8_15 = arith.constant 8 : index
    %22 = vector.load %arg2[%c0_13, %c0_14, %c8_15] : memref<1x8x64xbf16, #tpu.memory_space<vmem>>, vector<1x8x8xbf16>
    %23 = vector.shape_cast %22 : vector<1x8x8xbf16> to vector<8x8xbf16>
    %c0_16 = arith.constant 0 : index
    %c0_17 = arith.constant 0 : index
    %c40 = arith.constant 40 : index
    %24 = vector.load %arg2[%c0_16, %c0_17, %c40] : memref<1x8x64xbf16, #tpu.memory_space<vmem>>, vector<1x8x8xbf16>
    %25 = vector.shape_cast %24 : vector<1x8x8xbf16> to vector<8x8xbf16>
    %cst_18 = arith.constant dense<0.000000e+00> : vector<8x8xf32>
    %26 = tpu.matmul %21, %23, %cst_18 {dimension_numbers = #tpu.dot_dimension_numbers<[1], [1], [0], [0], [0, 0, 1, 0], [], []>} : vector<8x8xbf16>, vector<8x8xbf16>, vector<8x8xf32> -> vector<8x8xf32>
    %cst_19 = arith.constant 0.353553385 : f32
    %27 = vector.broadcast %cst_19 : f32 to vector<8x8xf32>
    %28 = arith.mulf %26, %27 : vector<8x8xf32>
    %cst_20 = arith.constant dense<0xFF800000> : vector<8xf32>
    %29 = vector.multi_reduction <maximumf>, %28, %cst_20 [1] : vector<8x8xf32> to vector<8xf32>
    %30 = vector.shape_cast %29 : vector<8xf32> to vector<8x1xf32>
    %31 = vector.broadcast %30 : vector<8x1xf32> to vector<8x8xf32>
    %32 = arith.subf %28, %31 : vector<8x8xf32>
    %33 = math.exp %32 : vector<8x8xf32>
    %cst_21 = arith.constant dense<0.000000e+00> : vector<8xf32>
    %34 = vector.multi_reduction <add>, %33, %cst_21 [1] : vector<8x8xf32> to vector<8xf32>
    %35 = vector.shape_cast %34 : vector<8xf32> to vector<8x1xf32>
    %36 = vector.broadcast %35 : vector<8x1xf32> to vector<8x8xf32>
    %37 = arith.divf %33, %36 : vector<8x8xf32>
    %38 = arith.truncf %37 : vector<8x8xf32> to vector<8x8xbf16>
    %cst_22 = arith.constant dense<0.000000e+00> : vector<8x8xf32>
    %39 = tpu.matmul %38, %25, %cst_22 {dimension_numbers = #tpu.dot_dimension_numbers<[1], [0], [0], [1], [0, 0, 1, 1], [], []>} : vector<8x8xbf16>, vector<8x8xbf16>, vector<8x8xf32> -> vector<8x8xf32>
    %c0_23 = arith.constant 0 : index
    %c0_24 = arith.constant 0 : index
    %c16 = arith.constant 16 : index
    %40 = vector.load %arg1[%c0_23, %c0_24, %c16] : memref<1x8x32xbf16, #tpu.memory_space<vmem>>, vector<1x8x8xbf16>
    %41 = vector.shape_cast %40 : vector<1x8x8xbf16> to vector<8x8xbf16>
    %c0_25 = arith.constant 0 : index
    %c0_26 = arith.constant 0 : index
    %c16_27 = arith.constant 16 : index
    %42 = vector.load %arg2[%c0_25, %c0_26, %c16_27] : memref<1x8x64xbf16, #tpu.memory_space<vmem>>, vector<1x8x8xbf16>
    %43 = vector.shape_cast %42 : vector<1x8x8xbf16> to vector<8x8xbf16>
    %c0_28 = arith.constant 0 : index
    %c0_29 = arith.constant 0 : index
    %c48 = arith.constant 48 : index
    %44 = vector.load %arg2[%c0_28, %c0_29, %c48] : memref<1x8x64xbf16, #tpu.memory_space<vmem>>, vector<1x8x8xbf16>
    %45 = vector.shape_cast %44 : vector<1x8x8xbf16> to vector<8x8xbf16>
    %cst_30 = arith.constant dense<0.000000e+00> : vector<8x8xf32>
    %46 = tpu.matmul %41, %43, %cst_30 {dimension_numbers = #tpu.dot_dimension_numbers<[1], [1], [0], [0], [0, 0, 1, 0], [], []>} : vector<8x8xbf16>, vector<8x8xbf16>, vector<8x8xf32> -> vector<8x8xf32>
    %cst_31 = arith.constant 0.353553385 : f32
    %47 = vector.broadcast %cst_31 : f32 to vector<8x8xf32>
    %48 = arith.mulf %46, %47 : vector<8x8xf32>
    %cst_32 = arith.constant dense<0xFF800000> : vector<8xf32>
    %49 = vector.multi_reduction <maximumf>, %48, %cst_32 [1] : vector<8x8xf32> to vector<8xf32>
    %50 = vector.shape_cast %49 : vector<8xf32> to vector<8x1xf32>
    %51 = vector.broadcast %50 : vector<8x1xf32> to vector<8x8xf32>
    %52 = arith.subf %48, %51 : vector<8x8xf32>
    %53 = math.exp %52 : vector<8x8xf32>
    %cst_33 = arith.constant dense<0.000000e+00> : vector<8xf32>
    %54 = vector.multi_reduction <add>, %53, %cst_33 [1] : vector<8x8xf32> to vector<8xf32>
    %55 = vector.shape_cast %54 : vector<8xf32> to vector<8x1xf32>
    %56 = vector.broadcast %55 : vector<8x1xf32> to vector<8x8xf32>
    %57 = arith.divf %53, %56 : vector<8x8xf32>
    %58 = arith.truncf %57 : vector<8x8xf32> to vector<8x8xbf16>
    %cst_34 = arith.constant dense<0.000000e+00> : vector<8x8xf32>
    %59 = tpu.matmul %58, %45, %cst_34 {dimension_numbers = #tpu.dot_dimension_numbers<[1], [0], [0], [1], [0, 0, 1, 1], [], []>} : vector<8x8xbf16>, vector<8x8xbf16>, vector<8x8xf32> -> vector<8x8xf32>
    %c0_35 = arith.constant 0 : index
    %c0_36 = arith.constant 0 : index
    %c24 = arith.constant 24 : index
    %60 = vector.load %arg1[%c0_35, %c0_36, %c24] : memref<1x8x32xbf16, #tpu.memory_space<vmem>>, vector<1x8x8xbf16>
    %61 = vector.shape_cast %60 : vector<1x8x8xbf16> to vector<8x8xbf16>
    %c0_37 = arith.constant 0 : index
    %c0_38 = arith.constant 0 : index
    %c24_39 = arith.constant 24 : index
    %62 = vector.load %arg2[%c0_37, %c0_38, %c24_39] : memref<1x8x64xbf16, #tpu.memory_space<vmem>>, vector<1x8x8xbf16>
    %63 = vector.shape_cast %62 : vector<1x8x8xbf16> to vector<8x8xbf16>
    %c0_40 = arith.constant 0 : index
    %c0_41 = arith.constant 0 : index
    %c56 = arith.constant 56 : index
    %64 = vector.load %arg2[%c0_40, %c0_41, %c56] : memref<1x8x64xbf16, #tpu.memory_space<vmem>>, vector<1x8x8xbf16>
    %65 = vector.shape_cast %64 : vector<1x8x8xbf16> to vector<8x8xbf16>
    %cst_42 = arith.constant dense<0.000000e+00> : vector<8x8xf32>
    %66 = tpu.matmul %61, %63, %cst_42 {dimension_numbers = #tpu.dot_dimension_numbers<[1], [1], [0], [0], [0, 0, 1, 0], [], []>} : vector<8x8xbf16>, vector<8x8xbf16>, vector<8x8xf32> -> vector<8x8xf32>
    %cst_43 = arith.constant 0.353553385 : f32
    %67 = vector.broadcast %cst_43 : f32 to vector<8x8xf32>
    %68 = arith.mulf %66, %67 : vector<8x8xf32>
    %cst_44 = arith.constant dense<0xFF800000> : vector<8xf32>
    %69 = vector.multi_reduction <maximumf>, %68, %cst_44 [1] : vector<8x8xf32> to vector<8xf32>
    %70 = vector.shape_cast %69 : vector<8xf32> to vector<8x1xf32>
    %71 = vector.broadcast %70 : vector<8x1xf32> to vector<8x8xf32>
    %72 = arith.subf %68, %71 : vector<8x8xf32>
    %73 = math.exp %72 : vector<8x8xf32>
    %cst_45 = arith.constant dense<0.000000e+00> : vector<8xf32>
    %74 = vector.multi_reduction <add>, %73, %cst_45 [1] : vector<8x8xf32> to vector<8xf32>
    %75 = vector.shape_cast %74 : vector<8xf32> to vector<8x1xf32>
    %76 = vector.broadcast %75 : vector<8x1xf32> to vector<8x8xf32>
    %77 = arith.divf %73, %76 : vector<8x8xf32>
    %78 = arith.truncf %77 : vector<8x8xf32> to vector<8x8xbf16>
    %cst_46 = arith.constant dense<0.000000e+00> : vector<8x8xf32>
    %79 = tpu.matmul %78, %65, %cst_46 {dimension_numbers = #tpu.dot_dimension_numbers<[1], [0], [0], [1], [0, 0, 1, 1], [], []>} : vector<8x8xbf16>, vector<8x8xbf16>, vector<8x8xf32> -> vector<8x8xf32>
    %80 = tpu.concatenate %19, %39, %59, %79 in 1 : vector<8x8xf32>, vector<8x8xf32>, vector<8x8xf32>, vector<8x8xf32> -> vector<8x32xf32>
    %81 = arith.truncf %80 : vector<8x32xf32> to vector<8x32xbf16>
    %c0_47 = arith.constant 0 : index
    %c0_48 = arith.constant 0 : index
    %c0_49 = arith.constant 0 : index
    %82 = vector.load %arg3[%c0_47, %c0_48, %c0_49] : memref<1x8x32xbf16, #tpu.memory_space<vmem>>, vector<1x8x32xbf16>
    %83 = vector.shape_cast %82 : vector<1x8x32xbf16> to vector<8x32xbf16>
    %84 = vector.shape_cast %81 : vector<8x32xbf16> to vector<1x8x32xbf16>
    tpu.vector_store %arg3[%c0_47, %c0_48, %c0_49], %84 {strides = array<i32>} : memref<1x8x32xbf16, #tpu.memory_space<vmem>>, vector<1x8x32xbf16>,
    %85 = tpu.concatenate %17, %37, %57, %77 in 1 : vector<8x8xf32>, vector<8x8xf32>, vector<8x8xf32>, vector<8x8xf32> -> vector<8x32xf32>
    %c0_50 = arith.constant 0 : index
    %c0_51 = arith.constant 0 : index
    %c0_52 = arith.constant 0 : index
    %86 = vector.load %arg4[%c0_50, %c0_51, %c0_52] : memref<1x8x32xf32, #tpu.memory_space<vmem>>, vector<1x8x32xf32>
    %87 = vector.shape_cast %86 : vector<1x8x32xf32> to vector<8x32xf32>
    %88 = vector.shape_cast %85 : vector<8x32xf32> to vector<1x8x32xf32>
    tpu.vector_store %arg4[%c0_50, %c0_51, %c0_52], %88 {strides = array<i32>} : memref<1x8x32xf32, #tpu.memory_space<vmem>>, vector<1x8x32xf32>,
    return
  }
  func.func @transform_0(%arg0: i32) -> (i32, i32, i32) {
    %c0_i32 = arith.constant 0 : i32
    %c0_i32_0 = arith.constant 0 : i32
    %c0_i32_1 = arith.constant 0 : i32
    return %arg0, %c0_i32, %c0_i32_0 : i32, i32, i32
  }
  func.func @transform_1(%arg0: i32) -> (i32, i32, i32) {
    %c0_i32 = arith.constant 0 : i32
    %c0_i32_0 = arith.constant 0 : i32
    %c0_i32_1 = arith.constant 0 : i32
    return %arg0, %c0_i32, %c0_i32_0 : i32, i32, i32
  }
  func.func @transform_2(%arg0: i32) -> (i32, i32, i32) {
    %c0_i32 = arith.constant 0 : i32
    %c0_i32_0 = arith.constant 0 : i32
    %c0_i32_1 = arith.constant 0 : i32
    return %arg0, %c0_i32, %c0_i32_0 : i32, i32, i32
  }
  func.func @transform_3(%arg0: i32) -> (i32, i32, i32) {
    %c0_i32 = arith.constant 0 : i32
    %c0_i32_0 = arith.constant 0 : i32
    %c0_i32_1 = arith.constant 0 : i32
    return %arg0, %c0_i32, %c0_i32_0 : i32, i32, i32
  }
}

module attributes {stable_mosaic.version = 11 : i64} {
  func.func @_linear_kernel(%arg0: i32, %arg1: i32, %arg2: memref<16x32xbf16, #tpu.memory_space<vmem>>, %arg3: memref<32x128xbf16, #tpu.memory_space<vmem>>, %arg4: memref<1x128xf32, #tpu.memory_space<vmem>>, %arg5: memref<16x128xf32, #tpu.memory_space<vmem>>) attributes {dimension_semantics = [#tpu.dimension_semantics<parallel>, #tpu.dimension_semantics<parallel>], iteration_bounds = array<i64: 1, 1>, scalar_prefetch = 0 : i64, scratch_operands = 0 : i64, tpu.core_type = #tpu.core_type<tc>, window_params = [{transform_indices = @transform_0, window_bounds = array<i64: 16, 32>}, {pipeline_mode = #tpu.pipeline_mode<synchronous>, transform_indices = @transform_1, window_bounds = array<i64: 32, 128>}, {pipeline_mode = #tpu.pipeline_mode<synchronous>, transform_indices = @transform_2, window_bounds = array<i64: 1, 128>}, {transform_indices = @transform_3, window_bounds = array<i64: 16, 128>}]} {
    %c0 = arith.constant 0 : index
    %c0_0 = arith.constant 0 : index
    %0 = vector.load %arg2[%c0, %c0_0] : memref<16x32xbf16, #tpu.memory_space<vmem>>, vector<16x32xbf16>
    %1 = arith.extf %0 : vector<16x32xbf16> to vector<16x32xf32>
    %2 = arith.truncf %1 : vector<16x32xf32> to vector<16x32xbf16>
    %c0_1 = arith.constant 0 : index
    %c0_2 = arith.constant 0 : index
    %3 = vector.load %arg3[%c0_1, %c0_2] : memref<32x128xbf16, #tpu.memory_space<vmem>>, vector<32x128xbf16>
    %cst = arith.constant dense<0.000000e+00> : vector<16x128xf32>
    %4 = tpu.matmul %2, %3, %cst {dimension_numbers = #tpu.dot_dimension_numbers<[1], [0], [0], [1], [0, 0, 1, 1], [], []>} : vector<16x32xbf16>, vector<32x128xbf16>, vector<16x128xf32> -> vector<16x128xf32>
    %c0_3 = arith.constant 0 : index
    %c0_4 = arith.constant 0 : index
    %5 = vector.load %arg4[%c0_3, %c0_4] : memref<1x128xf32, #tpu.memory_space<vmem>>, vector<1x128xf32>
    %6 = vector.broadcast %5 : vector<1x128xf32> to vector<16x128xf32>
    %7 = arith.addf %4, %6 : vector<16x128xf32>
    %c0_5 = arith.constant 0 : index
    %c0_6 = arith.constant 0 : index
    %8 = vector.load %arg5[%c0_5, %c0_6] : memref<16x128xf32, #tpu.memory_space<vmem>>, vector<16x128xf32>
    tpu.vector_store %arg5[%c0_5, %c0_6], %7 {strides = array<i32>} : memref<16x128xf32, #tpu.memory_space<vmem>>, vector<16x128xf32>,
    return
  }
  func.func @transform_0(%arg0: i32, %arg1: i32) -> (i32, i32) {
    %c0_i32 = arith.constant 0 : i32
    %c0_i32_0 = arith.constant 0 : i32
    return %arg0, %c0_i32 : i32, i32
  }
  func.func @transform_1(%arg0: i32, %arg1: i32) -> (i32, i32) {
    %c0_i32 = arith.constant 0 : i32
    %c0_i32_0 = arith.constant 0 : i32
    %c0_i32_1 = arith.constant 0 : i32
    return %c0_i32, %c0_i32_0 : i32, i32
  }
  func.func @transform_2(%arg0: i32, %arg1: i32) -> (i32, i32) {
    %c0_i32 = arith.constant 0 : i32
    %c0_i32_0 = arith.constant 0 : i32
    %c0_i32_1 = arith.constant 0 : i32
    return %c0_i32, %c0_i32_0 : i32, i32
  }
  func.func @transform_3(%arg0: i32, %arg1: i32) -> (i32, i32) {
    %c0_i32 = arith.constant 0 : i32
    return %arg0, %arg1 : i32, i32
  }
}

</mosaic_0001>

<llo_original>
// kernel: tpu_custom_call.1
$region0: #{tpu_custom_call.1}
  #allocation0 [shape = 'u32[]', space=smem, size = 0x4, offset = 0x4, fixed_abs, tag = 'smem constant byte address 0x4 - core index']
  #allocation1 [shape = 'u32[72,128]{1,0:T(1,128)}', space=vmem, size = 0x9000, scoped, tag = 'internal scratch']
  %s0 = inlined_call_operand.hbm [shape: f32[8,128], index: 0, kind: input, shape index: {}]
  %s1 = inlined_call_operand.hbm [shape: f32[8,128], index: 1, kind: output, shape index: {}]
  %s2 = sld [smem:[#allocation0]]
  $region18: #{tpu_custom_call.1} parent=0
    _
  %s4 = ssub.s32 1, %s2
  %s5 = scalar_select 0, %s4, %s2
  $region1: #{tpu_custom_call.1} parent=0
    #allocation2 [shape = 'u8[4096]{0}', space=vmem, size = 0x1000, scoped, tag = 'input window, operand 0, single buffered']
    #allocation3 [shape = 's32[1]{0}', space=sflag, size = 0x4, scoped, tag = 'scoped memory for tpu_custom_call.1']
    #allocation4 [shape = 's32[1]{0}', space=sflag, size = 0x4, scoped, tag = 'scoped memory for tpu_custom_call.1']
    #allocation5 [shape = 'u8[4096]{0}', space=vmem, size = 0x1000, scoped, tag = 'output window, operand 0, single buffered']
    %6 = vsyncpa [#allocation3], 0
    %7 = vsyncpa [#allocation4], 0
    // Predicated region
    $region2: #{tpu_custom_call.1} parent=1 // pred_check
      _
    $region3: #{tpu_custom_call.1} parent=1 // pred_check_branch
      %9 = sbr.rel (0) target = $region5
    $region4: #{tpu_custom_call.1} parent=1 // pred_region
      %11 = vsyncadd [#allocation3], 0
      %s13 = sshll.u32 %s0, 4
      %s14 = int_to_ptr.hbm [resolvable:$true] %s13
      %s15 = sshll.u32 [#allocation2], 4
      %s16 = int_to_ptr.vmem [resolvable:$true] %s15
      %18 = dma.hbm_to_vmem [thread:$0]  %s14, 128, %s16, [#allocation3]
    $region5: #{tpu_custom_call.1} parent=1 // pred_fallthru
      _
    // Predicated region
    $region6: #{tpu_custom_call.1} parent=1 // pred_check
      _
    $region7: #{tpu_custom_call.1} parent=1 // pred_check_branch
      %20 = sbr.rel (0) target = $region9
    $region8: #{tpu_custom_call.1} parent=1 // pred_region
      %22 = dma.done [#allocation3], 128
    $region9: #{tpu_custom_call.1} parent=1 // pred_fallthru
      _
    %v23 = vld [vmem:[#allocation2] sm:$0xff]
    %24 = vst [vmem:[#allocation5] sm:$0xff] %v23
    // Predicated region
    $region10: #{tpu_custom_call.1} parent=1 // pred_check
      _
    $region11: #{tpu_custom_call.1} parent=1 // pred_check_branch
      %26 = sbr.rel (0) target = $region13
    $region12: #{tpu_custom_call.1} parent=1 // pred_region
      %28 = vsyncadd [#allocation4], 0
      %s30 = sshll.u32 [#allocation5], 4
      %s31 = int_to_ptr.vmem [resolvable:$true] %s30
      %s32 = sshll.u32 %s1, 4
      %s33 = int_to_ptr.hbm [resolvable:$true] %s32
      %35 = dma.vmem_to_hbm [thread:$0]  %s31, 128, %s33, [#allocation4]
    $region13: #{tpu_custom_call.1} parent=1 // pred_fallthru
      _
    // Predicated region
    $region14: #{tpu_custom_call.1} parent=1 // pred_check
      _
    $region15: #{tpu_custom_call.1} parent=1 // pred_check_branch
      %37 = sbr.rel (0) target = $region17
    $region16: #{tpu_custom_call.1} parent=1 // pred_region
      %39 = dma.done [#allocation4], 128
    $region17: #{tpu_custom_call.1} parent=1 // pred_fallthru
      _
    %40 = vsyncpa [#allocation3], 1
    %41 = vsyncpa [#allocation4], 1

// kernel: _lambda_.27
$region0: #{_lambda_.27}
  #allocation0 [shape = 'u32[]', space=smem, size = 0x4, offset = 0x4, fixed_abs, tag = 'smem constant byte address 0x4 - core index']
  #allocation1 [shape = 'u32[72,128]{1,0:T(1,128)}', space=vmem, size = 0x9000, scoped, tag = 'internal scratch']
  %s0 = inlined_call_operand.vmem [shape: f32[16,32], index: 0, kind: input, shape index: {}]
  %s1 = inlined_call_operand.vmem [shape: bf16[32,96], index: 1, kind: input, shape index: {}]
  %s2 = inlined_call_operand.vmem [shape: f32[1,96], index: 2, kind: input, shape index: {}]
  %s3 = inlined_call_operand.vmem [shape: bf16[16,96], index: 3, kind: output, shape index: {}]
  %s4 = sld [smem:[#allocation0]]
  $region22: #{_lambda_.27} parent=0
    _
  %s6 = ssub.s32 1, %s4
  %s7 = scalar_select 0, %s6, %s4
  // Predicated region
  $region2: #{_lambda_.27} parent=0 // pred_check
    _
  $region3: #{_lambda_.27} parent=0 // pred_check_branch
    %9 = sbr.rel (0) target = $region5
  $region4: #{_lambda_.27} parent=0 // pred_region
    _
  $region5: #{_lambda_.27} parent=0 // pred_fallthru
    _
  // Predicated region
  $region6: #{_lambda_.27} parent=0 // pred_check
    _
  $region7: #{_lambda_.27} parent=0 // pred_check_branch
    %11 = sbr.rel (0) target = $region9
  $region8: #{_lambda_.27} parent=0 // pred_region
    _
  $region9: #{_lambda_.27} parent=0 // pred_fallthru
    _
  // Predicated region
  $region10: #{_lambda_.27} parent=0 // pred_check
    _
  $region11: #{_lambda_.27} parent=0 // pred_check_branch
    %13 = sbr.rel (0) target = $region13
  $region12: #{_lambda_.27} parent=0 // pred_region
    _
  $region13: #{_lambda_.27} parent=0 // pred_fallthru
    _
  %v15 = vld [vmem:[%s0] sm:$0xff]
  %v16 = vld [vmem:[%s0 + $0x8] sm:$0xff]
  %v17 = vpack.c.bf16 %v16, %v15
  %v18 = vld [vmem:[%s1] sm:$0xf]
  %v19 = vld [vmem:[%s1 + $0x4] sm:$0xf]
  %v20 = vld [vmem:[%s1 + $0x8] sm:$0xf]
  %v21 = vld [vmem:[%s1 + $0xc] sm:$0xf]
  %v22 = vld [vmem:[%s2] sm:$0x1]
  %v24 = vperm.slane %v22, 0
  %v30 = vunpack.c.l.b16 %v18
  %v31 = vunpack.c.l.b16 %v19
  %v32 = vunpack.c.l.b16 %v20
  %v33 = vunpack.c.l.b16 %v21
  %v34 = vpack.c.b16 %v31, %v30
  %v35 = vpack.c.b16 %v33, %v32
  %vm38 = vcmask 261120
  %v40 = vsel %vm38, %v17, 0
  %42 = vmatpush.bf16.msra.mxu0 0
  %43 = vmatpush.bf16.msra.mxu0 0
  %44 = vmatpush.bf16.msra.mxu0 0
  %45 = vmatpush.bf16.msra.mxu0 0
  %46 = vmatpush.bf16.msra.mxu0 0
  %47 = vmatpush.bf16.msra.mxu0 0
  %48 = vmatpush.bf16.msra.mxu0 %v35
  %49 = vmatpush.bf16.msra.mxu0 %v34
  %50 = vmatmul.bf16.gmra.mxu0 %v40
  %v51 = vpop.f32.mrf.mxu0
  %v52 = vadd.f32 %v24, %v51
  %v53 = vpop.f32.mrf.mxu0
  %v54 = vadd.f32 %v24, %v53
  %55 = vdwg.mxu0
  %v56 = vpack.c.bf16 %v52, %v52
  %v57 = vpack.c.bf16 %v54, %v54
  %vm58 = vcmask 781312
  %59 = vst.msk [vmem:[%s3] sm:$0xf] %vm58, %v56
  %60 = vst.msk [vmem:[%s3 + $0x4] sm:$0xf] %vm58, %v57
  // Predicated region
  $region14: #{_lambda_.27} parent=0 // pred_check
    _
  $region15: #{_lambda_.27} parent=0 // pred_check_branch
    %62 = sbr.rel (0) target = $region17
  $region16: #{_lambda_.27} parent=0 // pred_region
    _
  $region17: #{_lambda_.27} parent=0 // pred_fallthru
    _
  // Predicated region
  $region18: #{_lambda_.27} parent=0 // pred_check
    _
  $region19: #{_lambda_.27} parent=0 // pred_check_branch
    %64 = sbr.rel (0) target = $region21
  $region20: #{_lambda_.27} parent=0 // pred_region
    _
  $region21: #{_lambda_.27} parent=0 // pred_fallthru
    _

// kernel: _lambda_.28
$region0: #{_lambda_.28}
  #allocation0 [shape = 'u32[]', space=smem, size = 0x4, offset = 0x4, fixed_abs, tag = 'smem constant byte address 0x4 - core index']
  #allocation1 [shape = 'u32[72,128]{1,0:T(1,128)}', space=vmem, size = 0x9000, scoped, tag = 'internal scratch']
  %s0 = inlined_call_operand.vmem [shape: bf16[2,8,96], index: 0, kind: input, shape index: {}]
  %s1 = inlined_call_operand.vmem [shape: bf16[2,8,32], index: 1, kind: output, shape index: {0}]
  %s2 = inlined_call_operand.vmem [shape: f32[2,8,32], index: 2, kind: output, shape index: {1}]
  %3 = xla_tuple %s1, %s2
  %s4 = sld [smem:[#allocation0]]
  $region45: #{_lambda_.28} parent=0
    _
  %s6 = ssub.s32 1, %s4
  %s7 = scalar_select 0, %s6, %s4
  loop: start=0, step=1, limit=4
  $region2: #{_lambda_.28} parent=0 // loop_pre_header
    _
  $region3: #{_lambda_.28} parent=0 // loop_header
    %s9 = sphi 0, %s13
    %p10 = scmp.ge.s32.totalorder %s9, 4
    %s19 = sphi 0, %s21
    %s22 = sphi 0, %s19
    %s23 = sphi 0, %s22
    %s39 = sphi 0, %s23
    %s45 = sphi 0, %s47
    %s48 = sphi 0, %s45
    %s49 = sphi 0, %s48
    %s65 = sphi 0, %s49
    %s71 = sphi 0, %s73
    %s74 = sphi 0, %s71
    %s75 = sphi 0, %s74
    %s91 = sphi 0, %s75
  $region4: #{_lambda_.28} parent=0 // loop_header_branch
    %12 = sbr.rel (%p10) target = $region8
  $region5: #{_lambda_.28} parent=0 // loop_body
    %s14 = ssub.s32 %s9, 1
    %s15 = ssub.s32 %s9, 2
    %s16 = sadd.s32 %s9, 1
    %s17 = ssub.s32 %s9, %s16
    %p18 = scmp.eq.s32.totalorder %s17, 0
    %s20 = sadd.s32 %s19, 1
    %s21 = scalar_select %p18, %s19, %s20
    %p24 = pneg %p18
    %p25 = scmp.eq.s32.totalorder %s9, 1
    %p26 = por %p24, %p25
    %p27 = scmp.ne.s32.totalorder %s19, %s22
    %p28 = scmp.eq.s32.totalorder %s9, 0
    %p29 = por %p27, %p28
    %p30 = scmp.ne.s32.totalorder %s19, %s22
    %p31 = scmp.eq.s32.totalorder %s14, 1
    %p32 = por %p30, %p31
    %p33 = scmp.ne.s32.totalorder %s22, %s23
    %p34 = scmp.eq.s32.totalorder %s14, 0
    %p35 = por %p33, %p34
    %p36 = scmp.ne.s32.totalorder %s22, %s23
    %p37 = scmp.eq.s32.totalorder %s15, 1
    %p38 = por %p36, %p37
    %p40 = scmp.ne.s32.totalorder %s23, %s39
    %p41 = scmp.eq.s32.totalorder %s15, 0
    %p42 = por %p40, %p41
    %s43 = ssub.s32 %s9, %s16
    %p44 = scmp.eq.s32.totalorder %s43, 0
    %s46 = sadd.s32 %s45, 1
    %s47 = scalar_select %p44, %s45, %s46
    %p50 = pneg %p44
    %p51 = scmp.eq.s32.totalorder %s9, 1
    %p52 = por %p50, %p51
    %p53 = scmp.ne.s32.totalorder %s45, %s48
    %p54 = scmp.eq.s32.totalorder %s9, 0
    %p55 = por %p53, %p54
    %p56 = scmp.ne.s32.totalorder %s45, %s48
    %p57 = scmp.eq.s32.totalorder %s14, 1
    %p58 = por %p56, %p57
    %p59 = scmp.ne.s32.totalorder %s48, %s49
    %p60 = scmp.eq.s32.totalorder %s14, 0
    %p61 = por %p59, %p60
    %p62 = scmp.ne.s32.totalorder %s48, %s49
    %p63 = scmp.eq.s32.totalorder %s15, 1
    %p64 = por %p62, %p63
    %p66 = scmp.ne.s32.totalorder %s49, %s65
    %p67 = scmp.eq.s32.totalorder %s15, 0
    %p68 = por %p66, %p67
    %s69 = ssub.s32 %s9, %s16
    %p70 = scmp.eq.s32.totalorder %s69, 0
    %s72 = sadd.s32 %s71, 1
    %s73 = scalar_select %p70, %s71, %s72
    %p76 = pneg %p70
    %p77 = scmp.eq.s32.totalorder %s9, 1
    %p78 = por %p76, %p77
    %p79 = scmp.ne.s32.totalorder %s71, %s74
    %p80 = scmp.eq.s32.totalorder %s9, 0
    %p81 = por %p79, %p80
    %p82 = scmp.ne.s32.totalorder %s71, %s74
    %p83 = scmp.eq.s32.totalorder %s14, 1
    %p84 = por %p82, %p83
    %p85 = scmp.ne.s32.totalorder %s74, %s75
    %p86 = scmp.eq.s32.totalorder %s14, 0
    %p87 = por %p85, %p86
    %p88 = scmp.ne.s32.totalorder %s74, %s75
    %p89 = scmp.eq.s32.totalorder %s15, 1
    %p90 = por %p88, %p89
    %p92 = scmp.ne.s32.totalorder %s75, %s91
    %p93 = scmp.eq.s32.totalorder %s15, 0
    %p94 = por %p92, %p93
    %p95 = scmp.le.s32.totalorder 1, %s9
    %p96 = scmp.lt.s32.totalorder %s9, 3
    %p97 = pnand %p95, %p96
    %p98 = pneg %p97
    // Predicated region
    $region9: #{_lambda_.28} parent=5 // pred_check
      _
    $region10: #{_lambda_.28} parent=5 // pred_check_branch
      %100 = sbr.rel (%p97) target = $region12
    $region11: #{_lambda_.28} parent=5 // pred_region
      %s101 = ssub.s32 %s9, 1
    $region12: #{_lambda_.28} parent=5 // pred_fallthru
      _
    %p102 = scmp.lt.s32.totalorder %s9, 2
    // Predicated region
    $region13: #{_lambda_.28} parent=5 // pred_check
      %p103 = pneg %p102
    $region14: #{_lambda_.28} parent=5 // pred_check_branch
      %105 = sbr.rel (%p103) target = $region16
    $region15: #{_lambda_.28} parent=5 // pred_region
      // Predicated region
      $region17: #{_lambda_.28} parent=15 // pred_check
        %p106 = pneg %p29
      $region18: #{_lambda_.28} parent=15 // pred_check_branch
        %108 = sbr.rel (%p106) target = $region20
      $region19: #{_lambda_.28} parent=15 // pred_region
        %p109 = scmp.lt.s32.totalorder %s9, 1
        %s110 = scalar_select %p109, %s9, 1
        %s111 = smul.addr %s110, 4
        %s112 = scalar_lea.vmem %s0, %s111
      $region20: #{_lambda_.28} parent=15 // pred_fallthru
        _
    $region16: #{_lambda_.28} parent=5 // pred_fallthru
      _
    %p113 = scmp.le.s32.totalorder 1, %s9
    %p114 = scmp.lt.s32.totalorder %s9, 3
    %p115 = pnand %p113, %p114
    %p116 = pneg %p115
    // Predicated region
    $region21: #{_lambda_.28} parent=5 // pred_check
      _
    $region22: #{_lambda_.28} parent=5 // pred_check_branch
      %118 = sbr.rel (%p115) target = $region24
    $region23: #{_lambda_.28} parent=5 // pred_region
      %s119 = ssub.s32 %s9, 1
      %p120 = scmp.lt.s32.totalorder %s14, 1
      %s121 = scalar_select %p120, %s14, 1
      %s122 = smul.addr %s121, 4
      %s123 = scalar_lea.vmem %s0, %s122
      %p124 = pneg %p35
      %p125 = pneg %p32
      %p126 = pneg %p61
      %p127 = pneg %p58
      %p128 = scmp.lt.s32.totalorder %s14, 1
      %s129 = scalar_select %p128, %s14, 1
      %s130 = smul.addr %s129, 4
      %s131 = scalar_lea.vmem %s1, %s130
      %p132 = pneg %p87
      %p133 = pneg %p84
      %p134 = scmp.lt.s32.totalorder %s14, 1
      %s135 = scalar_select %p134, %s14, 1
      %s136 = smul.addr %s135, 8
      %s137 = scalar_lea.vmem %s2, %s136
      %p138 = scmp.lt.s32.totalorder %s14, 1
      %s139 = scalar_select %p138, %s14, 1
      %s140 = smul.addr %s139, 4
      %s141 = scalar_lea.vmem %s0, %s140
      %p142 = scmp.lt.s32.totalorder %s14, 1
      %s143 = scalar_select %p142, %s14, 1
      %s144 = smul.addr %s143, 4
      %s145 = scalar_lea.vmem %s1, %s144
      %p146 = scmp.lt.s32.totalorder %s14, 1
      %s147 = scalar_select %p146, %s14, 1
      %s148 = smul.addr %s147, 8
      %s149 = scalar_lea.vmem %s2, %s148
      %v151 = vld [vmem:[%s141] sm:$0xf]
      %v153 = vunpack.c.l.b16 %v151
      %v154 = vpack.c.b16 %v153, %v153
      %155 = vrot.lane.b32.xlu0 %v154, 96
      %v156 = vpop.permute.xlu0 %155
      %vm157 = vcmask 64512
      %v159 = vsel %vm157, %v151, 0
      %v162 = vsel %vm157, %v156, 0
      %164 = vmatpush.bf16.xpose.msra.mxu0 0
      %165 = vmatpush.bf16.xpose.msra.mxu0 0
      %166 = vmatpush.bf16.xpose.msra.mxu0 0
      %167 = vmatpush.bf16.xpose.msra.mxu0 0
      %168 = vmatpush.bf16.xpose.msra.mxu0 0
      %169 = vmatpush.bf16.xpose.msra.mxu0 0
      %170 = vmatpush.bf16.xpose.msra.mxu0 0
      %171 = vmatpush.bf16.xpose.msra.mxu0 %v162
      %172 = vmatmul.bf16.gmra.mxu0 %v159
      %v173 = vpop.f32.mrf.mxu0
      %v174 = vadd.f32 0.0, %v173
      %v175 = vpop.f32.mrf.mxu0
      %176 = vdwg.mxu0
      %v177 = vmul.f32 %v174, 0.35355338
      %v178 = vsel %vm157, %v177, -inf
      %179 = vmax.xlane.f32.xlu0 %v178
      %v180 = vpop.xlane.xlu0 %179
      %v181 = vsub.f32 %v177, %v180
      %v182 = vmul.f32 %v181, 1.442695
      %v183 = vpow.pop %v182
      %v184 = vsel %vm157, %v183, 0.0
      %185 = vadd.xlane.f32.xlu0 %v184
      %v186 = vpop.xlane.xlu0 %185
      %v187 = vrcp.pop %v186
      %v188 = vmul.f32 %v186, %v187
      %v189 = vsub.f32 1.0, %v188
      %v190 = vmul.f32 %v187, %v189
      %v191 = vadd.f32 %v187, %v190
      %vm192 = vweird.f32 %v186
      %vm193 = vweird.f32 %v187
      %vm194 = vmor %vm192, %vm193
      %v195 = vsel %vm194, %v187, %v191
      %v196 = vand.u32 2147483647, %v186
      %vm197 = vcmp.eq.f32.partialorder %v196, 8.507059e+37
      %v198 = vand.u32 %v186, 2147483648
      %v199 = vor.u32 1.1754944e-38, %v198
      %v200 = vsel %vm197, %v199, %v195
      %v201 = vmul.f32 %v183, %v200
      %v202 = vpack.c.bf16 %v201, %v201
      %203 = vrot.lane.b32.xlu0 %v154, 64
      %v204 = vpop.permute.xlu0 %203
      %v206 = vsel %vm157, %v202, 0
      %vm208 = vcmask 1043456
      %v210 = vsel %vm208, %v204, 0
      %212 = vmatpush.bf16.msra.mxu0 0
      %213 = vmatpush.bf16.msra.mxu0 0
      %214 = vmatpush.bf16.msra.mxu0 0
      %215 = vmatpush.bf16.msra.mxu0 0
      %216 = vmatpush.bf16.msra.mxu0 0
      %217 = vmatpush.bf16.msra.mxu0 0
      %218 = vmatpush.bf16.msra.mxu0 0
      %219 = vmatpush.bf16.msra.mxu0 %v210
      %220 = vmatmul.bf16.gmra.mxu0 %v206
      %v221 = vpop.f32.mrf.mxu0
      %v222 = vadd.f32 0.0, %v221
      %v223 = vpop.f32.mrf.mxu0
      %224 = vdwg.mxu0
      %225 = vrot.lane.b32.xlu0 %v154, 120
      %v226 = vpop.permute.xlu0 %225
      %227 = vrot.lane.b32.xlu0 %v154, 88
      %v228 = vpop.permute.xlu0 %227
      %v230 = vsel %vm157, %v226, 0
      %v233 = vsel %vm157, %v228, 0
      %235 = vmatpush.bf16.xpose.msra.mxu0 0
      %236 = vmatpush.bf16.xpose.msra.mxu0 0
      %237 = vmatpush.bf16.xpose.msra.mxu0 0
      %238 = vmatpush.bf16.xpose.msra.mxu0 0
      %239 = vmatpush.bf16.xpose.msra.mxu0 0
      %240 = vmatpush.bf16.xpose.msra.mxu0 0
      %241 = vmatpush.bf16.xpose.msra.mxu0 0
      %242 = vmatpush.bf16.xpose.msra.mxu0 %v233
      %243 = vmatmul.bf16.gmra.mxu0 %v230
      %v244 = vpop.f32.mrf.mxu0
      %v245 = vadd.f32 0.0, %v244
      %v246 = vpop.f32.mrf.mxu0
      %247 = vdwg.mxu0
      %v248 = vmul.f32 %v245, 0.35355338
      %v249 = vsel %vm157, %v248, -inf
      %250 = vmax.xlane.f32.xlu0 %v249
      %v251 = vpop.xlane.xlu0 %250
      %v252 = vsub.f32 %v248, %v251
      %v253 = vmul.f32 %v252, 1.442695
      %v254 = vpow.pop %v253
      %v255 = vsel %vm157, %v254, 0.0
      %256 = vadd.xlane.f32.xlu0 %v255
      %v257 = vpop.xlane.xlu0 %256
      %v258 = vrcp.pop %v257
      %v259 = vmul.f32 %v257, %v258
      %v260 = vsub.f32 1.0, %v259
      %v261 = vmul.f32 %v258, %v260
      %v262 = vadd.f32 %v258, %v261
      %vm263 = vweird.f32 %v257
      %vm264 = vweird.f32 %v258
      %vm265 = vmor %vm263, %vm264
      %v266 = vsel %vm265, %v258, %v262
      %v267 = vand.u32 2147483647, %v257
      %vm268 = vcmp.eq.f32.partialorder %v267, 8.507059e+37
      %v269 = vand.u32 %v257, 2147483648
      %v270 = vor.u32 1.1754944e-38, %v269
      %v271 = vsel %vm268, %v270, %v266
      %v272 = vmul.f32 %v254, %v271
      %v273 = vpack.c.bf16 %v272, %v272
      %274 = vrot.lane.b32.xlu0 %v154, 56
      %v275 = vpop.permute.xlu0 %274
      %v277 = vsel %vm157, %v273, 0
      %v280 = vsel %vm208, %v275, 0
      %282 = vmatpush.bf16.msra.mxu0 0
      %283 = vmatpush.bf16.msra.mxu0 0
      %284 = vmatpush.bf16.msra.mxu0 0
      %285 = vmatpush.bf16.msra.mxu0 0
      %286 = vmatpush.bf16.msra.mxu0 0
      %287 = vmatpush.bf16.msra.mxu0 0
      %288 = vmatpush.bf16.msra.mxu0 0
      %289 = vmatpush.bf16.msra.mxu0 %v280
      %290 = vmatmul.bf16.gmra.mxu0 %v277
      %v291 = vpop.f32.mrf.mxu0
      %v292 = vadd.f32 0.0, %v291
      %v293 = vpop.f32.mrf.mxu0
      %294 = vdwg.mxu0
      %295 = vrot.lane.b32.xlu0 %v154, 112
      %v296 = vpop.permute.xlu0 %295
      %297 = vrot.lane.b32.xlu0 %v154, 80
      %v298 = vpop.permute.xlu0 %297
      %v300 = vsel %vm157, %v296, 0
      %v303 = vsel %vm157, %v298, 0
      %305 = vmatpush.bf16.xpose.msra.mxu0 0
      %306 = vmatpush.bf16.xpose.msra.mxu0 0
      %307 = vmatpush.bf16.xpose.msra.mxu0 0
      %308 = vmatpush.bf16.xpose.msra.mxu0 0
      %309 = vmatpush.bf16.xpose.msra.mxu0 0
      %310 = vmatpush.bf16.xpose.msra.mxu0 0
      %311 = vmatpush.bf16.xpose.msra.mxu0 0
      %312 = vmatpush.bf16.xpose.msra.mxu0 %v303
      %313 = vmatmul.bf16.gmra.mxu0 %v300
      %v314 = vpop.f32.mrf.mxu0
      %v315 = vadd.f32 0.0, %v314
      %v316 = vpop.f32.mrf.mxu0
      %317 = vdwg.mxu0
      %v318 = vmul.f32 %v315, 0.35355338
      %v319 = vsel %vm157, %v318, -inf
      %320 = vmax.xlane.f32.xlu0 %v319
      %v321 = vpop.xlane.xlu0 %320
      %v322 = vsub.f32 %v318, %v321
      %v323 = vmul.f32 %v322, 1.442695
      %v324 = vpow.pop %v323
      %v325 = vsel %vm157, %v324, 0.0
      %326 = vadd.xlane.f32.xlu0 %v325
      %v327 = vpop.xlane.xlu0 %326
      %v328 = vrcp.pop %v327
      %v329 = vmul.f32 %v327, %v328
      %v330 = vsub.f32 1.0, %v329
      %v331 = vmul.f32 %v328, %v330
      %v332 = vadd.f32 %v328, %v331
      %vm333 = vweird.f32 %v327
      %vm334 = vweird.f32 %v328
      %vm335 = vmor %vm333, %vm334
      %v336 = vsel %vm335, %v328, %v332
      %v337 = vand.u32 2147483647, %v327
      %vm338 = vcmp.eq.f32.partialorder %v337, 8.507059e+37
      %v339 = vand.u32 %v327, 2147483648
      %v340 = vor.u32 1.1754944e-38, %v339
      %v341 = vsel %vm338, %v340, %v336
      %v342 = vmul.f32 %v324, %v341
      %v343 = vpack.c.bf16 %v342, %v342
      %344 = vrot.lane.b32.xlu0 %v154, 48
      %v345 = vpop.permute.xlu0 %344
      %v347 = vsel %vm157, %v343, 0
      %v350 = vsel %vm208, %v345, 0
      %352 = vmatpush.bf16.msra.mxu0 0
      %353 = vmatpush.bf16.msra.mxu0 0
      %354 = vmatpush.bf16.msra.mxu0 0
      %355 = vmatpush.bf16.msra.mxu0 0
      %356 = vmatpush.bf16.msra.mxu0 0
      %357 = vmatpush.bf16.msra.mxu0 0
      %358 = vmatpush.bf16.msra.mxu0 0
      %359 = vmatpush.bf16.msra.mxu0 %v350
      %360 = vmatmul.bf16.gmra.mxu0 %v347
      %v361 = vpop.f32.mrf.mxu0
      %v362 = vadd.f32 0.0, %v361
      %v363 = vpop.f32.mrf.mxu0
      %364 = vdwg.mxu0
      %365 = vrot.lane.b32.xlu0 %v154, 104
      %v366 = vpop.permute.xlu0 %365
      %367 = vrot.lane.b32.xlu0 %v154, 72
      %v368 = vpop.permute.xlu0 %367
      %v370 = vsel %vm157, %v366, 0
      %v373 = vsel %vm157, %v368, 0
      %375 = vmatpush.bf16.xpose.msra.mxu0 0
      %376 = vmatpush.bf16.xpose.msra.mxu0 0
      %377 = vmatpush.bf16.xpose.msra.mxu0 0
      %378 = vmatpush.bf16.xpose.msra.mxu0 0
      %379 = vmatpush.bf16.xpose.msra.mxu0 0
      %380 = vmatpush.bf16.xpose.msra.mxu0 0
      %381 = vmatpush.bf16.xpose.msra.mxu0 0
      %382 = vmatpush.bf16.xpose.msra.mxu0 %v373
      %383 = vmatmul.bf16.gmra.mxu0 %v370
      %v384 = vpop.f32.mrf.mxu0
      %v385 = vadd.f32 0.0, %v384
      %v386 = vpop.f32.mrf.mxu0
      %387 = vdwg.mxu0
      %v388 = vmul.f32 %v385, 0.35355338
      %v389 = vsel %vm157, %v388, -inf
      %390 = vmax.xlane.f32.xlu0 %v389
      %v391 = vpop.xlane.xlu0 %390
      %v392 = vsub.f32 %v388, %v391
      %v393 = vmul.f32 %v392, 1.442695
      %v394 = vpow.pop %v393
      %v395 = vsel %vm157, %v394, 0.0
      %396 = vadd.xlane.f32.xlu0 %v395
      %v397 = vpop.xlane.xlu0 %396
      %v398 = vrcp.pop %v397
      %v399 = vmul.f32 %v397, %v398
      %v400 = vsub.f32 1.0, %v399
      %v401 = vmul.f32 %v398, %v400
      %v402 = vadd.f32 %v398, %v401
      %vm403 = vweird.f32 %v397
      %vm404 = vweird.f32 %v398
      %vm405 = vmor %vm403, %vm404
      %v406 = vsel %vm405, %v398, %v402
      %v407 = vand.u32 2147483647, %v397
      %vm408 = vcmp.eq.f32.partialorder %v407, 8.507059e+37
      %v409 = vand.u32 %v397, 2147483648
      %v410 = vor.u32 1.1754944e-38, %v409
      %v411 = vsel %vm408, %v410, %v406
      %v412 = vmul.f32 %v394, %v411
      %v413 = vpack.c.bf16 %v412, %v412
      %414 = vrot.lane.b32.xlu0 %v154, 40
      %v415 = vpop.permute.xlu0 %414
      %v417 = vsel %vm157, %v413, 0
      %v420 = vsel %vm208, %v415, 0
      %422 = vmatpush.bf16.msra.mxu0 0
      %423 = vmatpush.bf16.msra.mxu0 0
      %424 = vmatpush.bf16.msra.mxu0 0
      %425 = vmatpush.bf16.msra.mxu0 0
      %426 = vmatpush.bf16.msra.mxu0 0
      %427 = vmatpush.bf16.msra.mxu0 0
      %428 = vmatpush.bf16.msra.mxu0 0
      %429 = vmatpush.bf16.msra.mxu0 %v420
      %430 = vmatmul.bf16.gmra.mxu0 %v417
      %v431 = vpop.f32.mrf.mxu0
      %v432 = vadd.f32 0.0, %v431
      %v433 = vpop.f32.mrf.mxu0
      %434 = vdwg.mxu0
      %436 = vrot.lane.b32.xlu0 %v292, 8
      %v437 = vpop.permute.xlu0 %436
      %440 = vrot.lane.b32.xlu0 %v362, 16
      %v441 = vpop.permute.xlu0 %440
      %444 = vrot.lane.b32.xlu0 %v432, 24
      %v445 = vpop.permute.xlu0 %444
      %v447 = vsel %vm157, %v222, %v437
      %vm448 = vcmask 130048
      %v449 = vsel %vm448, %v447, %v441
      %vm450 = vcmask 195584
      %v451 = vsel %vm450, %v449, %v445
      %v452 = vpack.c.bf16 %v451, %v451
      %vm453 = vcmask 257024
      %454 = vst.msk [vmem:[%s145] sm:$0xf] %vm453, %v452
      %456 = vrot.lane.b32.xlu0 %v272, 8
      %v457 = vpop.permute.xlu0 %456
      %460 = vrot.lane.b32.xlu0 %v342, 16
      %v461 = vpop.permute.xlu0 %460
      %464 = vrot.lane.b32.xlu0 %v412, 24
      %v465 = vpop.permute.xlu0 %464
      %v467 = vsel %vm157, %v201, %v457
      %v468 = vsel %vm448, %v467, %v461
      %v469 = vsel %vm450, %v468, %v465
      %vm470 = vcmask 261120
      %471 = vst.msk [vmem:[%s149] sm:$0xff] %vm470, %v469
      %p472 = scmp.lt.s32.totalorder %s14, 1
      %s473 = scalar_select %p472, %s14, 1
      %s474 = smul.addr %s473, 4
      %s475 = scalar_lea.vmem %s1, %s474
      %p476 = scmp.lt.s32.totalorder %s14, 1
      %s477 = scalar_select %p476, %s14, 1
      %s478 = smul.addr %s477, 8
      %s479 = scalar_lea.vmem %s2, %s478
      // Predicated region
      $region25: #{_lambda_.28} parent=23 // pred_check
        %p480 = pneg %p58
      $region26: #{_lambda_.28} parent=23 // pred_check_branch
        %482 = sbr.rel (%p480) target = $region28
      $region27: #{_lambda_.28} parent=23 // pred_region
        _
      $region28: #{_lambda_.28} parent=23 // pred_fallthru
        _
      // Predicated region
      $region29: #{_lambda_.28} parent=23 // pred_check
        %p483 = pneg %p84
      $region30: #{_lambda_.28} parent=23 // pred_check_branch
        %485 = sbr.rel (%p483) target = $region32
      $region31: #{_lambda_.28} parent=23 // pred_region
        _
      $region32: #{_lambda_.28} parent=23 // pred_fallthru
        _
    $region24: #{_lambda_.28} parent=5 // pred_fallthru
      _
    %p486 = scmp.le.s32.totalorder 2, %s9
    // Predicated region
    $region33: #{_lambda_.28} parent=5 // pred_check
      %p487 = pneg %p486
    $region34: #{_lambda_.28} parent=5 // pred_check_branch
      %489 = sbr.rel (%p487) target = $region36
    $region35: #{_lambda_.28} parent=5 // pred_region
      %s490 = ssub.s32 %s9, 2
      // Predicated region
      $region37: #{_lambda_.28} parent=35 // pred_check
        %p491 = pneg %p64
      $region38: #{_lambda_.28} parent=35 // pred_check_branch
        %493 = sbr.rel (%p491) target = $region40
      $region39: #{_lambda_.28} parent=35 // pred_region
        %p494 = scmp.lt.s32.totalorder %s15, 1
        %s495 = scalar_select %p494, %s15, 1
        %s496 = smul.addr %s495, 4
        %s497 = scalar_lea.vmem %s1, %s496
      $region40: #{_lambda_.28} parent=35 // pred_fallthru
        _
      // Predicated region
      $region41: #{_lambda_.28} parent=35 // pred_check
        %p498 = pneg %p90
      $region42: #{_lambda_.28} parent=35 // pred_check_branch
        %500 = sbr.rel (%p498) target = $region44
      $region43: #{_lambda_.28} parent=35 // pred_region
        %p501 = scmp.lt.s32.totalorder %s15, 1
        %s502 = scalar_select %p501, %s15, 1
        %s503 = smul.addr %s502, 8
        %s504 = scalar_lea.vmem %s2, %s503
      $region44: #{_lambda_.28} parent=35 // pred_fallthru
        _
    $region36: #{_lambda_.28} parent=5 // pred_fallthru
      _
  $region6: #{_lambda_.28} parent=0 // loop_footer
    %s13 = sadd.s32 1, %s9
  $region7: #{_lambda_.28} parent=0 // loop_footer_branch
    %8 = sbr.rel target = $region3
  $region8: #{_lambda_.28} parent=0 // loop_exit
    _

// kernel: _lambda_.29
$region0: #{_lambda_.29}
  #allocation0 [shape = 'u32[]', space=smem, size = 0x4, offset = 0x4, fixed_abs, tag = 'smem constant byte address 0x4 - core index']
  #allocation1 [shape = 'u32[72,128]{1,0:T(1,128)}', space=vmem, size = 0x9000, scoped, tag = 'internal scratch']
  %s0 = inlined_call_operand.vmem [shape: bf16[16,32], index: 0, kind: input, shape index: {}]
  %s1 = inlined_call_operand.vmem [shape: bf16[32,32], index: 1, kind: input, shape index: {}]
  %s2 = inlined_call_operand.vmem [shape: f32[1,32], index: 2, kind: input, shape index: {}]
  %s3 = inlined_call_operand.vmem [shape: f32[16,32], index: 3, kind: input, shape index: {}]
  %s4 = inlined_call_operand.vmem [shape: f32[1,32], index: 4, kind: input, shape index: {}]
  %s5 = inlined_call_operand.vmem [shape: f32[1,32], index: 5, kind: input, shape index: {}]
  %s6 = inlined_call_operand.vmem [shape: bf16[16,32], index: 6, kind: output, shape index: {}]
  %s7 = sld [smem:[#allocation0]]
  $region34: #{_lambda_.29} parent=0
    _
  %s9 = ssub.s32 1, %s7
  %s10 = scalar_select 0, %s9, %s7
  // Predicated region
  $region2: #{_lambda_.29} parent=0 // pred_check
    _
  $region3: #{_lambda_.29} parent=0 // pred_check_branch
    %12 = sbr.rel (0) target = $region5
  $region4: #{_lambda_.29} parent=0 // pred_region
    _
  $region5: #{_lambda_.29} parent=0 // pred_fallthru
    _
  // Predicated region
  $region6: #{_lambda_.29} parent=0 // pred_check
    _
  $region7: #{_lambda_.29} parent=0 // pred_check_branch
    %14 = sbr.rel (0) target = $region9
  $region8: #{_lambda_.29} parent=0 // pred_region
    _
  $region9: #{_lambda_.29} parent=0 // pred_fallthru
    _
  // Predicated region
  $region10: #{_lambda_.29} parent=0 // pred_check
    _
  $region11: #{_lambda_.29} parent=0 // pred_check_branch
    %16 = sbr.rel (0) target = $region13
  $region12: #{_lambda_.29} parent=0 // pred_region
    _
  $region13: #{_lambda_.29} parent=0 // pred_fallthru
    _
  // Predicated region
  $region14: #{_lambda_.29} parent=0 // pred_check
    _
  $region15: #{_lambda_.29} parent=0 // pred_check_branch
    %18 = sbr.rel (0) target = $region17
  $region16: #{_lambda_.29} parent=0 // pred_region
    _
  $region17: #{_lambda_.29} parent=0 // pred_fallthru
    _
  // Predicated region
  $region18: #{_lambda_.29} parent=0 // pred_check
    _
  $region19: #{_lambda_.29} parent=0 // pred_check_branch
    %20 = sbr.rel (0) target = $region21
  $region20: #{_lambda_.29} parent=0 // pred_region
    _
  $region21: #{_lambda_.29} parent=0 // pred_fallthru
    _
  // Predicated region
  $region22: #{_lambda_.29} parent=0 // pred_check
    _
  $region23: #{_lambda_.29} parent=0 // pred_check_branch
    %22 = sbr.rel (0) target = $region25
  $region24: #{_lambda_.29} parent=0 // pred_region
    _
  $region25: #{_lambda_.29} parent=0 // pred_fallthru
    _
  %v24 = vld [vmem:[%s0] sm:$0xf]
  %v25 = vld [vmem:[%s0 + $0x4] sm:$0xf]
  %v26 = vld [vmem:[%s1] sm:$0xf]
  %v27 = vld [vmem:[%s1 + $0x4] sm:$0xf]
  %v28 = vld [vmem:[%s1 + $0x8] sm:$0xf]
  %v29 = vld [vmem:[%s1 + $0xc] sm:$0xf]
  %v30 = vld [vmem:[%s2] sm:$0x1]
  %v32 = vperm.slane %v30, 0
  %v36 = vunpack.c.l.b16 %v24
  %v37 = vunpack.c.l.b16 %v25
  %v38 = vpack.c.b16 %v37, %v36
  %v43 = vunpack.c.l.b16 %v26
  %v44 = vunpack.c.l.b16 %v27
  %v45 = vunpack.c.l.b16 %v28
  %v46 = vunpack.c.l.b16 %v29
  %v47 = vpack.c.b16 %v44, %v43
  %v48 = vpack.c.b16 %v46, %v45
  %vm51 = vcmask 261120
  %v53 = vsel %vm51, %v38, 0
  %55 = vmatpush.bf16.msra.mxu0 0
  %56 = vmatpush.bf16.msra.mxu0 0
  %57 = vmatpush.bf16.msra.mxu0 0
  %58 = vmatpush.bf16.msra.mxu0 0
  %59 = vmatpush.bf16.msra.mxu0 0
  %60 = vmatpush.bf16.msra.mxu0 0
  %61 = vmatpush.bf16.msra.mxu0 %v48
  %62 = vmatpush.bf16.msra.mxu0 %v47
  %63 = vmatmul.bf16.gmra.mxu0 %v53
  %v64 = vpop.f32.mrf.mxu0
  %v65 = vadd.f32 %v32, %v64
  %v66 = vpop.f32.mrf.mxu0
  %v67 = vadd.f32 %v32, %v66
  %68 = vdwg.mxu0
  %v69 = vld [vmem:[%s3] sm:$0xff]
  %v70 = vld [vmem:[%s3 + $0x8] sm:$0xff]
  %v71 = vadd.f32 %v65, %v69
  %v72 = vadd.f32 %v67, %v70
  %v73 = vld [vmem:[%s4] sm:$0x1]
  %v74 = vld [vmem:[%s5] sm:$0x1]
  %v75 = vsel %vm51, %v71, 0.0
  %76 = vadd.xlane.f32.xlu0 %v75
  %v77 = vpop.xlane.xlu0 %76
  %v78 = vsel %vm51, %v72, 0.0
  %79 = vadd.xlane.f32.xlu0 %v78
  %v80 = vpop.xlane.xlu0 %79
  %v81 = vrcp.pop 32.0
  %v82 = vmul.f32 32.0, %v81
  %v83 = vsub.f32 1.0, %v82
  %v84 = vmul.f32 %v81, %v83
  %v85 = vadd.f32 %v81, %v84
  %vm86 = vweird.f32 %v81
  %v87 = vsel %vm86, %v81, %v85
  %v88 = vmul.f32 %v77, %v87
  %v89 = vmul.f32 %v80, %v87
  %v90 = vsub.f32 %v71, %v88
  %v91 = vsub.f32 %v72, %v89
  %v92 = vmul.f32 %v90, %v90
  %v93 = vmul.f32 %v91, %v91
  %v94 = vsel %vm51, %v92, 0.0
  %95 = vadd.xlane.f32.xlu0 %v94
  %v96 = vpop.xlane.xlu0 %95
  %v97 = vsel %vm51, %v93, 0.0
  %98 = vadd.xlane.f32.xlu0 %v97
  %v99 = vpop.xlane.xlu0 %98
  %v100 = vmul.f32 %v96, %v87
  %v101 = vmul.f32 %v99, %v87
  %v102 = vadd.f32 %v100, 1e-05
  %v103 = vadd.f32 %v101, 1e-05
  %v104 = vrsqrt.pop %v102
  %v105 = vmul.f32 %v104, %v102
  %v106 = vmul.f32 %v105, %v104
  %v107 = vmul.f32 0.5, %v106
  %v108 = vsub.f32 1.5, %v107
  %v109 = vmul.f32 %v104, %v108
  %vm110 = vweird.f32 %v102
  %vm111 = vweird.f32 %v104
  %vm112 = vmor %vm110, %vm111
  %v113 = vsel %vm112, %v104, %v109
  %v114 = vrsqrt.pop %v103
  %v115 = vmul.f32 %v114, %v103
  %v116 = vmul.f32 %v115, %v114
  %v117 = vmul.f32 0.5, %v116
  %v118 = vsub.f32 1.5, %v117
  %v119 = vmul.f32 %v114, %v118
  %vm120 = vweird.f32 %v103
  %vm121 = vweird.f32 %v114
  %vm122 = vmor %vm120, %vm121
  %v123 = vsel %vm122, %v114, %v119
  %v124 = vmul.f32 %v90, %v113
  %v125 = vmul.f32 %v91, %v123
  %v127 = vperm.slane %v73, 0
  %v129 = vmul.f32 %v124, %v127
  %v130 = vmul.f32 %v125, %v127
  %v132 = vperm.slane %v74, 0
  %v134 = vadd.f32 %v129, %v132
  %v135 = vadd.f32 %v130, %v132
  %v136 = vpack.c.bf16 %v134, %v134
  %v137 = vpack.c.bf16 %v135, %v135
  %vm138 = vcmask 257024
  %139 = vst.msk [vmem:[%s6] sm:$0xf] %vm138, %v136
  %140 = vst.msk [vmem:[%s6 + $0x4] sm:$0xf] %vm138, %v137
  // Predicated region
  $region26: #{_lambda_.29} parent=0 // pred_check
    _
  $region27: #{_lambda_.29} parent=0 // pred_check_branch
    %142 = sbr.rel (0) target = $region29
  $region28: #{_lambda_.29} parent=0 // pred_region
    _
  $region29: #{_lambda_.29} parent=0 // pred_fallthru
    _
  // Predicated region
  $region30: #{_lambda_.29} parent=0 // pred_check
    _
  $region31: #{_lambda_.29} parent=0 // pred_check_branch
    %144 = sbr.rel (0) target = $region33
  $region32: #{_lambda_.29} parent=0 // pred_region
    _
  $region33: #{_lambda_.29} parent=0 // pred_fallthru
    _

// kernel: _lambda_.31
$region0: #{_lambda_.31}
  #allocation0 [shape = 'u32[]', space=smem, size = 0x4, offset = 0x4, fixed_abs, tag = 'smem constant byte address 0x4 - core index']
  #allocation1 [shape = 'u32[72,128]{1,0:T(1,128)}', space=vmem, size = 0x9000, scoped, tag = 'internal scratch']
  %s0 = inlined_call_operand.vmem [shape: bf16[16,32], index: 0, kind: input, shape index: {}]
  %s1 = inlined_call_operand.vmem [shape: bf16[32,96], index: 1, kind: input, shape index: {}]
  %s2 = inlined_call_operand.vmem [shape: f32[1,96], index: 2, kind: input, shape index: {}]
  %s3 = inlined_call_operand.vmem [shape: bf16[16,96], index: 3, kind: output, shape index: {}]
  %s4 = sld [smem:[#allocation0]]
  $region22: #{_lambda_.31} parent=0
    _
  %s6 = ssub.s32 1, %s4
  %s7 = scalar_select 0, %s6, %s4
  // Predicated region
  $region2: #{_lambda_.31} parent=0 // pred_check
    _
  $region3: #{_lambda_.31} parent=0 // pred_check_branch
    %9 = sbr.rel (0) target = $region5
  $region4: #{_lambda_.31} parent=0 // pred_region
    _
  $region5: #{_lambda_.31} parent=0 // pred_fallthru
    _
  // Predicated region
  $region6: #{_lambda_.31} parent=0 // pred_check
    _
  $region7: #{_lambda_.31} parent=0 // pred_check_branch
    %11 = sbr.rel (0) target = $region9
  $region8: #{_lambda_.31} parent=0 // pred_region
    _
  $region9: #{_lambda_.31} parent=0 // pred_fallthru
    _
  // Predicated region
  $region10: #{_lambda_.31} parent=0 // pred_check
    _
  $region11: #{_lambda_.31} parent=0 // pred_check_branch
    %13 = sbr.rel (0) target = $region13
  $region12: #{_lambda_.31} parent=0 // pred_region
    _
  $region13: #{_lambda_.31} parent=0 // pred_fallthru
    _
  %v15 = vld [vmem:[%s0] sm:$0xf]
  %v16 = vld [vmem:[%s0 + $0x4] sm:$0xf]
  %v17 = vld [vmem:[%s1] sm:$0xf]
  %v18 = vld [vmem:[%s1 + $0x4] sm:$0xf]
  %v19 = vld [vmem:[%s1 + $0x8] sm:$0xf]
  %v20 = vld [vmem:[%s1 + $0xc] sm:$0xf]
  %v21 = vld [vmem:[%s2] sm:$0x1]
  %v23 = vperm.slane %v21, 0
  %v27 = vunpack.c.l.b16 %v15
  %v28 = vunpack.c.l.b16 %v16
  %v29 = vpack.c.b16 %v28, %v27
  %v34 = vunpack.c.l.b16 %v17
  %v35 = vunpack.c.l.b16 %v18
  %v36 = vunpack.c.l.b16 %v19
  %v37 = vunpack.c.l.b16 %v20
  %v38 = vpack.c.b16 %v35, %v34
  %v39 = vpack.c.b16 %v37, %v36
  %vm42 = vcmask 261120
  %v44 = vsel %vm42, %v29, 0
  %46 = vmatpush.bf16.msra.mxu0 0
  %47 = vmatpush.bf16.msra.mxu0 0
  %48 = vmatpush.bf16.msra.mxu0 0
  %49 = vmatpush.bf16.msra.mxu0 0
  %50 = vmatpush.bf16.msra.mxu0 0
  %51 = vmatpush.bf16.msra.mxu0 0
  %52 = vmatpush.bf16.msra.mxu0 %v39
  %53 = vmatpush.bf16.msra.mxu0 %v38
  %54 = vmatmul.bf16.gmra.mxu0 %v44
  %v55 = vpop.f32.mrf.mxu0
  %v56 = vadd.f32 %v23, %v55
  %v57 = vpop.f32.mrf.mxu0
  %v58 = vadd.f32 %v23, %v57
  %59 = vdwg.mxu0
  %v60 = vpack.c.bf16 %v56, %v56
  %v61 = vpack.c.bf16 %v58, %v58
  %vm62 = vcmask 781312
  %63 = vst.msk [vmem:[%s3] sm:$0xf] %vm62, %v60
  %64 = vst.msk [vmem:[%s3 + $0x4] sm:$0xf] %vm62, %v61
  // Predicated region
  $region14: #{_lambda_.31} parent=0 // pred_check
    _
  $region15: #{_lambda_.31} parent=0 // pred_check_branch
    %66 = sbr.rel (0) target = $region17
  $region16: #{_lambda_.31} parent=0 // pred_region
    _
  $region17: #{_lambda_.31} parent=0 // pred_fallthru
    _
  // Predicated region
  $region18: #{_lambda_.31} parent=0 // pred_check
    _
  $region19: #{_lambda_.31} parent=0 // pred_check_branch
    %68 = sbr.rel (0) target = $region21
  $region20: #{_lambda_.31} parent=0 // pred_region
    _
  $region21: #{_lambda_.31} parent=0 // pred_fallthru
    _

// kernel: _lambda_.30
$region0: #{_lambda_.30}
  #allocation0 [shape = 'u32[]', space=smem, size = 0x4, offset = 0x4, fixed_abs, tag = 'smem constant byte address 0x4 - core index']
  #allocation1 [shape = 'u32[72,128]{1,0:T(1,128)}', space=vmem, size = 0x9000, scoped, tag = 'internal scratch']
  %s0 = inlined_call_operand.vmem [shape: bf16[16,32], index: 0, kind: input, shape index: {}]
  %s1 = inlined_call_operand.vmem [shape: bf16[32,128], index: 1, kind: input, shape index: {}]
  %s2 = inlined_call_operand.vmem [shape: f32[1,128], index: 2, kind: input, shape index: {}]
  %s3 = inlined_call_operand.vmem [shape: bf16[128,32], index: 3, kind: input, shape index: {}]
  %s4 = inlined_call_operand.vmem [shape: f32[1,32], index: 4, kind: input, shape index: {}]
  %s5 = inlined_call_operand.vmem [shape: f32[1,32], index: 5, kind: input, shape index: {}]
  %s6 = inlined_call_operand.vmem [shape: f32[1,32], index: 6, kind: input, shape index: {}]
  %s7 = inlined_call_operand.vmem [shape: bf16[16,32], index: 7, kind: output, shape index: {}]
  %s8 = sld [smem:[#allocation0]]
  $region38: #{_lambda_.30} parent=0
    _
  %s10 = ssub.s32 1, %s8
  %s11 = scalar_select 0, %s10, %s8
  // Predicated region
  $region2: #{_lambda_.30} parent=0 // pred_check
    _
  $region3: #{_lambda_.30} parent=0 // pred_check_branch
    %13 = sbr.rel (0) target = $region5
  $region4: #{_lambda_.30} parent=0 // pred_region
    _
  $region5: #{_lambda_.30} parent=0 // pred_fallthru
    _
  // Predicated region
  $region6: #{_lambda_.30} parent=0 // pred_check
    _
  $region7: #{_lambda_.30} parent=0 // pred_check_branch
    %15 = sbr.rel (0) target = $region9
  $region8: #{_lambda_.30} parent=0 // pred_region
    _
  $region9: #{_lambda_.30} parent=0 // pred_fallthru
    _
  // Predicated region
  $region10: #{_lambda_.30} parent=0 // pred_check
    _
  $region11: #{_lambda_.30} parent=0 // pred_check_branch
    %17 = sbr.rel (0) target = $region13
  $region12: #{_lambda_.30} parent=0 // pred_region
    _
  $region13: #{_lambda_.30} parent=0 // pred_fallthru
    _
  // Predicated region
  $region14: #{_lambda_.30} parent=0 // pred_check
    _
  $region15: #{_lambda_.30} parent=0 // pred_check_branch
    %19 = sbr.rel (0) target = $region17
  $region16: #{_lambda_.30} parent=0 // pred_region
    _
  $region17: #{_lambda_.30} parent=0 // pred_fallthru
    _
  // Predicated region
  $region18: #{_lambda_.30} parent=0 // pred_check
    _
  $region19: #{_lambda_.30} parent=0 // pred_check_branch
    %21 = sbr.rel (0) target = $region21
  $region20: #{_lambda_.30} parent=0 // pred_region
    _
  $region21: #{_lambda_.30} parent=0 // pred_fallthru
    _
  // Predicated region
  $region22: #{_lambda_.30} parent=0 // pred_check
    _
  $region23: #{_lambda_.30} parent=0 // pred_check_branch
    %23 = sbr.rel (0) target = $region25
  $region24: #{_lambda_.30} parent=0 // pred_region
    _
  $region25: #{_lambda_.30} parent=0 // pred_fallthru
    _
  // Predicated region
  $region26: #{_lambda_.30} parent=0 // pred_check
    _
  $region27: #{_lambda_.30} parent=0 // pred_check_branch
    %25 = sbr.rel (0) target = $region29
  $region28: #{_lambda_.30} parent=0 // pred_region
    _
  $region29: #{_lambda_.30} parent=0 // pred_fallthru
    _
  %v27 = vld [vmem:[%s0] sm:$0xf]
  %v28 = vld [vmem:[%s0 + $0x4] sm:$0xf]
  %v29 = vunpack.c.l.bf16 %v27
  %v30 = vunpack.c.l.bf16 %v28
  %v31 = vld [vmem:[%s1] sm:$0xf]
  %v32 = vld [vmem:[%s1 + $0x4] sm:$0xf]
  %v33 = vld [vmem:[%s1 + $0x8] sm:$0xf]
  %v34 = vld [vmem:[%s1 + $0xc] sm:$0xf]
  %v35 = vld [vmem:[%s2] sm:$0x1]
  %v37 = vperm.slane %v35, 0
  %v41 = vunpack.c.l.b16 %v27
  %v42 = vunpack.c.l.b16 %v28
  %v43 = vpack.c.b16 %v42, %v41
  %v48 = vunpack.c.l.b16 %v31
  %v49 = vunpack.c.l.b16 %v32
  %v50 = vunpack.c.l.b16 %v33
  %v51 = vunpack.c.l.b16 %v34
  %v52 = vpack.c.b16 %v49, %v48
  %v53 = vpack.c.b16 %v51, %v50
  %vm56 = vcmask 261120
  %v58 = vsel %vm56, %v43, 0
  %60 = vmatpush.bf16.msra.mxu0 0
  %61 = vmatpush.bf16.msra.mxu0 0
  %62 = vmatpush.bf16.msra.mxu0 0
  %63 = vmatpush.bf16.msra.mxu0 0
  %64 = vmatpush.bf16.msra.mxu0 0
  %65 = vmatpush.bf16.msra.mxu0 0
  %66 = vmatpush.bf16.msra.mxu0 %v53
  %67 = vmatpush.bf16.msra.mxu0 %v52
  %68 = vmatmul.bf16.gmra.mxu0 %v58
  %v69 = vpop.f32.mrf.mxu0
  %v70 = vadd.f32 %v37, %v69
  %v71 = vpop.f32.mrf.mxu0
  %v72 = vadd.f32 %v37, %v71
  %73 = vdwg.mxu0
  %v74 = vmax.f32 %v70, 0.0
  %v75 = vmax.f32 %v72, 0.0
  %v76 = vpack.c.bf16 %v75, %v74
  %v77 = vld [vmem:[%s3] sm:$0xf]
  %v78 = vld [vmem:[%s3 + $0x4] sm:$0xf]
  %v79 = vld [vmem:[%s3 + $0x8] sm:$0xf]
  %v80 = vld [vmem:[%s3 + $0xc] sm:$0xf]
  %v81 = vld [vmem:[%s3 + $0x10] sm:$0xf]
  %v82 = vld [vmem:[%s3 + $0x14] sm:$0xf]
  %v83 = vld [vmem:[%s3 + $0x18] sm:$0xf]
  %v84 = vld [vmem:[%s3 + $0x1c] sm:$0xf]
  %v85 = vld [vmem:[%s3 + $0x20] sm:$0xf]
  %v86 = vld [vmem:[%s3 + $0x24] sm:$0xf]
  %v87 = vld [vmem:[%s3 + $0x28] sm:$0xf]
  %v88 = vld [vmem:[%s3 + $0x2c] sm:$0xf]
  %v89 = vld [vmem:[%s3 + $0x30] sm:$0xf]
  %v90 = vld [vmem:[%s3 + $0x34] sm:$0xf]
  %v91 = vld [vmem:[%s3 + $0x38] sm:$0xf]
  %v92 = vld [vmem:[%s3 + $0x3c] sm:$0xf]
  %v93 = vld [vmem:[%s4] sm:$0x1]
  %v95 = vperm.slane %v93, 0
  %v113 = vunpack.c.l.b16 %v77
  %v114 = vunpack.c.l.b16 %v78
  %v115 = vunpack.c.l.b16 %v79
  %v116 = vunpack.c.l.b16 %v80
  %v117 = vunpack.c.l.b16 %v81
  %v118 = vunpack.c.l.b16 %v82
  %v119 = vunpack.c.l.b16 %v83
  %v120 = vunpack.c.l.b16 %v84
  %v121 = vunpack.c.l.b16 %v85
  %v122 = vunpack.c.l.b16 %v86
  %v123 = vunpack.c.l.b16 %v87
  %v124 = vunpack.c.l.b16 %v88
  %v125 = vunpack.c.l.b16 %v89
  %v126 = vunpack.c.l.b16 %v90
  %v127 = vunpack.c.l.b16 %v91
  %v128 = vunpack.c.l.b16 %v92
  %v129 = vpack.c.b16 %v114, %v113
  %v130 = vpack.c.b16 %v116, %v115
  %v131 = vpack.c.b16 %v118, %v117
  %v132 = vpack.c.b16 %v120, %v119
  %v133 = vpack.c.b16 %v122, %v121
  %v134 = vpack.c.b16 %v124, %v123
  %v135 = vpack.c.b16 %v126, %v125
  %v136 = vpack.c.b16 %v128, %v127
  %145 = vmatpush.bf16.msra.mxu0 %v136
  %146 = vmatpush.bf16.msra.mxu0 %v135
  %147 = vmatpush.bf16.msra.mxu0 %v134
  %148 = vmatpush.bf16.msra.mxu0 %v133
  %149 = vmatpush.bf16.msra.mxu0 %v132
  %150 = vmatpush.bf16.msra.mxu0 %v131
  %151 = vmatpush.bf16.msra.mxu0 %v130
  %152 = vmatpush.bf16.msra.mxu0 %v129
  %153 = vmatmul.bf16.gmra.mxu0 %v76
  %v154 = vpop.f32.mrf.mxu0
  %v155 = vadd.f32 %v95, %v154
  %v156 = vpop.f32.mrf.mxu0
  %v157 = vadd.f32 %v95, %v156
  %158 = vdwg.mxu0
  %v159 = vadd.f32 %v155, %v29
  %v160 = vadd.f32 %v157, %v30
  %v161 = vld [vmem:[%s5] sm:$0x1]
  %v162 = vld [vmem:[%s6] sm:$0x1]
  %v163 = vsel %vm56, %v159, 0.0
  %164 = vadd.xlane.f32.xlu0 %v163
  %v165 = vpop.xlane.xlu0 %164
  %v166 = vsel %vm56, %v160, 0.0
  %167 = vadd.xlane.f32.xlu0 %v166
  %v168 = vpop.xlane.xlu0 %167
  %v169 = vrcp.pop 32.0
  %v170 = vmul.f32 32.0, %v169
  %v171 = vsub.f32 1.0, %v170
  %v172 = vmul.f32 %v169, %v171
  %v173 = vadd.f32 %v169, %v172
  %vm174 = vweird.f32 %v169
  %v175 = vsel %vm174, %v169, %v173
  %v176 = vmul.f32 %v165, %v175
  %v177 = vmul.f32 %v168, %v175
  %v178 = vsub.f32 %v159, %v176
  %v179 = vsub.f32 %v160, %v177
  %v180 = vmul.f32 %v178, %v178
  %v181 = vmul.f32 %v179, %v179
  %v182 = vsel %vm56, %v180, 0.0
  %183 = vadd.xlane.f32.xlu0 %v182
  %v184 = vpop.xlane.xlu0 %183
  %v185 = vsel %vm56, %v181, 0.0
  %186 = vadd.xlane.f32.xlu0 %v185
  %v187 = vpop.xlane.xlu0 %186
  %v188 = vmul.f32 %v184, %v175
  %v189 = vmul.f32 %v187, %v175
  %v190 = vadd.f32 %v188, 1e-05
  %v191 = vadd.f32 %v189, 1e-05
  %v192 = vrsqrt.pop %v190
  %v193 = vmul.f32 %v192, %v190
  %v194 = vmul.f32 %v193, %v192
  %v195 = vmul.f32 0.5, %v194
  %v196 = vsub.f32 1.5, %v195
  %v197 = vmul.f32 %v192, %v196
  %vm198 = vweird.f32 %v190
  %vm199 = vweird.f32 %v192
  %vm200 = vmor %vm198, %vm199
  %v201 = vsel %vm200, %v192, %v197
  %v202 = vrsqrt.pop %v191
  %v203 = vmul.f32 %v202, %v191
  %v204 = vmul.f32 %v203, %v202
  %v205 = vmul.f32 0.5, %v204
  %v206 = vsub.f32 1.5, %v205
  %v207 = vmul.f32 %v202, %v206
  %vm208 = vweird.f32 %v191
  %vm209 = vweird.f32 %v202
  %vm210 = vmor %vm208, %vm209
  %v211 = vsel %vm210, %v202, %v207
  %v212 = vmul.f32 %v178, %v201
  %v213 = vmul.f32 %v179, %v211
  %v215 = vperm.slane %v161, 0
  %v217 = vmul.f32 %v212, %v215
  %v218 = vmul.f32 %v213, %v215
  %v220 = vperm.slane %v162, 0
  %v222 = vadd.f32 %v217, %v220
  %v223 = vadd.f32 %v218, %v220
  %v224 = vpack.c.bf16 %v222, %v222
  %v225 = vpack.c.bf16 %v223, %v223
  %vm226 = vcmask 257024
  %227 = vst.msk [vmem:[%s7] sm:$0xf] %vm226, %v224
  %228 = vst.msk [vmem:[%s7 + $0x4] sm:$0xf] %vm226, %v225
  // Predicated region
  $region30: #{_lambda_.30} parent=0 // pred_check
    _
  $region31: #{_lambda_.30} parent=0 // pred_check_branch
    %230 = sbr.rel (0) target = $region33
  $region32: #{_lambda_.30} parent=0 // pred_region
    _
  $region33: #{_lambda_.30} parent=0 // pred_fallthru
    _
  // Predicated region
  $region34: #{_lambda_.30} parent=0 // pred_check
    _
  $region35: #{_lambda_.30} parent=0 // pred_check_branch
    %232 = sbr.rel (0) target = $region37
  $region36: #{_lambda_.30} parent=0 // pred_region
    _
  $region37: #{_lambda_.30} parent=0 // pred_fallthru
    _

// kernel: _lambda_.40
$region0: #{_lambda_.40}
  #allocation0 [shape = 'u32[]', space=smem, size = 0x4, offset = 0x4, fixed_abs, tag = 'smem constant byte address 0x4 - core index']
  #allocation1 [shape = 'u32[72,128]{1,0:T(1,128)}', space=vmem, size = 0x9000, scoped, tag = 'internal scratch']
  %s0 = inlined_call_operand.vmem [shape: bf16[16,32], index: 0, kind: input, shape index: {}]
  %s1 = inlined_call_operand.vmem [shape: bf16[32,64], index: 1, kind: input, shape index: {}]
  %s2 = inlined_call_operand.vmem [shape: f32[1,64], index: 2, kind: input, shape index: {}]
  %s3 = inlined_call_operand.vmem [shape: bf16[16,64], index: 3, kind: output, shape index: {}]
  %s4 = sld [smem:[#allocation0]]
  $region22: #{_lambda_.40} parent=0
    _
  %s6 = ssub.s32 1, %s4
  %s7 = scalar_select 0, %s6, %s4
  // Predicated region
  $region2: #{_lambda_.40} parent=0 // pred_check
    _
  $region3: #{_lambda_.40} parent=0 // pred_check_branch
    %9 = sbr.rel (0) target = $region5
  $region4: #{_lambda_.40} parent=0 // pred_region
    _
  $region5: #{_lambda_.40} parent=0 // pred_fallthru
    _
  // Predicated region
  $region6: #{_lambda_.40} parent=0 // pred_check
    _
  $region7: #{_lambda_.40} parent=0 // pred_check_branch
    %11 = sbr.rel (0) target = $region9
  $region8: #{_lambda_.40} parent=0 // pred_region
    _
  $region9: #{_lambda_.40} parent=0 // pred_fallthru
    _
  // Predicated region
  $region10: #{_lambda_.40} parent=0 // pred_check
    _
  $region11: #{_lambda_.40} parent=0 // pred_check_branch
    %13 = sbr.rel (0) target = $region13
  $region12: #{_lambda_.40} parent=0 // pred_region
    _
  $region13: #{_lambda_.40} parent=0 // pred_fallthru
    _
  %v15 = vld [vmem:[%s0] sm:$0xf]
  %v16 = vld [vmem:[%s0 + $0x4] sm:$0xf]
  %v17 = vld [vmem:[%s1] sm:$0xf]
  %v18 = vld [vmem:[%s1 + $0x4] sm:$0xf]
  %v19 = vld [vmem:[%s1 + $0x8] sm:$0xf]
  %v20 = vld [vmem:[%s1 + $0xc] sm:$0xf]
  %v21 = vld [vmem:[%s2] sm:$0x1]
  %v23 = vperm.slane %v21, 0
  %v27 = vunpack.c.l.b16 %v15
  %v28 = vunpack.c.l.b16 %v16
  %v29 = vpack.c.b16 %v28, %v27
  %v34 = vunpack.c.l.b16 %v17
  %v35 = vunpack.c.l.b16 %v18
  %v36 = vunpack.c.l.b16 %v19
  %v37 = vunpack.c.l.b16 %v20
  %v38 = vpack.c.b16 %v35, %v34
  %v39 = vpack.c.b16 %v37, %v36
  %vm42 = vcmask 261120
  %v44 = vsel %vm42, %v29, 0
  %46 = vmatpush.bf16.msra.mxu0 0
  %47 = vmatpush.bf16.msra.mxu0 0
  %48 = vmatpush.bf16.msra.mxu0 0
  %49 = vmatpush.bf16.msra.mxu0 0
  %50 = vmatpush.bf16.msra.mxu0 0
  %51 = vmatpush.bf16.msra.mxu0 0
  %52 = vmatpush.bf16.msra.mxu0 %v39
  %53 = vmatpush.bf16.msra.mxu0 %v38
  %54 = vmatmul.bf16.gmra.mxu0 %v44
  %v55 = vpop.f32.mrf.mxu0
  %v56 = vadd.f32 %v23, %v55
  %v57 = vpop.f32.mrf.mxu0
  %v58 = vadd.f32 %v23, %v57
  %59 = vdwg.mxu0
  %v60 = vpack.c.bf16 %v56, %v56
  %v61 = vpack.c.bf16 %v58, %v58
  %vm62 = vcmask 519168
  %63 = vst.msk [vmem:[%s3] sm:$0xf] %vm62, %v60
  %64 = vst.msk [vmem:[%s3 + $0x4] sm:$0xf] %vm62, %v61
  // Predicated region
  $region14: #{_lambda_.40} parent=0 // pred_check
    _
  $region15: #{_lambda_.40} parent=0 // pred_check_branch
    %66 = sbr.rel (0) target = $region17
  $region16: #{_lambda_.40} parent=0 // pred_region
    _
  $region17: #{_lambda_.40} parent=0 // pred_fallthru
    _
  // Predicated region
  $region18: #{_lambda_.40} parent=0 // pred_check
    _
  $region19: #{_lambda_.40} parent=0 // pred_check_branch
    %68 = sbr.rel (0) target = $region21
  $region20: #{_lambda_.40} parent=0 // pred_region
    _
  $region21: #{_lambda_.40} parent=0 // pred_fallthru
    _

// kernel: _lambda_.33
$region0: #{_lambda_.33}
  #allocation0 [shape = 'u32[]', space=smem, size = 0x4, offset = 0x4, fixed_abs, tag = 'smem constant byte address 0x4 - core index']
  #allocation1 [shape = 'u32[72,128]{1,0:T(1,128)}', space=vmem, size = 0x9000, scoped, tag = 'internal scratch']
  %s0 = inlined_call_operand.vmem [shape: bf16[16,32], index: 0, kind: input, shape index: {}]
  %s1 = inlined_call_operand.vmem [shape: bf16[32,32], index: 1, kind: input, shape index: {}]
  %s2 = inlined_call_operand.vmem [shape: f32[1,32], index: 2, kind: input, shape index: {}]
  %s3 = inlined_call_operand.vmem [shape: bf16[16,32], index: 3, kind: input, shape index: {}]
  %s4 = inlined_call_operand.vmem [shape: f32[1,32], index: 4, kind: input, shape index: {}]
  %s5 = inlined_call_operand.vmem [shape: f32[1,32], index: 5, kind: input, shape index: {}]
  %s6 = inlined_call_operand.vmem [shape: bf16[16,32], index: 6, kind: output, shape index: {}]
  %s7 = sld [smem:[#allocation0]]
  $region34: #{_lambda_.33} parent=0
    _
  %s9 = ssub.s32 1, %s7
  %s10 = scalar_select 0, %s9, %s7
  // Predicated region
  $region2: #{_lambda_.33} parent=0 // pred_check
    _
  $region3: #{_lambda_.33} parent=0 // pred_check_branch
    %12 = sbr.rel (0) target = $region5
  $region4: #{_lambda_.33} parent=0 // pred_region
    _
  $region5: #{_lambda_.33} parent=0 // pred_fallthru
    _
  // Predicated region
  $region6: #{_lambda_.33} parent=0 // pred_check
    _
  $region7: #{_lambda_.33} parent=0 // pred_check_branch
    %14 = sbr.rel (0) target = $region9
  $region8: #{_lambda_.33} parent=0 // pred_region
    _
  $region9: #{_lambda_.33} parent=0 // pred_fallthru
    _
  // Predicated region
  $region10: #{_lambda_.33} parent=0 // pred_check
    _
  $region11: #{_lambda_.33} parent=0 // pred_check_branch
    %16 = sbr.rel (0) target = $region13
  $region12: #{_lambda_.33} parent=0 // pred_region
    _
  $region13: #{_lambda_.33} parent=0 // pred_fallthru
    _
  // Predicated region
  $region14: #{_lambda_.33} parent=0 // pred_check
    _
  $region15: #{_lambda_.33} parent=0 // pred_check_branch
    %18 = sbr.rel (0) target = $region17
  $region16: #{_lambda_.33} parent=0 // pred_region
    _
  $region17: #{_lambda_.33} parent=0 // pred_fallthru
    _
  // Predicated region
  $region18: #{_lambda_.33} parent=0 // pred_check
    _
  $region19: #{_lambda_.33} parent=0 // pred_check_branch
    %20 = sbr.rel (0) target = $region21
  $region20: #{_lambda_.33} parent=0 // pred_region
    _
  $region21: #{_lambda_.33} parent=0 // pred_fallthru
    _
  // Predicated region
  $region22: #{_lambda_.33} parent=0 // pred_check
    _
  $region23: #{_lambda_.33} parent=0 // pred_check_branch
    %22 = sbr.rel (0) target = $region25
  $region24: #{_lambda_.33} parent=0 // pred_region
    _
  $region25: #{_lambda_.33} parent=0 // pred_fallthru
    _
  %v24 = vld [vmem:[%s0] sm:$0xf]
  %v25 = vld [vmem:[%s0 + $0x4] sm:$0xf]
  %v26 = vld [vmem:[%s1] sm:$0xf]
  %v27 = vld [vmem:[%s1 + $0x4] sm:$0xf]
  %v28 = vld [vmem:[%s1 + $0x8] sm:$0xf]
  %v29 = vld [vmem:[%s1 + $0xc] sm:$0xf]
  %v30 = vld [vmem:[%s2] sm:$0x1]
  %v32 = vperm.slane %v30, 0
  %v36 = vunpack.c.l.b16 %v24
  %v37 = vunpack.c.l.b16 %v25
  %v38 = vpack.c.b16 %v37, %v36
  %v43 = vunpack.c.l.b16 %v26
  %v44 = vunpack.c.l.b16 %v27
  %v45 = vunpack.c.l.b16 %v28
  %v46 = vunpack.c.l.b16 %v29
  %v47 = vpack.c.b16 %v44, %v43
  %v48 = vpack.c.b16 %v46, %v45
  %vm51 = vcmask 261120
  %v53 = vsel %vm51, %v38, 0
  %55 = vmatpush.bf16.msra.mxu0 0
  %56 = vmatpush.bf16.msra.mxu0 0
  %57 = vmatpush.bf16.msra.mxu0 0
  %58 = vmatpush.bf16.msra.mxu0 0
  %59 = vmatpush.bf16.msra.mxu0 0
  %60 = vmatpush.bf16.msra.mxu0 0
  %61 = vmatpush.bf16.msra.mxu0 %v48
  %62 = vmatpush.bf16.msra.mxu0 %v47
  %63 = vmatmul.bf16.gmra.mxu0 %v53
  %v64 = vpop.f32.mrf.mxu0
  %v65 = vadd.f32 %v32, %v64
  %v66 = vpop.f32.mrf.mxu0
  %v67 = vadd.f32 %v32, %v66
  %68 = vdwg.mxu0
  %v69 = vld [vmem:[%s3] sm:$0xf]
  %v70 = vld [vmem:[%s3 + $0x4] sm:$0xf]
  %v71 = vunpack.c.l.bf16 %v69
  %v72 = vunpack.c.l.bf16 %v70
  %v73 = vadd.f32 %v65, %v71
  %v74 = vadd.f32 %v67, %v72
  %v75 = vld [vmem:[%s4] sm:$0x1]
  %v76 = vld [vmem:[%s5] sm:$0x1]
  %v77 = vsel %vm51, %v73, 0.0
  %78 = vadd.xlane.f32.xlu0 %v77
  %v79 = vpop.xlane.xlu0 %78
  %v80 = vsel %vm51, %v74, 0.0
  %81 = vadd.xlane.f32.xlu0 %v80
  %v82 = vpop.xlane.xlu0 %81
  %v83 = vrcp.pop 32.0
  %v84 = vmul.f32 32.0, %v83
  %v85 = vsub.f32 1.0, %v84
  %v86 = vmul.f32 %v83, %v85
  %v87 = vadd.f32 %v83, %v86
  %vm88 = vweird.f32 %v83
  %v89 = vsel %vm88, %v83, %v87
  %v90 = vmul.f32 %v79, %v89
  %v91 = vmul.f32 %v82, %v89
  %v92 = vsub.f32 %v73, %v90
  %v93 = vsub.f32 %v74, %v91
  %v94 = vmul.f32 %v92, %v92
  %v95 = vmul.f32 %v93, %v93
  %v96 = vsel %vm51, %v94, 0.0
  %97 = vadd.xlane.f32.xlu0 %v96
  %v98 = vpop.xlane.xlu0 %97
  %v99 = vsel %vm51, %v95, 0.0
  %100 = vadd.xlane.f32.xlu0 %v99
  %v101 = vpop.xlane.xlu0 %100
  %v102 = vmul.f32 %v98, %v89
  %v103 = vmul.f32 %v101, %v89
  %v104 = vadd.f32 %v102, 1e-05
  %v105 = vadd.f32 %v103, 1e-05
  %v106 = vrsqrt.pop %v104
  %v107 = vmul.f32 %v106, %v104
  %v108 = vmul.f32 %v107, %v106
  %v109 = vmul.f32 0.5, %v108
  %v110 = vsub.f32 1.5, %v109
  %v111 = vmul.f32 %v106, %v110
  %vm112 = vweird.f32 %v104
  %vm113 = vweird.f32 %v106
  %vm114 = vmor %vm112, %vm113
  %v115 = vsel %vm114, %v106, %v111
  %v116 = vrsqrt.pop %v105
  %v117 = vmul.f32 %v116, %v105
  %v118 = vmul.f32 %v117, %v116
  %v119 = vmul.f32 0.5, %v118
  %v120 = vsub.f32 1.5, %v119
  %v121 = vmul.f32 %v116, %v120
  %vm122 = vweird.f32 %v105
  %vm123 = vweird.f32 %v116
  %vm124 = vmor %vm122, %vm123
  %v125 = vsel %vm124, %v116, %v121
  %v126 = vmul.f32 %v92, %v115
  %v127 = vmul.f32 %v93, %v125
  %v129 = vperm.slane %v75, 0
  %v131 = vmul.f32 %v126, %v129
  %v132 = vmul.f32 %v127, %v129
  %v134 = vperm.slane %v76, 0
  %v136 = vadd.f32 %v131, %v134
  %v137 = vadd.f32 %v132, %v134
  %v138 = vpack.c.bf16 %v136, %v136
  %v139 = vpack.c.bf16 %v137, %v137
  %vm140 = vcmask 257024
  %141 = vst.msk [vmem:[%s6] sm:$0xf] %vm140, %v138
  %142 = vst.msk [vmem:[%s6 + $0x4] sm:$0xf] %vm140, %v139
  // Predicated region
  $region26: #{_lambda_.33} parent=0 // pred_check
    _
  $region27: #{_lambda_.33} parent=0 // pred_check_branch
    %144 = sbr.rel (0) target = $region29
  $region28: #{_lambda_.33} parent=0 // pred_region
    _
  $region29: #{_lambda_.33} parent=0 // pred_fallthru
    _
  // Predicated region
  $region30: #{_lambda_.33} parent=0 // pred_check
    _
  $region31: #{_lambda_.33} parent=0 // pred_check_branch
    %146 = sbr.rel (0) target = $region33
  $region32: #{_lambda_.33} parent=0 // pred_region
    _
  $region33: #{_lambda_.33} parent=0 // pred_fallthru
    _

// kernel: _lambda_.39
$region0: #{_lambda_.39}
  #allocation0 [shape = 'u32[]', space=smem, size = 0x4, offset = 0x4, fixed_abs, tag = 'smem constant byte address 0x4 - core index']
  #allocation1 [shape = 'u32[72,128]{1,0:T(1,128)}', space=vmem, size = 0x9000, scoped, tag = 'internal scratch']
  %s0 = inlined_call_operand.vmem [shape: bf16[16,32], index: 0, kind: input, shape index: {}]
  %s1 = inlined_call_operand.vmem [shape: bf16[32,32], index: 1, kind: input, shape index: {}]
  %s2 = inlined_call_operand.vmem [shape: f32[1,32], index: 2, kind: input, shape index: {}]
  %s3 = inlined_call_operand.vmem [shape: bf16[16,32], index: 3, kind: output, shape index: {}]
  %s4 = sld [smem:[#allocation0]]
  $region22: #{_lambda_.39} parent=0
    _
  %s6 = ssub.s32 1, %s4
  %s7 = scalar_select 0, %s6, %s4
  // Predicated region
  $region2: #{_lambda_.39} parent=0 // pred_check
    _
  $region3: #{_lambda_.39} parent=0 // pred_check_branch
    %9 = sbr.rel (0) target = $region5
  $region4: #{_lambda_.39} parent=0 // pred_region
    _
  $region5: #{_lambda_.39} parent=0 // pred_fallthru
    _
  // Predicated region
  $region6: #{_lambda_.39} parent=0 // pred_check
    _
  $region7: #{_lambda_.39} parent=0 // pred_check_branch
    %11 = sbr.rel (0) target = $region9
  $region8: #{_lambda_.39} parent=0 // pred_region
    _
  $region9: #{_lambda_.39} parent=0 // pred_fallthru
    _
  // Predicated region
  $region10: #{_lambda_.39} parent=0 // pred_check
    _
  $region11: #{_lambda_.39} parent=0 // pred_check_branch
    %13 = sbr.rel (0) target = $region13
  $region12: #{_lambda_.39} parent=0 // pred_region
    _
  $region13: #{_lambda_.39} parent=0 // pred_fallthru
    _
  %v15 = vld [vmem:[%s0] sm:$0xf]
  %v16 = vld [vmem:[%s0 + $0x4] sm:$0xf]
  %v17 = vld [vmem:[%s1] sm:$0xf]
  %v18 = vld [vmem:[%s1 + $0x4] sm:$0xf]
  %v19 = vld [vmem:[%s1 + $0x8] sm:$0xf]
  %v20 = vld [vmem:[%s1 + $0xc] sm:$0xf]
  %v21 = vld [vmem:[%s2] sm:$0x1]
  %v23 = vperm.slane %v21, 0
  %v27 = vunpack.c.l.b16 %v15
  %v28 = vunpack.c.l.b16 %v16
  %v29 = vpack.c.b16 %v28, %v27
  %v34 = vunpack.c.l.b16 %v17
  %v35 = vunpack.c.l.b16 %v18
  %v36 = vunpack.c.l.b16 %v19
  %v37 = vunpack.c.l.b16 %v20
  %v38 = vpack.c.b16 %v35, %v34
  %v39 = vpack.c.b16 %v37, %v36
  %vm42 = vcmask 261120
  %v44 = vsel %vm42, %v29, 0
  %46 = vmatpush.bf16.msra.mxu0 0
  %47 = vmatpush.bf16.msra.mxu0 0
  %48 = vmatpush.bf16.msra.mxu0 0
  %49 = vmatpush.bf16.msra.mxu0 0
  %50 = vmatpush.bf16.msra.mxu0 0
  %51 = vmatpush.bf16.msra.mxu0 0
  %52 = vmatpush.bf16.msra.mxu0 %v39
  %53 = vmatpush.bf16.msra.mxu0 %v38
  %54 = vmatmul.bf16.gmra.mxu0 %v44
  %v55 = vpop.f32.mrf.mxu0
  %v56 = vadd.f32 %v23, %v55
  %v57 = vpop.f32.mrf.mxu0
  %v58 = vadd.f32 %v23, %v57
  %59 = vdwg.mxu0
  %v60 = vpack.c.bf16 %v56, %v56
  %v61 = vpack.c.bf16 %v58, %v58
  %vm62 = vcmask 257024
  %63 = vst.msk [vmem:[%s3] sm:$0xf] %vm62, %v60
  %64 = vst.msk [vmem:[%s3 + $0x4] sm:$0xf] %vm62, %v61
  // Predicated region
  $region14: #{_lambda_.39} parent=0 // pred_check
    _
  $region15: #{_lambda_.39} parent=0 // pred_check_branch
    %66 = sbr.rel (0) target = $region17
  $region16: #{_lambda_.39} parent=0 // pred_region
    _
  $region17: #{_lambda_.39} parent=0 // pred_fallthru
    _
  // Predicated region
  $region18: #{_lambda_.39} parent=0 // pred_check
    _
  $region19: #{_lambda_.39} parent=0 // pred_check_branch
    %68 = sbr.rel (0) target = $region21
  $region20: #{_lambda_.39} parent=0 // pred_region
    _
  $region21: #{_lambda_.39} parent=0 // pred_fallthru
    _

// kernel: _lambda_.53
$region0: #{_lambda_.53}
  #allocation0 [shape = 'u32[]', space=smem, size = 0x4, offset = 0x4, fixed_abs, tag = 'smem constant byte address 0x4 - core index']
  #allocation1 [shape = 'u32[72,128]{1,0:T(1,128)}', space=vmem, size = 0x9000, scoped, tag = 'internal scratch']
  %s0 = inlined_call_operand.vmem [shape: bf16[16,32], index: 0, kind: input, shape index: {}]
  %s1 = inlined_call_operand.vmem [shape: bf16[32,128], index: 1, kind: input, shape index: {}]
  %s2 = inlined_call_operand.vmem [shape: f32[1,128], index: 2, kind: input, shape index: {}]
  %s3 = inlined_call_operand.hbm [shape: f32[16,128], index: 3, kind: output, shape index: {}]
  %s4 = sld [smem:[#allocation0]]
  $region22: #{_lambda_.53} parent=0
    _
  %s6 = ssub.s32 1, %s4
  %s7 = scalar_select 0, %s6, %s4
  $region1: #{_lambda_.53} parent=0
    #allocation2 [shape = 'u8[8192]{0}', space=vmem, size = 0x2000, scoped, tag = 'output window, operand 0, single buffered']
    #allocation3 [shape = 's32[1]{0}', space=sflag, size = 0x4, scoped, tag = 'scoped memory for _lambda_.53']
    %8 = vsyncpa [#allocation3], 0
    // Predicated region
    $region2: #{_lambda_.53} parent=1 // pred_check
      _
    $region3: #{_lambda_.53} parent=1 // pred_check_branch
      %10 = sbr.rel (0) target = $region5
    $region4: #{_lambda_.53} parent=1 // pred_region
      _
    $region5: #{_lambda_.53} parent=1 // pred_fallthru
      _
    // Predicated region
    $region6: #{_lambda_.53} parent=1 // pred_check
      _
    $region7: #{_lambda_.53} parent=1 // pred_check_branch
      %12 = sbr.rel (0) target = $region9
    $region8: #{_lambda_.53} parent=1 // pred_region
      _
    $region9: #{_lambda_.53} parent=1 // pred_fallthru
      _
    // Predicated region
    $region10: #{_lambda_.53} parent=1 // pred_check
      _
    $region11: #{_lambda_.53} parent=1 // pred_check_branch
      %14 = sbr.rel (0) target = $region13
    $region12: #{_lambda_.53} parent=1 // pred_region
      _
    $region13: #{_lambda_.53} parent=1 // pred_fallthru
      _
    %v16 = vld [vmem:[%s0] sm:$0xf]
    %v17 = vld [vmem:[%s0 + $0x4] sm:$0xf]
    %v18 = vld [vmem:[%s1] sm:$0xf]
    %v19 = vld [vmem:[%s1 + $0x4] sm:$0xf]
    %v20 = vld [vmem:[%s1 + $0x8] sm:$0xf]
    %v21 = vld [vmem:[%s1 + $0xc] sm:$0xf]
    %v22 = vld [vmem:[%s2] sm:$0x1]
    %v24 = vperm.slane %v22, 0
    %v28 = vunpack.c.l.b16 %v16
    %v29 = vunpack.c.l.b16 %v17
    %v30 = vpack.c.b16 %v29, %v28
    %v35 = vunpack.c.l.b16 %v18
    %v36 = vunpack.c.l.b16 %v19
    %v37 = vunpack.c.l.b16 %v20
    %v38 = vunpack.c.l.b16 %v21
    %v39 = vpack.c.b16 %v36, %v35
    %v40 = vpack.c.b16 %v38, %v37
    %vm43 = vcmask 261120
    %v45 = vsel %vm43, %v30, 0
    %47 = vmatpush.bf16.msra.mxu0 0
    %48 = vmatpush.bf16.msra.mxu0 0
    %49 = vmatpush.bf16.msra.mxu0 0
    %50 = vmatpush.bf16.msra.mxu0 0
    %51 = vmatpush.bf16.msra.mxu0 0
    %52 = vmatpush.bf16.msra.mxu0 0
    %53 = vmatpush.bf16.msra.mxu0 %v40
    %54 = vmatpush.bf16.msra.mxu0 %v39
    %55 = vmatmul.bf16.gmra.mxu0 %v45
    %v56 = vpop.f32.mrf.mxu0
    %v57 = vadd.f32 %v24, %v56
    %v58 = vpop.f32.mrf.mxu0
    %v59 = vadd.f32 %v24, %v58
    %60 = vdwg.mxu0
    %61 = vst [vmem:[#allocation2] sm:$0xff] %v57
    %62 = vst [vmem:[#allocation2 + $0x8] sm:$0xff] %v59
    // Predicated region
    $region14: #{_lambda_.53} parent=1 // pred_check
      _
    $region15: #{_lambda_.53} parent=1 // pred_check_branch
      %64 = sbr.rel (0) target = $region17
    $region16: #{_lambda_.53} parent=1 // pred_region
      %66 = vsyncadd [#allocation3], 0
      %s67 = sshll.u32 [#allocation2], 4
      %s68 = int_to_ptr.vmem [resolvable:$true] %s67
      %s69 = sshll.u32 %s3, 4
      %s70 = int_to_ptr.hbm [resolvable:$true] %s69
      %75 = dma.vmem_to_hbm [thread:$0]  %s68, 256, %s70, [#allocation3], 128, 128, 8
    $region17: #{_lambda_.53} parent=1 // pred_fallthru
      _
    // Predicated region
    $region18: #{_lambda_.53} parent=1 // pred_check
      _
    $region19: #{_lambda_.53} parent=1 // pred_check_branch
      %77 = sbr.rel (0) target = $region21
    $region20: #{_lambda_.53} parent=1 // pred_region
      %79 = dma.done [#allocation3], 256
    $region21: #{_lambda_.53} parent=1 // pred_fallthru
      _
    %80 = vsyncpa [#allocation3], 1

// kernel: _lambda_.41
$region0: #{_lambda_.41}
  #allocation0 [shape = 'u32[]', space=smem, size = 0x4, offset = 0x4, fixed_abs, tag = 'smem constant byte address 0x4 - core index']
  #allocation1 [shape = 'u32[72,128]{1,0:T(1,128)}', space=vmem, size = 0x9000, scoped, tag = 'internal scratch']
  %s0 = inlined_call_operand.vmem [shape: bf16[2,8,32], index: 0, kind: input, shape index: {}]
  %s1 = inlined_call_operand.vmem [shape: bf16[2,8,64], index: 1, kind: input, shape index: {}]
  %s2 = inlined_call_operand.vmem [shape: bf16[2,8,32], index: 2, kind: output, shape index: {0}]
  %s3 = inlined_call_operand.vmem [shape: f32[2,8,32], index: 3, kind: output, shape index: {1}]
  %4 = xla_tuple %s2, %s3
  %s5 = sld [smem:[#allocation0]]
  $region49: #{_lambda_.41} parent=0
    _
  %s7 = ssub.s32 1, %s5
  %s8 = scalar_select 0, %s7, %s5
  loop: start=0, step=1, limit=4
  $region2: #{_lambda_.41} parent=0 // loop_pre_header
    _
  $region3: #{_lambda_.41} parent=0 // loop_header
    %s10 = sphi 0, %s14
    %p11 = scmp.ge.s32.totalorder %s10, 4
    %s20 = sphi 0, %s22
    %s23 = sphi 0, %s20
    %s24 = sphi 0, %s23
    %s40 = sphi 0, %s24
    %s46 = sphi 0, %s48
    %s49 = sphi 0, %s46
    %s50 = sphi 0, %s49
    %s66 = sphi 0, %s50
    %s72 = sphi 0, %s74
    %s75 = sphi 0, %s72
    %s76 = sphi 0, %s75
    %s92 = sphi 0, %s76
    %s98 = sphi 0, %s100
    %s101 = sphi 0, %s98
    %s102 = sphi 0, %s101
    %s118 = sphi 0, %s102
  $region4: #{_lambda_.41} parent=0 // loop_header_branch
    %13 = sbr.rel (%p11) target = $region8
  $region5: #{_lambda_.41} parent=0 // loop_body
    %s15 = ssub.s32 %s10, 1
    %s16 = ssub.s32 %s10, 2
    %s17 = sadd.s32 %s10, 1
    %s18 = ssub.s32 %s10, %s17
    %p19 = scmp.eq.s32.totalorder %s18, 0
    %s21 = sadd.s32 %s20, 1
    %s22 = scalar_select %p19, %s20, %s21
    %p25 = pneg %p19
    %p26 = scmp.eq.s32.totalorder %s10, 1
    %p27 = por %p25, %p26
    %p28 = scmp.ne.s32.totalorder %s20, %s23
    %p29 = scmp.eq.s32.totalorder %s10, 0
    %p30 = por %p28, %p29
    %p31 = scmp.ne.s32.totalorder %s20, %s23
    %p32 = scmp.eq.s32.totalorder %s15, 1
    %p33 = por %p31, %p32
    %p34 = scmp.ne.s32.totalorder %s23, %s24
    %p35 = scmp.eq.s32.totalorder %s15, 0
    %p36 = por %p34, %p35
    %p37 = scmp.ne.s32.totalorder %s23, %s24
    %p38 = scmp.eq.s32.totalorder %s16, 1
    %p39 = por %p37, %p38
    %p41 = scmp.ne.s32.totalorder %s24, %s40
    %p42 = scmp.eq.s32.totalorder %s16, 0
    %p43 = por %p41, %p42
    %s44 = ssub.s32 %s10, %s17
    %p45 = scmp.eq.s32.totalorder %s44, 0
    %s47 = sadd.s32 %s46, 1
    %s48 = scalar_select %p45, %s46, %s47
    %p51 = pneg %p45
    %p52 = scmp.eq.s32.totalorder %s10, 1
    %p53 = por %p51, %p52
    %p54 = scmp.ne.s32.totalorder %s46, %s49
    %p55 = scmp.eq.s32.totalorder %s10, 0
    %p56 = por %p54, %p55
    %p57 = scmp.ne.s32.totalorder %s46, %s49
    %p58 = scmp.eq.s32.totalorder %s15, 1
    %p59 = por %p57, %p58
    %p60 = scmp.ne.s32.totalorder %s49, %s50
    %p61 = scmp.eq.s32.totalorder %s15, 0
    %p62 = por %p60, %p61
    %p63 = scmp.ne.s32.totalorder %s49, %s50
    %p64 = scmp.eq.s32.totalorder %s16, 1
    %p65 = por %p63, %p64
    %p67 = scmp.ne.s32.totalorder %s50, %s66
    %p68 = scmp.eq.s32.totalorder %s16, 0
    %p69 = por %p67, %p68
    %s70 = ssub.s32 %s10, %s17
    %p71 = scmp.eq.s32.totalorder %s70, 0
    %s73 = sadd.s32 %s72, 1
    %s74 = scalar_select %p71, %s72, %s73
    %p77 = pneg %p71
    %p78 = scmp.eq.s32.totalorder %s10, 1
    %p79 = por %p77, %p78
    %p80 = scmp.ne.s32.totalorder %s72, %s75
    %p81 = scmp.eq.s32.totalorder %s10, 0
    %p82 = por %p80, %p81
    %p83 = scmp.ne.s32.totalorder %s72, %s75
    %p84 = scmp.eq.s32.totalorder %s15, 1
    %p85 = por %p83, %p84
    %p86 = scmp.ne.s32.totalorder %s75, %s76
    %p87 = scmp.eq.s32.totalorder %s15, 0
    %p88 = por %p86, %p87
    %p89 = scmp.ne.s32.totalorder %s75, %s76
    %p90 = scmp.eq.s32.totalorder %s16, 1
    %p91 = por %p89, %p90
    %p93 = scmp.ne.s32.totalorder %s76, %s92
    %p94 = scmp.eq.s32.totalorder %s16, 0
    %p95 = por %p93, %p94
    %s96 = ssub.s32 %s10, %s17
    %p97 = scmp.eq.s32.totalorder %s96, 0
    %s99 = sadd.s32 %s98, 1
    %s100 = scalar_select %p97, %s98, %s99
    %p103 = pneg %p97
    %p104 = scmp.eq.s32.totalorder %s10, 1
    %p105 = por %p103, %p104
    %p106 = scmp.ne.s32.totalorder %s98, %s101
    %p107 = scmp.eq.s32.totalorder %s10, 0
    %p108 = por %p106, %p107
    %p109 = scmp.ne.s32.totalorder %s98, %s101
    %p110 = scmp.eq.s32.totalorder %s15, 1
    %p111 = por %p109, %p110
    %p112 = scmp.ne.s32.totalorder %s101, %s102
    %p113 = scmp.eq.s32.totalorder %s15, 0
    %p114 = por %p112, %p113
    %p115 = scmp.ne.s32.totalorder %s101, %s102
    %p116 = scmp.eq.s32.totalorder %s16, 1
    %p117 = por %p115, %p116
    %p119 = scmp.ne.s32.totalorder %s102, %s118
    %p120 = scmp.eq.s32.totalorder %s16, 0
    %p121 = por %p119, %p120
    %p122 = scmp.le.s32.totalorder 1, %s10
    %p123 = scmp.lt.s32.totalorder %s10, 3
    %p124 = pnand %p122, %p123
    %p125 = pneg %p124
    // Predicated region
    $region9: #{_lambda_.41} parent=5 // pred_check
      _
    $region10: #{_lambda_.41} parent=5 // pred_check_branch
      %127 = sbr.rel (%p124) target = $region12
    $region11: #{_lambda_.41} parent=5 // pred_region
      %s128 = ssub.s32 %s10, 1
    $region12: #{_lambda_.41} parent=5 // pred_fallthru
      _
    %p129 = scmp.lt.s32.totalorder %s10, 2
    // Predicated region
    $region13: #{_lambda_.41} parent=5 // pred_check
      %p130 = pneg %p129
    $region14: #{_lambda_.41} parent=5 // pred_check_branch
      %132 = sbr.rel (%p130) target = $region16
    $region15: #{_lambda_.41} parent=5 // pred_region
      // Predicated region
      $region17: #{_lambda_.41} parent=15 // pred_check
        %p133 = pneg %p30
      $region18: #{_lambda_.41} parent=15 // pred_check_branch
        %135 = sbr.rel (%p133) target = $region20
      $region19: #{_lambda_.41} parent=15 // pred_region
        %p136 = scmp.lt.s32.totalorder %s10, 1
        %s137 = scalar_select %p136, %s10, 1
        %s138 = smul.addr %s137, 4
        %s139 = scalar_lea.vmem %s0, %s138
      $region20: #{_lambda_.41} parent=15 // pred_fallthru
        _
      // Predicated region
      $region21: #{_lambda_.41} parent=15 // pred_check
        %p140 = pneg %p56
      $region22: #{_lambda_.41} parent=15 // pred_check_branch
        %142 = sbr.rel (%p140) target = $region24
      $region23: #{_lambda_.41} parent=15 // pred_region
        %p143 = scmp.lt.s32.totalorder %s10, 1
        %s144 = scalar_select %p143, %s10, 1
        %s145 = smul.addr %s144, 4
        %s146 = scalar_lea.vmem %s1, %s145
      $region24: #{_lambda_.41} parent=15 // pred_fallthru
        _
    $region16: #{_lambda_.41} parent=5 // pred_fallthru
      _
    %p147 = scmp.le.s32.totalorder 1, %s10
    %p148 = scmp.lt.s32.totalorder %s10, 3
    %p149 = pnand %p147, %p148
    %p150 = pneg %p149
    // Predicated region
    $region25: #{_lambda_.41} parent=5 // pred_check
      _
    $region26: #{_lambda_.41} parent=5 // pred_check_branch
      %152 = sbr.rel (%p149) target = $region28
    $region27: #{_lambda_.41} parent=5 // pred_region
      %s153 = ssub.s32 %s10, 1
      %p154 = scmp.lt.s32.totalorder %s15, 1
      %s155 = scalar_select %p154, %s15, 1
      %s156 = smul.addr %s155, 4
      %s157 = scalar_lea.vmem %s0, %s156
      %p158 = pneg %p36
      %p159 = pneg %p33
      %p160 = scmp.lt.s32.totalorder %s15, 1
      %s161 = scalar_select %p160, %s15, 1
      %s162 = smul.addr %s161, 4
      %s163 = scalar_lea.vmem %s1, %s162
      %p164 = pneg %p62
      %p165 = pneg %p59
      %p166 = pneg %p88
      %p167 = pneg %p85
      %p168 = scmp.lt.s32.totalorder %s15, 1
      %s169 = scalar_select %p168, %s15, 1
      %s170 = smul.addr %s169, 4
      %s171 = scalar_lea.vmem %s2, %s170
      %p172 = pneg %p114
      %p173 = pneg %p111
      %p174 = scmp.lt.s32.totalorder %s15, 1
      %s175 = scalar_select %p174, %s15, 1
      %s176 = smul.addr %s175, 8
      %s177 = scalar_lea.vmem %s3, %s176
      %p178 = scmp.lt.s32.totalorder %s15, 1
      %s179 = scalar_select %p178, %s15, 1
      %s180 = smul.addr %s179, 4
      %s181 = scalar_lea.vmem %s0, %s180
      %p182 = scmp.lt.s32.totalorder %s15, 1
      %s183 = scalar_select %p182, %s15, 1
      %s184 = smul.addr %s183, 4
      %s185 = scalar_lea.vmem %s1, %s184
      %p186 = scmp.lt.s32.totalorder %s15, 1
      %s187 = scalar_select %p186, %s15, 1
      %s188 = smul.addr %s187, 4
      %s189 = scalar_lea.vmem %s2, %s188
      %p190 = scmp.lt.s32.totalorder %s15, 1
      %s191 = scalar_select %p190, %s15, 1
      %s192 = smul.addr %s191, 8
      %s193 = scalar_lea.vmem %s3, %s192
      %v195 = vld [vmem:[%s181] sm:$0xf]
      %v196 = vld [vmem:[%s185] sm:$0xf]
      %vm197 = vcmask 64512
      %v199 = vsel %vm197, %v195, 0
      %v202 = vsel %vm197, %v196, 0
      %204 = vmatpush.bf16.xpose.msra.mxu0 0
      %205 = vmatpush.bf16.xpose.msra.mxu0 0
      %206 = vmatpush.bf16.xpose.msra.mxu0 0
      %207 = vmatpush.bf16.xpose.msra.mxu0 0
      %208 = vmatpush.bf16.xpose.msra.mxu0 0
      %209 = vmatpush.bf16.xpose.msra.mxu0 0
      %210 = vmatpush.bf16.xpose.msra.mxu0 0
      %211 = vmatpush.bf16.xpose.msra.mxu0 %v202
      %212 = vmatmul.bf16.gmra.mxu0 %v199
      %v213 = vpop.f32.mrf.mxu0
      %v214 = vadd.f32 0.0, %v213
      %v215 = vpop.f32.mrf.mxu0
      %216 = vdwg.mxu0
      %v217 = vmul.f32 %v214, 0.35355338
      %v218 = vsel %vm197, %v217, -inf
      %219 = vmax.xlane.f32.xlu0 %v218
      %v220 = vpop.xlane.xlu0 %219
      %v221 = vsub.f32 %v217, %v220
      %v222 = vmul.f32 %v221, 1.442695
      %v223 = vpow.pop %v222
      %v224 = vsel %vm197, %v223, 0.0
      %225 = vadd.xlane.f32.xlu0 %v224
      %v226 = vpop.xlane.xlu0 %225
      %v227 = vrcp.pop %v226
      %v228 = vmul.f32 %v226, %v227
      %v229 = vsub.f32 1.0, %v228
      %v230 = vmul.f32 %v227, %v229
      %v231 = vadd.f32 %v227, %v230
      %vm232 = vweird.f32 %v226
      %vm233 = vweird.f32 %v227
      %vm234 = vmor %vm232, %vm233
      %v235 = vsel %vm234, %v227, %v231
      %v236 = vand.u32 2147483647, %v226
      %vm237 = vcmp.eq.f32.partialorder %v236, 8.507059e+37
      %v238 = vand.u32 %v226, 2147483648
      %v239 = vor.u32 1.1754944e-38, %v238
      %v240 = vsel %vm237, %v239, %v235
      %v241 = vmul.f32 %v223, %v240
      %v242 = vpack.c.bf16 %v241, %v241
      %v244 = vunpack.c.l.b16 %v196
      %v245 = vpack.c.b16 %v244, %v244
      %246 = vrot.lane.b32.xlu0 %v245, 96
      %v247 = vpop.permute.xlu0 %246
      %v249 = vsel %vm197, %v242, 0
      %vm251 = vcmask 1043456
      %v253 = vsel %vm251, %v247, 0
      %255 = vmatpush.bf16.msra.mxu0 0
      %256 = vmatpush.bf16.msra.mxu0 0
      %257 = vmatpush.bf16.msra.mxu0 0
      %258 = vmatpush.bf16.msra.mxu0 0
      %259 = vmatpush.bf16.msra.mxu0 0
      %260 = vmatpush.bf16.msra.mxu0 0
      %261 = vmatpush.bf16.msra.mxu0 0
      %262 = vmatpush.bf16.msra.mxu0 %v253
      %263 = vmatmul.bf16.gmra.mxu0 %v249
      %v264 = vpop.f32.mrf.mxu0
      %v265 = vadd.f32 0.0, %v264
      %v266 = vpop.f32.mrf.mxu0
      %267 = vdwg.mxu0
      %v269 = vunpack.c.l.b16 %v195
      %v270 = vpack.c.b16 %v269, %v269
      %271 = vrot.lane.b32.xlu0 %v270, 120
      %v272 = vpop.permute.xlu0 %271
      %273 = vrot.lane.b32.xlu0 %v245, 120
      %v274 = vpop.permute.xlu0 %273
      %v276 = vsel %vm197, %v272, 0
      %v279 = vsel %vm197, %v274, 0
      %281 = vmatpush.bf16.xpose.msra.mxu0 0
      %282 = vmatpush.bf16.xpose.msra.mxu0 0
      %283 = vmatpush.bf16.xpose.msra.mxu0 0
      %284 = vmatpush.bf16.xpose.msra.mxu0 0
      %285 = vmatpush.bf16.xpose.msra.mxu0 0
      %286 = vmatpush.bf16.xpose.msra.mxu0 0
      %287 = vmatpush.bf16.xpose.msra.mxu0 0
      %288 = vmatpush.bf16.xpose.msra.mxu0 %v279
      %289 = vmatmul.bf16.gmra.mxu0 %v276
      %v290 = vpop.f32.mrf.mxu0
      %v291 = vadd.f32 0.0, %v290
      %v292 = vpop.f32.mrf.mxu0
      %293 = vdwg.mxu0
      %v294 = vmul.f32 %v291, 0.35355338
      %v295 = vsel %vm197, %v294, -inf
      %296 = vmax.xlane.f32.xlu0 %v295
      %v297 = vpop.xlane.xlu0 %296
      %v298 = vsub.f32 %v294, %v297
      %v299 = vmul.f32 %v298, 1.442695
      %v300 = vpow.pop %v299
      %v301 = vsel %vm197, %v300, 0.0
      %302 = vadd.xlane.f32.xlu0 %v301
      %v303 = vpop.xlane.xlu0 %302
      %v304 = vrcp.pop %v303
      %v305 = vmul.f32 %v303, %v304
      %v306 = vsub.f32 1.0, %v305
      %v307 = vmul.f32 %v304, %v306
      %v308 = vadd.f32 %v304, %v307
      %vm309 = vweird.f32 %v303
      %vm310 = vweird.f32 %v304
      %vm311 = vmor %vm309, %vm310
      %v312 = vsel %vm311, %v304, %v308
      %v313 = vand.u32 2147483647, %v303
      %vm314 = vcmp.eq.f32.partialorder %v313, 8.507059e+37
      %v315 = vand.u32 %v303, 2147483648
      %v316 = vor.u32 1.1754944e-38, %v315
      %v317 = vsel %vm314, %v316, %v312
      %v318 = vmul.f32 %v300, %v317
      %v319 = vpack.c.bf16 %v318, %v318
      %320 = vrot.lane.b32.xlu0 %v245, 88
      %v321 = vpop.permute.xlu0 %320
      %v323 = vsel %vm197, %v319, 0
      %v326 = vsel %vm251, %v321, 0
      %328 = vmatpush.bf16.msra.mxu0 0
      %329 = vmatpush.bf16.msra.mxu0 0
      %330 = vmatpush.bf16.msra.mxu0 0
      %331 = vmatpush.bf16.msra.mxu0 0
      %332 = vmatpush.bf16.msra.mxu0 0
      %333 = vmatpush.bf16.msra.mxu0 0
      %334 = vmatpush.bf16.msra.mxu0 0
      %335 = vmatpush.bf16.msra.mxu0 %v326
      %336 = vmatmul.bf16.gmra.mxu0 %v323
      %v337 = vpop.f32.mrf.mxu0
      %v338 = vadd.f32 0.0, %v337
      %v339 = vpop.f32.mrf.mxu0
      %340 = vdwg.mxu0
      %341 = vrot.lane.b32.xlu0 %v270, 112
      %v342 = vpop.permute.xlu0 %341
      %343 = vrot.lane.b32.xlu0 %v245, 112
      %v344 = vpop.permute.xlu0 %343
      %v346 = vsel %vm197, %v342, 0
      %v349 = vsel %vm197, %v344, 0
      %351 = vmatpush.bf16.xpose.msra.mxu0 0
      %352 = vmatpush.bf16.xpose.msra.mxu0 0
      %353 = vmatpush.bf16.xpose.msra.mxu0 0
      %354 = vmatpush.bf16.xpose.msra.mxu0 0
      %355 = vmatpush.bf16.xpose.msra.mxu0 0
      %356 = vmatpush.bf16.xpose.msra.mxu0 0
      %357 = vmatpush.bf16.xpose.msra.mxu0 0
      %358 = vmatpush.bf16.xpose.msra.mxu0 %v349
      %359 = vmatmul.bf16.gmra.mxu0 %v346
      %v360 = vpop.f32.mrf.mxu0
      %v361 = vadd.f32 0.0, %v360
      %v362 = vpop.f32.mrf.mxu0
      %363 = vdwg.mxu0
      %v364 = vmul.f32 %v361, 0.35355338
      %v365 = vsel %vm197, %v364, -inf
      %366 = vmax.xlane.f32.xlu0 %v365
      %v367 = vpop.xlane.xlu0 %366
      %v368 = vsub.f32 %v364, %v367
      %v369 = vmul.f32 %v368, 1.442695
      %v370 = vpow.pop %v369
      %v371 = vsel %vm197, %v370, 0.0
      %372 = vadd.xlane.f32.xlu0 %v371
      %v373 = vpop.xlane.xlu0 %372
      %v374 = vrcp.pop %v373
      %v375 = vmul.f32 %v373, %v374
      %v376 = vsub.f32 1.0, %v375
      %v377 = vmul.f32 %v374, %v376
      %v378 = vadd.f32 %v374, %v377
      %vm379 = vweird.f32 %v373
      %vm380 = vweird.f32 %v374
      %vm381 = vmor %vm379, %vm380
      %v382 = vsel %vm381, %v374, %v378
      %v383 = vand.u32 2147483647, %v373
      %vm384 = vcmp.eq.f32.partialorder %v383, 8.507059e+37
      %v385 = vand.u32 %v373, 2147483648
      %v386 = vor.u32 1.1754944e-38, %v385
      %v387 = vsel %vm384, %v386, %v382
      %v388 = vmul.f32 %v370, %v387
      %v389 = vpack.c.bf16 %v388, %v388
      %390 = vrot.lane.b32.xlu0 %v245, 80
      %v391 = vpop.permute.xlu0 %390
      %v393 = vsel %vm197, %v389, 0
      %v396 = vsel %vm251, %v391, 0
      %398 = vmatpush.bf16.msra.mxu0 0
      %399 = vmatpush.bf16.msra.mxu0 0
      %400 = vmatpush.bf16.msra.mxu0 0
      %401 = vmatpush.bf16.msra.mxu0 0
      %402 = vmatpush.bf16.msra.mxu0 0
      %403 = vmatpush.bf16.msra.mxu0 0
      %404 = vmatpush.bf16.msra.mxu0 0
      %405 = vmatpush.bf16.msra.mxu0 %v396
      %406 = vmatmul.bf16.gmra.mxu0 %v393
      %v407 = vpop.f32.mrf.mxu0
      %v408 = vadd.f32 0.0, %v407
      %v409 = vpop.f32.mrf.mxu0
      %410 = vdwg.mxu0
      %411 = vrot.lane.b32.xlu0 %v270, 104
      %v412 = vpop.permute.xlu0 %411
      %413 = vrot.lane.b32.xlu0 %v245, 104
      %v414 = vpop.permute.xlu0 %413
      %v416 = vsel %vm197, %v412, 0
      %v419 = vsel %vm197, %v414, 0
      %421 = vmatpush.bf16.xpose.msra.mxu0 0
      %422 = vmatpush.bf16.xpose.msra.mxu0 0
      %423 = vmatpush.bf16.xpose.msra.mxu0 0
      %424 = vmatpush.bf16.xpose.msra.mxu0 0
      %425 = vmatpush.bf16.xpose.msra.mxu0 0
      %426 = vmatpush.bf16.xpose.msra.mxu0 0
      %427 = vmatpush.bf16.xpose.msra.mxu0 0
      %428 = vmatpush.bf16.xpose.msra.mxu0 %v419
      %429 = vmatmul.bf16.gmra.mxu0 %v416
      %v430 = vpop.f32.mrf.mxu0
      %v431 = vadd.f32 0.0, %v430
      %v432 = vpop.f32.mrf.mxu0
      %433 = vdwg.mxu0
      %v434 = vmul.f32 %v431, 0.35355338
      %v435 = vsel %vm197, %v434, -inf
      %436 = vmax.xlane.f32.xlu0 %v435
      %v437 = vpop.xlane.xlu0 %436
      %v438 = vsub.f32 %v434, %v437
      %v439 = vmul.f32 %v438, 1.442695
      %v440 = vpow.pop %v439
      %v441 = vsel %vm197, %v440, 0.0
      %442 = vadd.xlane.f32.xlu0 %v441
      %v443 = vpop.xlane.xlu0 %442
      %v444 = vrcp.pop %v443
      %v445 = vmul.f32 %v443, %v444
      %v446 = vsub.f32 1.0, %v445
      %v447 = vmul.f32 %v444, %v446
      %v448 = vadd.f32 %v444, %v447
      %vm449 = vweird.f32 %v443
      %vm450 = vweird.f32 %v444
      %vm451 = vmor %vm449, %vm450
      %v452 = vsel %vm451, %v444, %v448
      %v453 = vand.u32 2147483647, %v443
      %vm454 = vcmp.eq.f32.partialorder %v453, 8.507059e+37
      %v455 = vand.u32 %v443, 2147483648
      %v456 = vor.u32 1.1754944e-38, %v455
      %v457 = vsel %vm454, %v456, %v452
      %v458 = vmul.f32 %v440, %v457
      %v459 = vpack.c.bf16 %v458, %v458
      %460 = vrot.lane.b32.xlu0 %v245, 72
      %v461 = vpop.permute.xlu0 %460
      %v463 = vsel %vm197, %v459, 0
      %v466 = vsel %vm251, %v461, 0
      %468 = vmatpush.bf16.msra.mxu0 0
      %469 = vmatpush.bf16.msra.mxu0 0
      %470 = vmatpush.bf16.msra.mxu0 0
      %471 = vmatpush.bf16.msra.mxu0 0
      %472 = vmatpush.bf16.msra.mxu0 0
      %473 = vmatpush.bf16.msra.mxu0 0
      %474 = vmatpush.bf16.msra.mxu0 0
      %475 = vmatpush.bf16.msra.mxu0 %v466
      %476 = vmatmul.bf16.gmra.mxu0 %v463
      %v477 = vpop.f32.mrf.mxu0
      %v478 = vadd.f32 0.0, %v477
      %v479 = vpop.f32.mrf.mxu0
      %480 = vdwg.mxu0
      %482 = vrot.lane.b32.xlu0 %v338, 8
      %v483 = vpop.permute.xlu0 %482
      %486 = vrot.lane.b32.xlu0 %v408, 16
      %v487 = vpop.permute.xlu0 %486
      %490 = vrot.lane.b32.xlu0 %v478, 24
      %v491 = vpop.permute.xlu0 %490
      %v493 = vsel %vm197, %v265, %v483
      %vm494 = vcmask 130048
      %v495 = vsel %vm494, %v493, %v487
      %vm496 = vcmask 195584
      %v497 = vsel %vm496, %v495, %v491
      %v498 = vpack.c.bf16 %v497, %v497
      %vm499 = vcmask 257024
      %500 = vst.msk [vmem:[%s189] sm:$0xf] %vm499, %v498
      %502 = vrot.lane.b32.xlu0 %v318, 8
      %v503 = vpop.permute.xlu0 %502
      %506 = vrot.lane.b32.xlu0 %v388, 16
      %v507 = vpop.permute.xlu0 %506
      %510 = vrot.lane.b32.xlu0 %v458, 24
      %v511 = vpop.permute.xlu0 %510
      %v513 = vsel %vm197, %v241, %v503
      %v514 = vsel %vm494, %v513, %v507
      %v515 = vsel %vm496, %v514, %v511
      %vm516 = vcmask 261120
      %517 = vst.msk [vmem:[%s193] sm:$0xff] %vm516, %v515
      %p518 = scmp.lt.s32.totalorder %s15, 1
      %s519 = scalar_select %p518, %s15, 1
      %s520 = smul.addr %s519, 4
      %s521 = scalar_lea.vmem %s2, %s520
      %p522 = scmp.lt.s32.totalorder %s15, 1
      %s523 = scalar_select %p522, %s15, 1
      %s524 = smul.addr %s523, 8
      %s525 = scalar_lea.vmem %s3, %s524
      // Predicated region
      $region29: #{_lambda_.41} parent=27 // pred_check
        %p526 = pneg %p85
      $region30: #{_lambda_.41} parent=27 // pred_check_branch
        %528 = sbr.rel (%p526) target = $region32
      $region31: #{_lambda_.41} parent=27 // pred_region
        _
      $region32: #{_lambda_.41} parent=27 // pred_fallthru
        _
      // Predicated region
      $region33: #{_lambda_.41} parent=27 // pred_check
        %p529 = pneg %p111
      $region34: #{_lambda_.41} parent=27 // pred_check_branch
        %531 = sbr.rel (%p529) target = $region36
      $region35: #{_lambda_.41} parent=27 // pred_region
        _
      $region36: #{_lambda_.41} parent=27 // pred_fallthru
        _
    $region28: #{_lambda_.41} parent=5 // pred_fallthru
      _
    %p532 = scmp.le.s32.totalorder 2, %s10
    // Predicated region
    $region37: #{_lambda_.41} parent=5 // pred_check
      %p533 = pneg %p532
    $region38: #{_lambda_.41} parent=5 // pred_check_branch
      %535 = sbr.rel (%p533) target = $region40
    $region39: #{_lambda_.41} parent=5 // pred_region
      %s536 = ssub.s32 %s10, 2
      // Predicated region
      $region41: #{_lambda_.41} parent=39 // pred_check
        %p537 = pneg %p91
      $region42: #{_lambda_.41} parent=39 // pred_check_branch
        %539 = sbr.rel (%p537) target = $region44
      $region43: #{_lambda_.41} parent=39 // pred_region
        %p540 = scmp.lt.s32.totalorder %s16, 1
        %s541 = scalar_select %p540, %s16, 1
        %s542 = smul.addr %s541, 4
        %s543 = scalar_lea.vmem %s2, %s542
      $region44: #{_lambda_.41} parent=39 // pred_fallthru
        _
      // Predicated region
      $region45: #{_lambda_.41} parent=39 // pred_check
        %p544 = pneg %p117
      $region46: #{_lambda_.41} parent=39 // pred_check_branch
        %546 = sbr.rel (%p544) target = $region48
      $region47: #{_lambda_.41} parent=39 // pred_region
        %p547 = scmp.lt.s32.totalorder %s16, 1
        %s548 = scalar_select %p547, %s16, 1
        %s549 = smul.addr %s548, 8
        %s550 = scalar_lea.vmem %s3, %s549
      $region48: #{_lambda_.41} parent=39 // pred_fallthru
        _
    $region40: #{_lambda_.41} parent=5 // pred_fallthru
      _
  $region6: #{_lambda_.41} parent=0 // loop_footer
    %s14 = sadd.s32 1, %s10
  $region7: #{_lambda_.41} parent=0 // loop_footer_branch
    %9 = sbr.rel target = $region3
  $region8: #{_lambda_.41} parent=0 // loop_exit
    _

</llo_original>
